<compile_context>
chip_gen: v6e
topology: v6e:2x2x1
jax: 0.10.0
libtpu: 0.0.40
codegen_flags: <defaults>
</compile_context>

<pallas_src>
import numpy as np
import jax
import jax.numpy as jnp
from jax.experimental import pallas as pl
from jax.experimental.pallas import tpu as pltpu

# ----------------------------- configuration --------------------------------
NUM_DIM = 8                      # data.NUM_DIM  (invertible-flow dimension)
RESNET_REPRESENTATION_DIM = 16   # conditional-input dimension
NUM_COND_NODES = 8               # output dim of CondNet
NUM_HIDDEN_NODES = 32            # subnet hidden width
NUM_HIDDEN_LAYERS = 1            # subnet: in->H, (H->H)x1, H->out
NUM_HIDDEN_NODES_COND = 32
NUM_HIDDEN_LAYERS_COND = 1
NUM_COUPLING_LAYERS = 4
CLAMP = 2.0

SPLIT1 = NUM_DIM // 2
SPLIT2 = NUM_DIM - SPLIT1

LANE = 128
MAX_TILE_B = 1024                # lane-tile upper bound (VMEM footprint stays < ~4 MB)
SLAB_COLS = 32                   # max fan-in among all layers (column padding of the slab)


def _round_up(a, m):
    return (a + m - 1) // m * m


# ----------------------------- math helpers ---------------------------------
def _atan_f32(x):
    """f32-accurate arctan (Cephes atanf style), single divide, Pallas-lowerable ops only."""
    sign = jnp.where(x < 0.0, -1.0, 1.0).astype(jnp.float32)
    ax = jnp.abs(x)
    tan3pio8 = jnp.float32(2.414213562373095)
    tanpio8 = jnp.float32(0.4142135623730950)
    big = ax > tan3pio8
    mid = jnp.logical_and(ax > tanpio8, jnp.logical_not(big))
    # select numerator / denominator first, then divide once
    num = jnp.where(big, jnp.float32(-1.0), jnp.where(mid, ax - 1.0, ax))
    den = jnp.where(big, ax + jnp.float32(1e-30), jnp.where(mid, ax + 1.0, jnp.float32(1.0)))
    xr = num / den
    y0 = jnp.where(big, jnp.float32(np.pi / 2),
                   jnp.where(mid, jnp.float32(np.pi / 4), jnp.float32(0.0)))
    z = xr * xr
    poly = (((8.05374449538e-2 * z - 1.38776856032e-1) * z
             + 1.99777106478e-1) * z - 3.33329491539e-1)
    return sign * (y0 + poly * z * xr + xr)


# ------------------------------ parameters -----------------------------------
def init_parameters(seed=42):
    """All weights stored transposed ([out, in]); biases as [out, 1] (feature-major layout)."""
    keys = iter(jax.random.split(jax.random.PRNGKey(seed), 256))

    def rnd(shape):
        return (0.01 * jax.random.normal(next(keys), shape)).astype(jnp.float32)

    Hc = NUM_HIDDEN_NODES_COND
    cond = dict(w0=rnd((Hc, RESNET_REPRESENTATION_DIM)), b0=rnd((Hc, 1)),
                w1=rnd((Hc, Hc)), b1=rnd((Hc, 1)),
                w2=rnd((NUM_COND_NODES, Hc)), b2=rnd((NUM_COND_NODES, 1)))

    H = NUM_HIDDEN_NODES
    blocks = []
    for _ in range(NUM_COUPLING_LAYERS):
        # subnet2: (split2 + cond) -> H -> H -> 2*split1   (first layer split into x/c parts)
        s2 = dict(w0x=rnd((H, SPLIT2)), w0c=rnd((H, NUM_COND_NODES)), b0=rnd((H, 1)),
                  w1=rnd((H, H)), b1=rnd((H, 1)),
                  w2=rnd((2 * SPLIT1, H)), b2=rnd((2 * SPLIT1, 1)))
        # subnet1: (split1 + cond) -> H -> H -> 2*split2
        s1 = dict(w0y=rnd((H, SPLIT1)), w0c=rnd((H, NUM_COND_NODES)), b0=rnd((H, 1)),
                  w1=rnd((H, H)), b1=rnd((H, 1)),
                  w2=rnd((2 * SPLIT2, H)), b2=rnd((2 * SPLIT2, 1)))
        blocks.append((s2, s1))

    # PermuteRandom(seed=k): np.random.seed(k); permutation(NUM_DIM)
    perms = []
    for k in range(NUM_COUPLING_LAYERS):
        np.random.seed(k)
        perms.append(np.random.permutation(NUM_DIM).astype(np.int32))

    return cond, blocks, perms


def pack_params(cond, blocks, perms):
    """Pack every layer into two slabs:
         w_slab [R, SLAB_COLS]  (each [out, in] weight zero-padded to SLAB_COLS columns)
         b_slab [R, 1]          (bias rows aligned with the weight rows)
       plus a static {name: (row_offset, out, in)} table used for in-kernel slicing.
       The PermuteRandom matrices are stored as exact 0/1 [8,8] weights in the same slab.
       All segment heights are multiples of 8, so every row offset is sublane-aligned."""
    rows_w, rows_b = [], []
    offsets = {}
    cursor = 0

    def add(name, w, b=None):
        nonlocal cursor
        w = np.asarray(w, np.float32)
        out, k = w.shape
        assert k <= SLAB_COLS and out % 8 == 0
        wp = np.zeros((out, SLAB_COLS), np.float32)
        wp[:, :k] = w
        rows_w.append(wp)
        bp = np.zeros((out, 1), np.float32)
        if b is not None:
            bp[:, 0] = np.asarray(b, np.float32).reshape(out)
        rows_b.append(bp)
        offsets[name] = (cursor, out, k)
        cursor += out

    add('c_w0', cond['w0'], cond['b0'])
    add('c_w1', cond['w1'], cond['b1'])
    add('c_w2', cond['w2'], cond['b2'])
    for bi, (s2, s1) in enumerate(blocks):
        add(f'a{bi}_w0x', s2['w0x'])                 # no bias (bias carried by w0c entry)
        add(f'a{bi}_w0c', s2['w0c'], s2['b0'])
        add(f'a{bi}_w1', s2['w1'], s2['b1'])
        add(f'a{bi}_w2', s2['w2'], s2['b2'])
        add(f'b{bi}_w0y', s1['w0y'])
        add(f'b{bi}_w0c', s1['w0c'], s1['b0'])
        add(f'b{bi}_w1', s1['w1'], s1['b1'])
        add(f'b{bi}_w2', s1['w2'], s1['b2'])
        P = np.zeros((NUM_DIM, NUM_DIM), np.float32)  # output row j = input row perm[j]
        for j, p in enumerate(np.asarray(perms[bi])):
            P[j, int(p)] = 1.0
        add(f'perm{bi}', P)

    w_slab = jnp.asarray(np.concatenate(rows_w, axis=0))   # [R, SLAB_COLS]
    b_slab = jnp.asarray(np.concatenate(rows_b, axis=0))   # [R, 1]
    return w_slab, b_slab, offsets


# ------------------------------ fused forward ---------------------------------
def make_forward(cond, blocks, perms):
    w_slab, b_slab, offsets = pack_params(cond, blocks, perms)
    R = w_slab.shape[0]

    def cinn_kernel(x_ref, l_ref, w_ref, b_ref, z_ref, jac_ref):
        # static-offset slices into the packed slabs (row offsets are multiples of 8)
        def lin(name, act):                       # W @ act + b
            off, out, k = offsets[name]
            w = w_ref[off:off + out, 0:k]
            b = b_ref[off:off + out, :]
            return jnp.dot(w, act, preferred_element_type=jnp.float32) + b

        def mat(name, act):                       # W @ act (no bias)
            off, out, k = offsets[name]
            w = w_ref[off:off + out, 0:k]
            return jnp.dot(w, act, preferred_element_type=jnp.float32)

        lam = jnp.float32(CLAMP * 0.636)

        # ---- CondNet MLP (feature-major: [F, B]) ----
        h = jnp.maximum(lin('c_w0', l_ref[...]), 0.0)
        h = jnp.maximum(lin('c_w1', h), 0.0)
        c = lin('c_w2', h)                                   # [NUM_COND_NODES, B]

        state = x_ref[...]                                   # [NUM_DIM, B]
        jac = jnp.zeros((1, state.shape[1]), jnp.float32)

        for k in range(NUM_COUPLING_LAYERS):
            x1 = state[:SPLIT1, :]
            x2 = state[SPLIT1:, :]

            # coupling 1: a2 = subnet2([x2, c])   (conditional part computed just-in-time)
            h = jnp.maximum(mat(f'a{k}_w0x', x2) + lin(f'a{k}_w0c', c), 0.0)
            h = jnp.maximum(lin(f'a{k}_w1', h), 0.0)
            a2 = lin(f'a{k}_w2', h)                          # [2*SPLIT1, B] (single matmul)
            s2 = lam * _atan_f32(a2[:SPLIT1, :])
            t2 = a2[SPLIT1:, :]
            y1 = jnp.exp(s2) * x1 + t2
            jac = jac + jnp.sum(s2, axis=0, keepdims=True)

            # coupling 2: a1 = subnet1([y1, c])
            h = jnp.maximum(mat(f'b{k}_w0y', y1) + lin(f'b{k}_w0c', c), 0.0)
            h = jnp.maximum(lin(f'b{k}_w1', h), 0.0)
            a1 = lin(f'b{k}_w2', h)                          # [2*SPLIT2, B]
            s1 = lam * _atan_f32(a1[:SPLIT2, :])
            t1 = a1[SPLIT2:, :]
            y2 = jnp.exp(s1) * x2 + t1
            jac = jac + jnp.sum(s1, axis=0, keepdims=True)

            # PermuteRandom(seed=k): one exact [8,8] 0/1 permutation-matrix matmul
            state = mat(f'perm{k}', jnp.concatenate([y1, y2], axis=0))

        z_ref[...] = state
        jac_ref[...] = jac

    @jax.jit
    def forward(x, l):
        """x: [B, NUM_DIM], l: [B, RESNET_REPRESENTATION_DIM] -> (z [B, NUM_DIM], jac [B])."""
        B = x.shape[0]
        x_t = x.T.astype(jnp.float32)                        # [NUM_DIM, B]  (batch on lanes)
        l_t = l.T.astype(jnp.float32)                        # [RDIM, B]

        # adaptive lane tiling: >=2 (even) tiles whenever B > 128 so v7x's two TensorCores
        # both get work; tiles only multiply past MAX_TILE_B lanes; padding stays small.
        if B <= LANE:
            n_tiles = 1
        else:
            n_tiles = max(2, -(-B // MAX_TILE_B))
            if n_tiles % 2:
                n_tiles += 1
        tile_b = _round_up(-(-B // n_tiles), LANE)
        b_pad = n_tiles * tile_b
        if b_pad != B:
            x_t = jnp.pad(x_t, ((0, 0), (0, b_pad - B)))
            l_t = jnp.pad(l_t, ((0, 0), (0, b_pad - B)))

        def act_spec(nrows):
            return pl.BlockSpec((nrows, tile_b), lambda i: (0, i))

        w_spec = pl.BlockSpec((R, SLAB_COLS), lambda i: (0, 0))   # constant index map:
        b_spec = pl.BlockSpec((R, 1), lambda i: (0, 0))           # fetched once per call

        z_t, jac_t = pl.pallas_call(
            cinn_kernel,
            out_shape=(jax.ShapeDtypeStruct((NUM_DIM, b_pad), jnp.float32),
                       jax.ShapeDtypeStruct((1, b_pad), jnp.float32)),
            grid=(n_tiles,),
            in_specs=[act_spec(NUM_DIM), act_spec(RESNET_REPRESENTATION_DIM),
                      w_spec, b_spec],
            out_specs=(act_spec(NUM_DIM), act_spec(1)),
            compiler_params=pltpu.CompilerParams(
                dimension_semantics=("parallel",)),   # batch tiles are independent
        )(x_t, l_t, w_slab, b_slab)

        return z_t[:, :B].T, jac_t[0, :B]

    return forward


# ------------------------- pure-JAX reference (check) ------------------------
def reference_forward(x, l, cond, blocks, perms):
    def lin(a, w, b):             # a [B, in], w [out, in], b [out, 1]
        return a @ w.T + b[:, 0]

    c = jax.nn.relu(lin(l, cond['w0'], cond['b0']))
    c = jax.nn.relu(lin(c, cond['w1'], cond['b1']))
    c = lin(c, cond['w2'], cond['b2'])

    z = x
    jac = jnp.zeros((x.shape[0],), jnp.float32)
    for k in range(NUM_COUPLING_LAYERS):
        s2p, s1p = blocks[k]
        x1, x2 = z[:, :SPLIT1], z[:, SPLIT1:]
        h = jax.nn.relu(x2 @ s2p['w0x'].T + c @ s2p['w0c'].T + s2p['b0'][:, 0])
        h = jax.nn.relu(lin(h, s2p['w1'], s2p['b1']))
        a2 = lin(h, s2p['w2'], s2p['b2'])
        s2 = CLAMP * 0.636 * jnp.arctan(a2[:, :SPLIT1]); t2 = a2[:, SPLIT1:]
        y1 = jnp.exp(s2) * x1 + t2
        h = jax.nn.relu(y1 @ s1p['w0y'].T + c @ s1p['w0c'].T + s1p['b0'][:, 0])
        h = jax.nn.relu(lin(h, s1p['w1'], s1p['b1']))
        a1 = lin(h, s1p['w2'], s1p['b2'])
        s1 = CLAMP * 0.636 * jnp.arctan(a1[:, :SPLIT2]); t1 = a1[:, SPLIT2:]
        y2 = jnp.exp(s1) * x2 + t1
        jac = jac + s2.sum(1) + s1.sum(1)
        z = jnp.concatenate([y1, y2], axis=1)[:, perms[k]]
    return z, jac


# ---------------------------------- main --------------------------------------
if __name__ == "__main__":
    cond, blocks, perms = init_parameters(seed=42)
    forward = make_forward(cond, blocks, perms)

    key = jax.random.PRNGKey(0)
    kx, kl = jax.random.split(key)

    # small shapes consistent with the module
    B = 8
    x = jax.random.normal(kx, (B, NUM_DIM), dtype=jnp.float32)
    l = jax.random.normal(kl, (B, RESNET_REPRESENTATION_DIM), dtype=jnp.float32)

    z, jac = forward(x, l)
    jax.block_until_ready((z, jac))
    z_ref, jac_ref = reference_forward(x, l, cond, blocks, perms)
    assert z.shape == (B, NUM_DIM) and jac.shape == (B,)
    assert np.allclose(np.asarray(z), np.asarray(z_ref), atol=2e-4, rtol=2e-4)
    assert np.allclose(np.asarray(jac), np.asarray(jac_ref), atol=2e-4, rtol=2e-4)

    # larger batch exercising the multi-tile grid (2 x 384 lanes) and the padding path
    B2 = 600
    kx2, kl2 = jax.random.split(jax.random.PRNGKey(1))
    x2 = jax.random.normal(kx2, (B2, NUM_DIM), dtype=jnp.float32)
    l2 = jax.random.normal(kl2, (B2, RESNET_REPRESENTATION_DIM), dtype=jnp.float32)
    z2, jac2 = forward(x2, l2)
    jax.block_until_ready((z2, jac2))
    z2_ref, jac2_ref = reference_forward(x2, l2, cond, blocks, perms)
    assert np.allclose(np.asarray(z2), np.asarray(z2_ref), atol=2e-4, rtol=2e-4)
    assert np.allclose(np.asarray(jac2), np.asarray(jac2_ref), atol=2e-4, rtol=2e-4)

    print("KERNEL_OK")
</pallas_src>

<mosaic_0001>
module attributes {stable_mosaic.version = 11 : i64} {
  func.func @cinn_kernel(%arg0: i32, %arg1: memref<8x128xf32, #tpu.memory_space<vmem>>, %arg2: memref<16x128xf32, #tpu.memory_space<vmem>>, %arg3: memref<936x32xf32, #tpu.memory_space<vmem>>, %arg4: memref<936x1xf32, #tpu.memory_space<vmem>>, %arg5: memref<8x128xf32, #tpu.memory_space<vmem>>, %arg6: memref<1x128xf32, #tpu.memory_space<vmem>>) attributes {dimension_semantics = [#tpu.dimension_semantics<parallel>], iteration_bounds = array<i64: 1>, scalar_prefetch = 0 : i64, scratch_operands = 0 : i64, tpu.core_type = #tpu.core_type<tc>, window_params = [{transform_indices = @transform_0, window_bounds = array<i64: 8, 128>}, {transform_indices = @transform_1, window_bounds = array<i64: 16, 128>}, {pipeline_mode = #tpu.pipeline_mode<synchronous>, transform_indices = @transform_2, window_bounds = array<i64: 936, 32>}, {pipeline_mode = #tpu.pipeline_mode<synchronous>, transform_indices = @transform_3, window_bounds = array<i64: 936, 1>}, {transform_indices = @transform_4, window_bounds = array<i64: 8, 128>}, {transform_indices = @transform_5, window_bounds = array<i64: 1, 128>}]} {
    %c0 = arith.constant 0 : index
    %c0_0 = arith.constant 0 : index
    %0 = vector.load %arg2[%c0, %c0_0] : memref<16x128xf32, #tpu.memory_space<vmem>>, vector<16x128xf32>
    %c0_1 = arith.constant 0 : index
    %c0_2 = arith.constant 0 : index
    %1 = vector.load %arg3[%c0_1, %c0_2] : memref<936x32xf32, #tpu.memory_space<vmem>>, vector<32x16xf32>
    %c0_3 = arith.constant 0 : index
    %c0_4 = arith.constant 0 : index
    %2 = vector.load %arg4[%c0_3, %c0_4] : memref<936x1xf32, #tpu.memory_space<vmem>>, vector<32x1xf32>
    %cst = arith.constant dense<0.000000e+00> : vector<32x128xf32>
    %3 = tpu.matmul %1, %0, %cst {dimension_numbers = #tpu.dot_dimension_numbers<[1], [0], [0], [1], [0, 0, 1, 1], [], []>} : vector<32x16xf32>, vector<16x128xf32>, vector<32x128xf32> -> vector<32x128xf32>
    %4 = vector.broadcast %2 : vector<32x1xf32> to vector<32x128xf32>
    %5 = arith.addf %3, %4 : vector<32x128xf32>
    %cst_5 = arith.constant 0.000000e+00 : f32
    %6 = vector.broadcast %cst_5 : f32 to vector<32x128xf32>
    %7 = arith.maximumf %5, %6 : vector<32x128xf32>
    %c32 = arith.constant 32 : index
    %c0_6 = arith.constant 0 : index
    %8 = vector.load %arg3[%c32, %c0_6] : memref<936x32xf32, #tpu.memory_space<vmem>>, vector<32x32xf32>
    %c32_7 = arith.constant 32 : index
    %c0_8 = arith.constant 0 : index
    %9 = vector.load %arg4[%c32_7, %c0_8] : memref<936x1xf32, #tpu.memory_space<vmem>>, vector<32x1xf32>
    %cst_9 = arith.constant dense<0.000000e+00> : vector<32x128xf32>
    %10 = tpu.matmul %8, %7, %cst_9 {dimension_numbers = #tpu.dot_dimension_numbers<[1], [0], [0], [1], [0, 0, 1, 1], [], []>} : vector<32x32xf32>, vector<32x128xf32>, vector<32x128xf32> -> vector<32x128xf32>
    %11 = vector.broadcast %9 : vector<32x1xf32> to vector<32x128xf32>
    %12 = arith.addf %10, %11 : vector<32x128xf32>
    %cst_10 = arith.constant 0.000000e+00 : f32
    %13 = vector.broadcast %cst_10 : f32 to vector<32x128xf32>
    %14 = arith.maximumf %12, %13 : vector<32x128xf32>
    %c64 = arith.constant 64 : index
    %c0_11 = arith.constant 0 : index
    %15 = vector.load %arg3[%c64, %c0_11] : memref<936x32xf32, #tpu.memory_space<vmem>>, vector<8x32xf32>
    %c64_12 = arith.constant 64 : index
    %c0_13 = arith.constant 0 : index
    %16 = vector.load %arg4[%c64_12, %c0_13] : memref<936x1xf32, #tpu.memory_space<vmem>>, vector<8x1xf32>
    %cst_14 = arith.constant dense<0.000000e+00> : vector<8x128xf32>
    %17 = tpu.matmul %15, %14, %cst_14 {dimension_numbers = #tpu.dot_dimension_numbers<[1], [0], [0], [1], [0, 0, 1, 1], [], []>} : vector<8x32xf32>, vector<32x128xf32>, vector<8x128xf32> -> vector<8x128xf32>
    %18 = vector.broadcast %16 : vector<8x1xf32> to vector<8x128xf32>
    %19 = arith.addf %17, %18 : vector<8x128xf32>
    %c0_15 = arith.constant 0 : index
    %c0_16 = arith.constant 0 : index
    %20 = vector.load %arg1[%c0_15, %c0_16] : memref<8x128xf32, #tpu.memory_space<vmem>>, vector<8x128xf32>
    %cst_17 = arith.constant 0.000000e+00 : f32
    %21 = vector.broadcast %cst_17 : f32 to vector<1x128xf32>
    %22 = vector.extract_strided_slice %20 {offsets = [0, 0], sizes = [4, 128], strides = [1, 1]} : vector<8x128xf32> to vector<4x128xf32>
    %23 = vector.extract_strided_slice %20 {offsets = [4, 0], sizes = [4, 128], strides = [1, 1]} : vector<8x128xf32> to vector<4x128xf32>
    %c72 = arith.constant 72 : index
    %c0_18 = arith.constant 0 : index
    %24 = vector.load %arg3[%c72, %c0_18] : memref<936x32xf32, #tpu.memory_space<vmem>>, vector<32x4xf32>
    %cst_19 = arith.constant dense<0.000000e+00> : vector<32x128xf32>
    %25 = tpu.matmul %24, %23, %cst_19 {dimension_numbers = #tpu.dot_dimension_numbers<[1], [0], [0], [1], [0, 0, 1, 1], [], []>} : vector<32x4xf32>, vector<4x128xf32>, vector<32x128xf32> -> vector<32x128xf32>
    %c104 = arith.constant 104 : index
    %c0_20 = arith.constant 0 : index
    %26 = vector.load %arg3[%c104, %c0_20] : memref<936x32xf32, #tpu.memory_space<vmem>>, vector<32x8xf32>
    %c104_21 = arith.constant 104 : index
    %c0_22 = arith.constant 0 : index
    %27 = vector.load %arg4[%c104_21, %c0_22] : memref<936x1xf32, #tpu.memory_space<vmem>>, vector<32x1xf32>
    %cst_23 = arith.constant dense<0.000000e+00> : vector<32x128xf32>
    %28 = tpu.matmul %26, %19, %cst_23 {dimension_numbers = #tpu.dot_dimension_numbers<[1], [0], [0], [1], [0, 0, 1, 1], [], []>} : vector<32x8xf32>, vector<8x128xf32>, vector<32x128xf32> -> vector<32x128xf32>
    %29 = vector.broadcast %27 : vector<32x1xf32> to vector<32x128xf32>
    %30 = arith.addf %28, %29 : vector<32x128xf32>
    %31 = arith.addf %25, %30 : vector<32x128xf32>
    %cst_24 = arith.constant 0.000000e+00 : f32
    %32 = vector.broadcast %cst_24 : f32 to vector<32x128xf32>
    %33 = arith.maximumf %31, %32 : vector<32x128xf32>
    %c136 = arith.constant 136 : index
    %c0_25 = arith.constant 0 : index
    %34 = vector.load %arg3[%c136, %c0_25] : memref<936x32xf32, #tpu.memory_space<vmem>>, vector<32x32xf32>
    %c136_26 = arith.constant 136 : index
    %c0_27 = arith.constant 0 : index
    %35 = vector.load %arg4[%c136_26, %c0_27] : memref<936x1xf32, #tpu.memory_space<vmem>>, vector<32x1xf32>
    %cst_28 = arith.constant dense<0.000000e+00> : vector<32x128xf32>
    %36 = tpu.matmul %34, %33, %cst_28 {dimension_numbers = #tpu.dot_dimension_numbers<[1], [0], [0], [1], [0, 0, 1, 1], [], []>} : vector<32x32xf32>, vector<32x128xf32>, vector<32x128xf32> -> vector<32x128xf32>
    %37 = vector.broadcast %35 : vector<32x1xf32> to vector<32x128xf32>
    %38 = arith.addf %36, %37 : vector<32x128xf32>
    %cst_29 = arith.constant 0.000000e+00 : f32
    %39 = vector.broadcast %cst_29 : f32 to vector<32x128xf32>
    %40 = arith.maximumf %38, %39 : vector<32x128xf32>
    %c168 = arith.constant 168 : index
    %c0_30 = arith.constant 0 : index
    %41 = vector.load %arg3[%c168, %c0_30] : memref<936x32xf32, #tpu.memory_space<vmem>>, vector<8x32xf32>
    %c168_31 = arith.constant 168 : index
    %c0_32 = arith.constant 0 : index
    %42 = vector.load %arg4[%c168_31, %c0_32] : memref<936x1xf32, #tpu.memory_space<vmem>>, vector<8x1xf32>
    %cst_33 = arith.constant dense<0.000000e+00> : vector<8x128xf32>
    %43 = tpu.matmul %41, %40, %cst_33 {dimension_numbers = #tpu.dot_dimension_numbers<[1], [0], [0], [1], [0, 0, 1, 1], [], []>} : vector<8x32xf32>, vector<32x128xf32>, vector<8x128xf32> -> vector<8x128xf32>
    %44 = vector.broadcast %42 : vector<8x1xf32> to vector<8x128xf32>
    %45 = arith.addf %43, %44 : vector<8x128xf32>
    %46 = vector.extract_strided_slice %45 {offsets = [0, 0], sizes = [4, 128], strides = [1, 1]} : vector<8x128xf32> to vector<4x128xf32>
    %cst_34 = arith.constant 0.000000e+00 : f32
    %47 = vector.broadcast %cst_34 : f32 to vector<4x128xf32>
    %48 = arith.cmpf olt, %46, %47 : vector<4x128xf32>
    %cst_35 = arith.constant -1.000000e+00 : f32
    %cst_36 = arith.constant 1.000000e+00 : f32
    %49 = vector.broadcast %cst_35 : f32 to vector<4x128xf32>
    %50 = vector.broadcast %cst_36 : f32 to vector<4x128xf32>
    %51 = arith.select %48, %49, %50 : vector<4x128xi1>, vector<4x128xf32>
    %52 = math.absf %46 : vector<4x128xf32>
    %cst_37 = arith.constant 2.41421366 : f32
    %53 = vector.broadcast %cst_37 : f32 to vector<4x128xf32>
    %54 = arith.cmpf ogt, %52, %53 : vector<4x128xf32>
    %cst_38 = arith.constant 0.414213568 : f32
    %55 = vector.broadcast %cst_38 : f32 to vector<4x128xf32>
    %56 = arith.cmpf ogt, %52, %55 : vector<4x128xf32>
    %cst_39 = arith.constant dense<true> : vector<4x128xi1>
    %57 = arith.xori %54, %cst_39 : vector<4x128xi1>
    %58 = arith.andi %56, %57 : vector<4x128xi1>
    %cst_40 = arith.constant 1.000000e+00 : f32
    %59 = vector.broadcast %cst_40 : f32 to vector<4x128xf32>
    %60 = arith.subf %52, %59 : vector<4x128xf32>
    %61 = arith.select %58, %60, %52 : vector<4x128xi1>, vector<4x128xf32>
    %cst_41 = arith.constant -1.000000e+00 : f32
    %62 = vector.broadcast %cst_41 : f32 to vector<4x128xf32>
    %63 = arith.select %54, %62, %61 : vector<4x128xi1>, vector<4x128xf32>
    %cst_42 = arith.constant 1.000000e-30 : f32
    %64 = vector.broadcast %cst_42 : f32 to vector<4x128xf32>
    %65 = arith.addf %52, %64 : vector<4x128xf32>
    %cst_43 = arith.constant 1.000000e+00 : f32
    %66 = vector.broadcast %cst_43 : f32 to vector<4x128xf32>
    %67 = arith.addf %52, %66 : vector<4x128xf32>
    %cst_44 = arith.constant 1.000000e+00 : f32
    %68 = vector.broadcast %cst_44 : f32 to vector<4x128xf32>
    %69 = arith.select %58, %67, %68 : vector<4x128xi1>, vector<4x128xf32>
    %70 = arith.select %54, %65, %69 : vector<4x128xi1>, vector<4x128xf32>
    %71 = arith.divf %63, %70 : vector<4x128xf32>
    %cst_45 = arith.constant 0.785398185 : f32
    %cst_46 = arith.constant 0.000000e+00 : f32
    %72 = vector.broadcast %cst_45 : f32 to vector<4x128xf32>
    %73 = vector.broadcast %cst_46 : f32 to vector<4x128xf32>
    %74 = arith.select %58, %72, %73 : vector<4x128xi1>, vector<4x128xf32>
    %cst_47 = arith.constant 1.57079637 : f32
    %75 = vector.broadcast %cst_47 : f32 to vector<4x128xf32>
    %76 = arith.select %54, %75, %74 : vector<4x128xi1>, vector<4x128xf32>
    %77 = arith.mulf %71, %71 : vector<4x128xf32>
    %cst_48 = arith.constant 0.0805374458 : f32
    %78 = vector.broadcast %cst_48 : f32 to vector<4x128xf32>
    %79 = arith.mulf %78, %77 : vector<4x128xf32>
    %cst_49 = arith.constant 0.138776854 : f32
    %80 = vector.broadcast %cst_49 : f32 to vector<4x128xf32>
    %81 = arith.subf %79, %80 : vector<4x128xf32>
    %82 = arith.mulf %81, %77 : vector<4x128xf32>
    %cst_50 = arith.constant 0.199777111 : f32
    %83 = vector.broadcast %cst_50 : f32 to vector<4x128xf32>
    %84 = arith.addf %82, %83 : vector<4x128xf32>
    %85 = arith.mulf %84, %77 : vector<4x128xf32>
    %cst_51 = arith.constant 0.333329499 : f32
    %86 = vector.broadcast %cst_51 : f32 to vector<4x128xf32>
    %87 = arith.subf %85, %86 : vector<4x128xf32>
    %88 = arith.mulf %87, %77 : vector<4x128xf32>
    %89 = arith.mulf %88, %71 : vector<4x128xf32>
    %90 = arith.addf %76, %89 : vector<4x128xf32>
    %91 = arith.addf %90, %71 : vector<4x128xf32>
    %92 = arith.mulf %51, %91 : vector<4x128xf32>
    %cst_52 = arith.constant 1.272000e+00 : f32
    %93 = vector.broadcast %cst_52 : f32 to vector<4x128xf32>
    %94 = arith.mulf %93, %92 : vector<4x128xf32>
    %95 = vector.extract_strided_slice %45 {offsets = [4, 0], sizes = [4, 128], strides = [1, 1]} : vector<8x128xf32> to vector<4x128xf32>
    %96 = math.exp %94 : vector<4x128xf32>
    %97 = arith.mulf %96, %22 : vector<4x128xf32>
    %98 = arith.addf %97, %95 : vector<4x128xf32>
    %cst_53 = arith.constant dense<0.000000e+00> : vector<128xf32>
    %99 = vector.multi_reduction <add>, %94, %cst_53 [0] : vector<4x128xf32> to vector<128xf32>
    %100 = vector.shape_cast %99 : vector<128xf32> to vector<1x128xf32>
    %101 = arith.addf %21, %100 : vector<1x128xf32>
    %c176 = arith.constant 176 : index
    %c0_54 = arith.constant 0 : index
    %102 = vector.load %arg3[%c176, %c0_54] : memref<936x32xf32, #tpu.memory_space<vmem>>, vector<32x4xf32>
    %cst_55 = arith.constant dense<0.000000e+00> : vector<32x128xf32>
    %103 = tpu.matmul %102, %98, %cst_55 {dimension_numbers = #tpu.dot_dimension_numbers<[1], [0], [0], [1], [0, 0, 1, 1], [], []>} : vector<32x4xf32>, vector<4x128xf32>, vector<32x128xf32> -> vector<32x128xf32>
    %c208 = arith.constant 208 : index
    %c0_56 = arith.constant 0 : index
    %104 = vector.load %arg3[%c208, %c0_56] : memref<936x32xf32, #tpu.memory_space<vmem>>, vector<32x8xf32>
    %c208_57 = arith.constant 208 : index
    %c0_58 = arith.constant 0 : index
    %105 = vector.load %arg4[%c208_57, %c0_58] : memref<936x1xf32, #tpu.memory_space<vmem>>, vector<32x1xf32>
    %cst_59 = arith.constant dense<0.000000e+00> : vector<32x128xf32>
    %106 = tpu.matmul %104, %19, %cst_59 {dimension_numbers = #tpu.dot_dimension_numbers<[1], [0], [0], [1], [0, 0, 1, 1], [], []>} : vector<32x8xf32>, vector<8x128xf32>, vector<32x128xf32> -> vector<32x128xf32>
    %107 = vector.broadcast %105 : vector<32x1xf32> to vector<32x128xf32>
    %108 = arith.addf %106, %107 : vector<32x128xf32>
    %109 = arith.addf %103, %108 : vector<32x128xf32>
    %cst_60 = arith.constant 0.000000e+00 : f32
    %110 = vector.broadcast %cst_60 : f32 to vector<32x128xf32>
    %111 = arith.maximumf %109, %110 : vector<32x128xf32>
    %c240 = arith.constant 240 : index
    %c0_61 = arith.constant 0 : index
    %112 = vector.load %arg3[%c240, %c0_61] : memref<936x32xf32, #tpu.memory_space<vmem>>, vector<32x32xf32>
    %c240_62 = arith.constant 240 : index
    %c0_63 = arith.constant 0 : index
    %113 = vector.load %arg4[%c240_62, %c0_63] : memref<936x1xf32, #tpu.memory_space<vmem>>, vector<32x1xf32>
    %cst_64 = arith.constant dense<0.000000e+00> : vector<32x128xf32>
    %114 = tpu.matmul %112, %111, %cst_64 {dimension_numbers = #tpu.dot_dimension_numbers<[1], [0], [0], [1], [0, 0, 1, 1], [], []>} : vector<32x32xf32>, vector<32x128xf32>, vector<32x128xf32> -> vector<32x128xf32>
    %115 = vector.broadcast %113 : vector<32x1xf32> to vector<32x128xf32>
    %116 = arith.addf %114, %115 : vector<32x128xf32>
    %cst_65 = arith.constant 0.000000e+00 : f32
    %117 = vector.broadcast %cst_65 : f32 to vector<32x128xf32>
    %118 = arith.maximumf %116, %117 : vector<32x128xf32>
    %c272 = arith.constant 272 : index
    %c0_66 = arith.constant 0 : index
    %119 = vector.load %arg3[%c272, %c0_66] : memref<936x32xf32, #tpu.memory_space<vmem>>, vector<8x32xf32>
    %c272_67 = arith.constant 272 : index
    %c0_68 = arith.constant 0 : index
    %120 = vector.load %arg4[%c272_67, %c0_68] : memref<936x1xf32, #tpu.memory_space<vmem>>, vector<8x1xf32>
    %cst_69 = arith.constant dense<0.000000e+00> : vector<8x128xf32>
    %121 = tpu.matmul %119, %118, %cst_69 {dimension_numbers = #tpu.dot_dimension_numbers<[1], [0], [0], [1], [0, 0, 1, 1], [], []>} : vector<8x32xf32>, vector<32x128xf32>, vector<8x128xf32> -> vector<8x128xf32>
    %122 = vector.broadcast %120 : vector<8x1xf32> to vector<8x128xf32>
    %123 = arith.addf %121, %122 : vector<8x128xf32>
    %124 = vector.extract_strided_slice %123 {offsets = [0, 0], sizes = [4, 128], strides = [1, 1]} : vector<8x128xf32> to vector<4x128xf32>
    %cst_70 = arith.constant 0.000000e+00 : f32
    %125 = vector.broadcast %cst_70 : f32 to vector<4x128xf32>
    %126 = arith.cmpf olt, %124, %125 : vector<4x128xf32>
    %cst_71 = arith.constant -1.000000e+00 : f32
    %cst_72 = arith.constant 1.000000e+00 : f32
    %127 = vector.broadcast %cst_71 : f32 to vector<4x128xf32>
    %128 = vector.broadcast %cst_72 : f32 to vector<4x128xf32>
    %129 = arith.select %126, %127, %128 : vector<4x128xi1>, vector<4x128xf32>
    %130 = math.absf %124 : vector<4x128xf32>
    %cst_73 = arith.constant 2.41421366 : f32
    %131 = vector.broadcast %cst_73 : f32 to vector<4x128xf32>
    %132 = arith.cmpf ogt, %130, %131 : vector<4x128xf32>
    %cst_74 = arith.constant 0.414213568 : f32
    %133 = vector.broadcast %cst_74 : f32 to vector<4x128xf32>
    %134 = arith.cmpf ogt, %130, %133 : vector<4x128xf32>
    %cst_75 = arith.constant dense<true> : vector<4x128xi1>
    %135 = arith.xori %132, %cst_75 : vector<4x128xi1>
    %136 = arith.andi %134, %135 : vector<4x128xi1>
    %cst_76 = arith.constant 1.000000e+00 : f32
    %137 = vector.broadcast %cst_76 : f32 to vector<4x128xf32>
    %138 = arith.subf %130, %137 : vector<4x128xf32>
    %139 = arith.select %136, %138, %130 : vector<4x128xi1>, vector<4x128xf32>
    %cst_77 = arith.constant -1.000000e+00 : f32
    %140 = vector.broadcast %cst_77 : f32 to vector<4x128xf32>
    %141 = arith.select %132, %140, %139 : vector<4x128xi1>, vector<4x128xf32>
    %cst_78 = arith.constant 1.000000e-30 : f32
    %142 = vector.broadcast %cst_78 : f32 to vector<4x128xf32>
    %143 = arith.addf %130, %142 : vector<4x128xf32>
    %cst_79 = arith.constant 1.000000e+00 : f32
    %144 = vector.broadcast %cst_79 : f32 to vector<4x128xf32>
    %145 = arith.addf %130, %144 : vector<4x128xf32>
    %cst_80 = arith.constant 1.000000e+00 : f32
    %146 = vector.broadcast %cst_80 : f32 to vector<4x128xf32>
    %147 = arith.select %136, %145, %146 : vector<4x128xi1>, vector<4x128xf32>
    %148 = arith.select %132, %143, %147 : vector<4x128xi1>, vector<4x128xf32>
    %149 = arith.divf %141, %148 : vector<4x128xf32>
    %cst_81 = arith.constant 0.785398185 : f32
    %cst_82 = arith.constant 0.000000e+00 : f32
    %150 = vector.broadcast %cst_81 : f32 to vector<4x128xf32>
    %151 = vector.broadcast %cst_82 : f32 to vector<4x128xf32>
    %152 = arith.select %136, %150, %151 : vector<4x128xi1>, vector<4x128xf32>
    %cst_83 = arith.constant 1.57079637 : f32
    %153 = vector.broadcast %cst_83 : f32 to vector<4x128xf32>
    %154 = arith.select %132, %153, %152 : vector<4x128xi1>, vector<4x128xf32>
    %155 = arith.mulf %149, %149 : vector<4x128xf32>
    %cst_84 = arith.constant 0.0805374458 : f32
    %156 = vector.broadcast %cst_84 : f32 to vector<4x128xf32>
    %157 = arith.mulf %156, %155 : vector<4x128xf32>
    %cst_85 = arith.constant 0.138776854 : f32
    %158 = vector.broadcast %cst_85 : f32 to vector<4x128xf32>
    %159 = arith.subf %157, %158 : vector<4x128xf32>
    %160 = arith.mulf %159, %155 : vector<4x128xf32>
    %cst_86 = arith.constant 0.199777111 : f32
    %161 = vector.broadcast %cst_86 : f32 to vector<4x128xf32>
    %162 = arith.addf %160, %161 : vector<4x128xf32>
    %163 = arith.mulf %162, %155 : vector<4x128xf32>
    %cst_87 = arith.constant 0.333329499 : f32
    %164 = vector.broadcast %cst_87 : f32 to vector<4x128xf32>
    %165 = arith.subf %163, %164 : vector<4x128xf32>
    %166 = arith.mulf %165, %155 : vector<4x128xf32>
    %167 = arith.mulf %166, %149 : vector<4x128xf32>
    %168 = arith.addf %154, %167 : vector<4x128xf32>
    %169 = arith.addf %168, %149 : vector<4x128xf32>
    %170 = arith.mulf %129, %169 : vector<4x128xf32>
    %cst_88 = arith.constant 1.272000e+00 : f32
    %171 = vector.broadcast %cst_88 : f32 to vector<4x128xf32>
    %172 = arith.mulf %171, %170 : vector<4x128xf32>
    %173 = vector.extract_strided_slice %123 {offsets = [4, 0], sizes = [4, 128], strides = [1, 1]} : vector<8x128xf32> to vector<4x128xf32>
    %174 = math.exp %172 : vector<4x128xf32>
    %175 = arith.mulf %174, %23 : vector<4x128xf32>
    %176 = arith.addf %175, %173 : vector<4x128xf32>
    %cst_89 = arith.constant dense<0.000000e+00> : vector<128xf32>
    %177 = vector.multi_reduction <add>, %172, %cst_89 [0] : vector<4x128xf32> to vector<128xf32>
    %178 = vector.shape_cast %177 : vector<128xf32> to vector<1x128xf32>
    %179 = arith.addf %101, %178 : vector<1x128xf32>
    %180 = tpu.concatenate %98, %176 in 0 : vector<4x128xf32>, vector<4x128xf32> -> vector<8x128xf32>
    %c280 = arith.constant 280 : index
    %c0_90 = arith.constant 0 : index
    %181 = vector.load %arg3[%c280, %c0_90] : memref<936x32xf32, #tpu.memory_space<vmem>>, vector<8x8xf32>
    %cst_91 = arith.constant dense<0.000000e+00> : vector<8x128xf32>
    %182 = tpu.matmul %181, %180, %cst_91 {dimension_numbers = #tpu.dot_dimension_numbers<[1], [0], [0], [1], [0, 0, 1, 1], [], []>} : vector<8x8xf32>, vector<8x128xf32>, vector<8x128xf32> -> vector<8x128xf32>
    %183 = vector.extract_strided_slice %182 {offsets = [0, 0], sizes = [4, 128], strides = [1, 1]} : vector<8x128xf32> to vector<4x128xf32>
    %184 = vector.extract_strided_slice %182 {offsets = [4, 0], sizes = [4, 128], strides = [1, 1]} : vector<8x128xf32> to vector<4x128xf32>
    %c288 = arith.constant 288 : index
    %c0_92 = arith.constant 0 : index
    %185 = vector.load %arg3[%c288, %c0_92] : memref<936x32xf32, #tpu.memory_space<vmem>>, vector<32x4xf32>
    %cst_93 = arith.constant dense<0.000000e+00> : vector<32x128xf32>
    %186 = tpu.matmul %185, %184, %cst_93 {dimension_numbers = #tpu.dot_dimension_numbers<[1], [0], [0], [1], [0, 0, 1, 1], [], []>} : vector<32x4xf32>, vector<4x128xf32>, vector<32x128xf32> -> vector<32x128xf32>
    %c320 = arith.constant 320 : index
    %c0_94 = arith.constant 0 : index
    %187 = vector.load %arg3[%c320, %c0_94] : memref<936x32xf32, #tpu.memory_space<vmem>>, vector<32x8xf32>
    %c320_95 = arith.constant 320 : index
    %c0_96 = arith.constant 0 : index
    %188 = vector.load %arg4[%c320_95, %c0_96] : memref<936x1xf32, #tpu.memory_space<vmem>>, vector<32x1xf32>
    %cst_97 = arith.constant dense<0.000000e+00> : vector<32x128xf32>
    %189 = tpu.matmul %187, %19, %cst_97 {dimension_numbers = #tpu.dot_dimension_numbers<[1], [0], [0], [1], [0, 0, 1, 1], [], []>} : vector<32x8xf32>, vector<8x128xf32>, vector<32x128xf32> -> vector<32x128xf32>
    %190 = vector.broadcast %188 : vector<32x1xf32> to vector<32x128xf32>
    %191 = arith.addf %189, %190 : vector<32x128xf32>
    %192 = arith.addf %186, %191 : vector<32x128xf32>
    %cst_98 = arith.constant 0.000000e+00 : f32
    %193 = vector.broadcast %cst_98 : f32 to vector<32x128xf32>
    %194 = arith.maximumf %192, %193 : vector<32x128xf32>
    %c352 = arith.constant 352 : index
    %c0_99 = arith.constant 0 : index
    %195 = vector.load %arg3[%c352, %c0_99] : memref<936x32xf32, #tpu.memory_space<vmem>>, vector<32x32xf32>
    %c352_100 = arith.constant 352 : index
    %c0_101 = arith.constant 0 : index
    %196 = vector.load %arg4[%c352_100, %c0_101] : memref<936x1xf32, #tpu.memory_space<vmem>>, vector<32x1xf32>
    %cst_102 = arith.constant dense<0.000000e+00> : vector<32x128xf32>
    %197 = tpu.matmul %195, %194, %cst_102 {dimension_numbers = #tpu.dot_dimension_numbers<[1], [0], [0], [1], [0, 0, 1, 1], [], []>} : vector<32x32xf32>, vector<32x128xf32>, vector<32x128xf32> -> vector<32x128xf32>
    %198 = vector.broadcast %196 : vector<32x1xf32> to vector<32x128xf32>
    %199 = arith.addf %197, %198 : vector<32x128xf32>
    %cst_103 = arith.constant 0.000000e+00 : f32
    %200 = vector.broadcast %cst_103 : f32 to vector<32x128xf32>
    %201 = arith.maximumf %199, %200 : vector<32x128xf32>
    %c384 = arith.constant 384 : index
    %c0_104 = arith.constant 0 : index
    %202 = vector.load %arg3[%c384, %c0_104] : memref<936x32xf32, #tpu.memory_space<vmem>>, vector<8x32xf32>
    %c384_105 = arith.constant 384 : index
    %c0_106 = arith.constant 0 : index
    %203 = vector.load %arg4[%c384_105, %c0_106] : memref<936x1xf32, #tpu.memory_space<vmem>>, vector<8x1xf32>
    %cst_107 = arith.constant dense<0.000000e+00> : vector<8x128xf32>
    %204 = tpu.matmul %202, %201, %cst_107 {dimension_numbers = #tpu.dot_dimension_numbers<[1], [0], [0], [1], [0, 0, 1, 1], [], []>} : vector<8x32xf32>, vector<32x128xf32>, vector<8x128xf32> -> vector<8x128xf32>
    %205 = vector.broadcast %203 : vector<8x1xf32> to vector<8x128xf32>
    %206 = arith.addf %204, %205 : vector<8x128xf32>
    %207 = vector.extract_strided_slice %206 {offsets = [0, 0], sizes = [4, 128], strides = [1, 1]} : vector<8x128xf32> to vector<4x128xf32>
    %cst_108 = arith.constant 0.000000e+00 : f32
    %208 = vector.broadcast %cst_108 : f32 to vector<4x128xf32>
    %209 = arith.cmpf olt, %207, %208 : vector<4x128xf32>
    %cst_109 = arith.constant -1.000000e+00 : f32
    %cst_110 = arith.constant 1.000000e+00 : f32
    %210 = vector.broadcast %cst_109 : f32 to vector<4x128xf32>
    %211 = vector.broadcast %cst_110 : f32 to vector<4x128xf32>
    %212 = arith.select %209, %210, %211 : vector<4x128xi1>, vector<4x128xf32>
    %213 = math.absf %207 : vector<4x128xf32>
    %cst_111 = arith.constant 2.41421366 : f32
    %214 = vector.broadcast %cst_111 : f32 to vector<4x128xf32>
    %215 = arith.cmpf ogt, %213, %214 : vector<4x128xf32>
    %cst_112 = arith.constant 0.414213568 : f32
    %216 = vector.broadcast %cst_112 : f32 to vector<4x128xf32>
    %217 = arith.cmpf ogt, %213, %216 : vector<4x128xf32>
    %cst_113 = arith.constant dense<true> : vector<4x128xi1>
    %218 = arith.xori %215, %cst_113 : vector<4x128xi1>
    %219 = arith.andi %217, %218 : vector<4x128xi1>
    %cst_114 = arith.constant 1.000000e+00 : f32
    %220 = vector.broadcast %cst_114 : f32 to vector<4x128xf32>
    %221 = arith.subf %213, %220 : vector<4x128xf32>
    %222 = arith.select %219, %221, %213 : vector<4x128xi1>, vector<4x128xf32>
    %cst_115 = arith.constant -1.000000e+00 : f32
    %223 = vector.broadcast %cst_115 : f32 to vector<4x128xf32>
    %224 = arith.select %215, %223, %222 : vector<4x128xi1>, vector<4x128xf32>
    %cst_116 = arith.constant 1.000000e-30 : f32
    %225 = vector.broadcast %cst_116 : f32 to vector<4x128xf32>
    %226 = arith.addf %213, %225 : vector<4x128xf32>
    %cst_117 = arith.constant 1.000000e+00 : f32
    %227 = vector.broadcast %cst_117 : f32 to vector<4x128xf32>
    %228 = arith.addf %213, %227 : vector<4x128xf32>
    %cst_118 = arith.constant 1.000000e+00 : f32
    %229 = vector.broadcast %cst_118 : f32 to vector<4x128xf32>
    %230 = arith.select %219, %228, %229 : vector<4x128xi1>, vector<4x128xf32>
    %231 = arith.select %215, %226, %230 : vector<4x128xi1>, vector<4x128xf32>
    %232 = arith.divf %224, %231 : vector<4x128xf32>
    %cst_119 = arith.constant 0.785398185 : f32
    %cst_120 = arith.constant 0.000000e+00 : f32
    %233 = vector.broadcast %cst_119 : f32 to vector<4x128xf32>
    %234 = vector.broadcast %cst_120 : f32 to vector<4x128xf32>
    %235 = arith.select %219, %233, %234 : vector<4x128xi1>, vector<4x128xf32>
    %cst_121 = arith.constant 1.57079637 : f32
    %236 = vector.broadcast %cst_121 : f32 to vector<4x128xf32>
    %237 = arith.select %215, %236, %235 : vector<4x128xi1>, vector<4x128xf32>
    %238 = arith.mulf %232, %232 : vector<4x128xf32>
    %cst_122 = arith.constant 0.0805374458 : f32
    %239 = vector.broadcast %cst_122 : f32 to vector<4x128xf32>
    %240 = arith.mulf %239, %238 : vector<4x128xf32>
    %cst_123 = arith.constant 0.138776854 : f32
    %241 = vector.broadcast %cst_123 : f32 to vector<4x128xf32>
    %242 = arith.subf %240, %241 : vector<4x128xf32>
    %243 = arith.mulf %242, %238 : vector<4x128xf32>
    %cst_124 = arith.constant 0.199777111 : f32
    %244 = vector.broadcast %cst_124 : f32 to vector<4x128xf32>
    %245 = arith.addf %243, %244 : vector<4x128xf32>
    %246 = arith.mulf %245, %238 : vector<4x128xf32>
    %cst_125 = arith.constant 0.333329499 : f32
    %247 = vector.broadcast %cst_125 : f32 to vector<4x128xf32>
    %248 = arith.subf %246, %247 : vector<4x128xf32>
    %249 = arith.mulf %248, %238 : vector<4x128xf32>
    %250 = arith.mulf %249, %232 : vector<4x128xf32>
    %251 = arith.addf %237, %250 : vector<4x128xf32>
    %252 = arith.addf %251, %232 : vector<4x128xf32>
    %253 = arith.mulf %212, %252 : vector<4x128xf32>
    %cst_126 = arith.constant 1.272000e+00 : f32
    %254 = vector.broadcast %cst_126 : f32 to vector<4x128xf32>
    %255 = arith.mulf %254, %253 : vector<4x128xf32>
    %256 = vector.extract_strided_slice %206 {offsets = [4, 0], sizes = [4, 128], strides = [1, 1]} : vector<8x128xf32> to vector<4x128xf32>
    %257 = math.exp %255 : vector<4x128xf32>
    %258 = arith.mulf %257, %183 : vector<4x128xf32>
    %259 = arith.addf %258, %256 : vector<4x128xf32>
    %cst_127 = arith.constant dense<0.000000e+00> : vector<128xf32>
    %260 = vector.multi_reduction <add>, %255, %cst_127 [0] : vector<4x128xf32> to vector<128xf32>
    %261 = vector.shape_cast %260 : vector<128xf32> to vector<1x128xf32>
    %262 = arith.addf %179, %261 : vector<1x128xf32>
    %c392 = arith.constant 392 : index
    %c0_128 = arith.constant 0 : index
    %263 = vector.load %arg3[%c392, %c0_128] : memref<936x32xf32, #tpu.memory_space<vmem>>, vector<32x4xf32>
    %cst_129 = arith.constant dense<0.000000e+00> : vector<32x128xf32>
    %264 = tpu.matmul %263, %259, %cst_129 {dimension_numbers = #tpu.dot_dimension_numbers<[1], [0], [0], [1], [0, 0, 1, 1], [], []>} : vector<32x4xf32>, vector<4x128xf32>, vector<32x128xf32> -> vector<32x128xf32>
    %c424 = arith.constant 424 : index
    %c0_130 = arith.constant 0 : index
    %265 = vector.load %arg3[%c424, %c0_130] : memref<936x32xf32, #tpu.memory_space<vmem>>, vector<32x8xf32>
    %c424_131 = arith.constant 424 : index
    %c0_132 = arith.constant 0 : index
    %266 = vector.load %arg4[%c424_131, %c0_132] : memref<936x1xf32, #tpu.memory_space<vmem>>, vector<32x1xf32>
    %cst_133 = arith.constant dense<0.000000e+00> : vector<32x128xf32>
    %267 = tpu.matmul %265, %19, %cst_133 {dimension_numbers = #tpu.dot_dimension_numbers<[1], [0], [0], [1], [0, 0, 1, 1], [], []>} : vector<32x8xf32>, vector<8x128xf32>, vector<32x128xf32> -> vector<32x128xf32>
    %268 = vector.broadcast %266 : vector<32x1xf32> to vector<32x128xf32>
    %269 = arith.addf %267, %268 : vector<32x128xf32>
    %270 = arith.addf %264, %269 : vector<32x128xf32>
    %cst_134 = arith.constant 0.000000e+00 : f32
    %271 = vector.broadcast %cst_134 : f32 to vector<32x128xf32>
    %272 = arith.maximumf %270, %271 : vector<32x128xf32>
    %c456 = arith.constant 456 : index
    %c0_135 = arith.constant 0 : index
    %273 = vector.load %arg3[%c456, %c0_135] : memref<936x32xf32, #tpu.memory_space<vmem>>, vector<32x32xf32>
    %c456_136 = arith.constant 456 : index
    %c0_137 = arith.constant 0 : index
    %274 = vector.load %arg4[%c456_136, %c0_137] : memref<936x1xf32, #tpu.memory_space<vmem>>, vector<32x1xf32>
    %cst_138 = arith.constant dense<0.000000e+00> : vector<32x128xf32>
    %275 = tpu.matmul %273, %272, %cst_138 {dimension_numbers = #tpu.dot_dimension_numbers<[1], [0], [0], [1], [0, 0, 1, 1], [], []>} : vector<32x32xf32>, vector<32x128xf32>, vector<32x128xf32> -> vector<32x128xf32>
    %276 = vector.broadcast %274 : vector<32x1xf32> to vector<32x128xf32>
    %277 = arith.addf %275, %276 : vector<32x128xf32>
    %cst_139 = arith.constant 0.000000e+00 : f32
    %278 = vector.broadcast %cst_139 : f32 to vector<32x128xf32>
    %279 = arith.maximumf %277, %278 : vector<32x128xf32>
    %c488 = arith.constant 488 : index
    %c0_140 = arith.constant 0 : index
    %280 = vector.load %arg3[%c488, %c0_140] : memref<936x32xf32, #tpu.memory_space<vmem>>, vector<8x32xf32>
    %c488_141 = arith.constant 488 : index
    %c0_142 = arith.constant 0 : index
    %281 = vector.load %arg4[%c488_141, %c0_142] : memref<936x1xf32, #tpu.memory_space<vmem>>, vector<8x1xf32>
    %cst_143 = arith.constant dense<0.000000e+00> : vector<8x128xf32>
    %282 = tpu.matmul %280, %279, %cst_143 {dimension_numbers = #tpu.dot_dimension_numbers<[1], [0], [0], [1], [0, 0, 1, 1], [], []>} : vector<8x32xf32>, vector<32x128xf32>, vector<8x128xf32> -> vector<8x128xf32>
    %283 = vector.broadcast %281 : vector<8x1xf32> to vector<8x128xf32>
    %284 = arith.addf %282, %283 : vector<8x128xf32>
    %285 = vector.extract_strided_slice %284 {offsets = [0, 0], sizes = [4, 128], strides = [1, 1]} : vector<8x128xf32> to vector<4x128xf32>
    %cst_144 = arith.constant 0.000000e+00 : f32
    %286 = vector.broadcast %cst_144 : f32 to vector<4x128xf32>
    %287 = arith.cmpf olt, %285, %286 : vector<4x128xf32>
    %cst_145 = arith.constant -1.000000e+00 : f32
    %cst_146 = arith.constant 1.000000e+00 : f32
    %288 = vector.broadcast %cst_145 : f32 to vector<4x128xf32>
    %289 = vector.broadcast %cst_146 : f32 to vector<4x128xf32>
    %290 = arith.select %287, %288, %289 : vector<4x128xi1>, vector<4x128xf32>
    %291 = math.absf %285 : vector<4x128xf32>
    %cst_147 = arith.constant 2.41421366 : f32
    %292 = vector.broadcast %cst_147 : f32 to vector<4x128xf32>
    %293 = arith.cmpf ogt, %291, %292 : vector<4x128xf32>
    %cst_148 = arith.constant 0.414213568 : f32
    %294 = vector.broadcast %cst_148 : f32 to vector<4x128xf32>
    %295 = arith.cmpf ogt, %291, %294 : vector<4x128xf32>
    %cst_149 = arith.constant dense<true> : vector<4x128xi1>
    %296 = arith.xori %293, %cst_149 : vector<4x128xi1>
    %297 = arith.andi %295, %296 : vector<4x128xi1>
    %cst_150 = arith.constant 1.000000e+00 : f32
    %298 = vector.broadcast %cst_150 : f32 to vector<4x128xf32>
    %299 = arith.subf %291, %298 : vector<4x128xf32>
    %300 = arith.select %297, %299, %291 : vector<4x128xi1>, vector<4x128xf32>
    %cst_151 = arith.constant -1.000000e+00 : f32
    %301 = vector.broadcast %cst_151 : f32 to vector<4x128xf32>
    %302 = arith.select %293, %301, %300 : vector<4x128xi1>, vector<4x128xf32>
    %cst_152 = arith.constant 1.000000e-30 : f32
    %303 = vector.broadcast %cst_152 : f32 to vector<4x128xf32>
    %304 = arith.addf %291, %303 : vector<4x128xf32>
    %cst_153 = arith.constant 1.000000e+00 : f32
    %305 = vector.broadcast %cst_153 : f32 to vector<4x128xf32>
    %306 = arith.addf %291, %305 : vector<4x128xf32>
    %cst_154 = arith.constant 1.000000e+00 : f32
    %307 = vector.broadcast %cst_154 : f32 to vector<4x128xf32>
    %308 = arith.select %297, %306, %307 : vector<4x128xi1>, vector<4x128xf32>
    %309 = arith.select %293, %304, %308 : vector<4x128xi1>, vector<4x128xf32>
    %310 = arith.divf %302, %309 : vector<4x128xf32>
    %cst_155 = arith.constant 0.785398185 : f32
    %cst_156 = arith.constant 0.000000e+00 : f32
    %311 = vector.broadcast %cst_155 : f32 to vector<4x128xf32>
    %312 = vector.broadcast %cst_156 : f32 to vector<4x128xf32>
    %313 = arith.select %297, %311, %312 : vector<4x128xi1>, vector<4x128xf32>
    %cst_157 = arith.constant 1.57079637 : f32
    %314 = vector.broadcast %cst_157 : f32 to vector<4x128xf32>
    %315 = arith.select %293, %314, %313 : vector<4x128xi1>, vector<4x128xf32>
    %316 = arith.mulf %310, %310 : vector<4x128xf32>
    %cst_158 = arith.constant 0.0805374458 : f32
    %317 = vector.broadcast %cst_158 : f32 to vector<4x128xf32>
    %318 = arith.mulf %317, %316 : vector<4x128xf32>
    %cst_159 = arith.constant 0.138776854 : f32
    %319 = vector.broadcast %cst_159 : f32 to vector<4x128xf32>
    %320 = arith.subf %318, %319 : vector<4x128xf32>
    %321 = arith.mulf %320, %316 : vector<4x128xf32>
    %cst_160 = arith.constant 0.199777111 : f32
    %322 = vector.broadcast %cst_160 : f32 to vector<4x128xf32>
    %323 = arith.addf %321, %322 : vector<4x128xf32>
    %324 = arith.mulf %323, %316 : vector<4x128xf32>
    %cst_161 = arith.constant 0.333329499 : f32
    %325 = vector.broadcast %cst_161 : f32 to vector<4x128xf32>
    %326 = arith.subf %324, %325 : vector<4x128xf32>
    %327 = arith.mulf %326, %316 : vector<4x128xf32>
    %328 = arith.mulf %327, %310 : vector<4x128xf32>
    %329 = arith.addf %315, %328 : vector<4x128xf32>
    %330 = arith.addf %329, %310 : vector<4x128xf32>
    %331 = arith.mulf %290, %330 : vector<4x128xf32>
    %cst_162 = arith.constant 1.272000e+00 : f32
    %332 = vector.broadcast %cst_162 : f32 to vector<4x128xf32>
    %333 = arith.mulf %332, %331 : vector<4x128xf32>
    %334 = vector.extract_strided_slice %284 {offsets = [4, 0], sizes = [4, 128], strides = [1, 1]} : vector<8x128xf32> to vector<4x128xf32>
    %335 = math.exp %333 : vector<4x128xf32>
    %336 = arith.mulf %335, %184 : vector<4x128xf32>
    %337 = arith.addf %336, %334 : vector<4x128xf32>
    %cst_163 = arith.constant dense<0.000000e+00> : vector<128xf32>
    %338 = vector.multi_reduction <add>, %333, %cst_163 [0] : vector<4x128xf32> to vector<128xf32>
    %339 = vector.shape_cast %338 : vector<128xf32> to vector<1x128xf32>
    %340 = arith.addf %262, %339 : vector<1x128xf32>
    %341 = tpu.concatenate %259, %337 in 0 : vector<4x128xf32>, vector<4x128xf32> -> vector<8x128xf32>
    %c496 = arith.constant 496 : index
    %c0_164 = arith.constant 0 : index
    %342 = vector.load %arg3[%c496, %c0_164] : memref<936x32xf32, #tpu.memory_space<vmem>>, vector<8x8xf32>
    %cst_165 = arith.constant dense<0.000000e+00> : vector<8x128xf32>
    %343 = tpu.matmul %342, %341, %cst_165 {dimension_numbers = #tpu.dot_dimension_numbers<[1], [0], [0], [1], [0, 0, 1, 1], [], []>} : vector<8x8xf32>, vector<8x128xf32>, vector<8x128xf32> -> vector<8x128xf32>
    %344 = vector.extract_strided_slice %343 {offsets = [0, 0], sizes = [4, 128], strides = [1, 1]} : vector<8x128xf32> to vector<4x128xf32>
    %345 = vector.extract_strided_slice %343 {offsets = [4, 0], sizes = [4, 128], strides = [1, 1]} : vector<8x128xf32> to vector<4x128xf32>
    %c504 = arith.constant 504 : index
    %c0_166 = arith.constant 0 : index
    %346 = vector.load %arg3[%c504, %c0_166] : memref<936x32xf32, #tpu.memory_space<vmem>>, vector<32x4xf32>
    %cst_167 = arith.constant dense<0.000000e+00> : vector<32x128xf32>
    %347 = tpu.matmul %346, %345, %cst_167 {dimension_numbers = #tpu.dot_dimension_numbers<[1], [0], [0], [1], [0, 0, 1, 1], [], []>} : vector<32x4xf32>, vector<4x128xf32>, vector<32x128xf32> -> vector<32x128xf32>
    %c536 = arith.constant 536 : index
    %c0_168 = arith.constant 0 : index
    %348 = vector.load %arg3[%c536, %c0_168] : memref<936x32xf32, #tpu.memory_space<vmem>>, vector<32x8xf32>
    %c536_169 = arith.constant 536 : index
    %c0_170 = arith.constant 0 : index
    %349 = vector.load %arg4[%c536_169, %c0_170] : memref<936x1xf32, #tpu.memory_space<vmem>>, vector<32x1xf32>
    %cst_171 = arith.constant dense<0.000000e+00> : vector<32x128xf32>
    %350 = tpu.matmul %348, %19, %cst_171 {dimension_numbers = #tpu.dot_dimension_numbers<[1], [0], [0], [1], [0, 0, 1, 1], [], []>} : vector<32x8xf32>, vector<8x128xf32>, vector<32x128xf32> -> vector<32x128xf32>
    %351 = vector.broadcast %349 : vector<32x1xf32> to vector<32x128xf32>
    %352 = arith.addf %350, %351 : vector<32x128xf32>
    %353 = arith.addf %347, %352 : vector<32x128xf32>
    %cst_172 = arith.constant 0.000000e+00 : f32
    %354 = vector.broadcast %cst_172 : f32 to vector<32x128xf32>
    %355 = arith.maximumf %353, %354 : vector<32x128xf32>
    %c568 = arith.constant 568 : index
    %c0_173 = arith.constant 0 : index
    %356 = vector.load %arg3[%c568, %c0_173] : memref<936x32xf32, #tpu.memory_space<vmem>>, vector<32x32xf32>
    %c568_174 = arith.constant 568 : index
    %c0_175 = arith.constant 0 : index
    %357 = vector.load %arg4[%c568_174, %c0_175] : memref<936x1xf32, #tpu.memory_space<vmem>>, vector<32x1xf32>
    %cst_176 = arith.constant dense<0.000000e+00> : vector<32x128xf32>
    %358 = tpu.matmul %356, %355, %cst_176 {dimension_numbers = #tpu.dot_dimension_numbers<[1], [0], [0], [1], [0, 0, 1, 1], [], []>} : vector<32x32xf32>, vector<32x128xf32>, vector<32x128xf32> -> vector<32x128xf32>
    %359 = vector.broadcast %357 : vector<32x1xf32> to vector<32x128xf32>
    %360 = arith.addf %358, %359 : vector<32x128xf32>
    %cst_177 = arith.constant 0.000000e+00 : f32
    %361 = vector.broadcast %cst_177 : f32 to vector<32x128xf32>
    %362 = arith.maximumf %360, %361 : vector<32x128xf32>
    %c600 = arith.constant 600 : index
    %c0_178 = arith.constant 0 : index
    %363 = vector.load %arg3[%c600, %c0_178] : memref<936x32xf32, #tpu.memory_space<vmem>>, vector<8x32xf32>
    %c600_179 = arith.constant 600 : index
    %c0_180 = arith.constant 0 : index
    %364 = vector.load %arg4[%c600_179, %c0_180] : memref<936x1xf32, #tpu.memory_space<vmem>>, vector<8x1xf32>
    %cst_181 = arith.constant dense<0.000000e+00> : vector<8x128xf32>
    %365 = tpu.matmul %363, %362, %cst_181 {dimension_numbers = #tpu.dot_dimension_numbers<[1], [0], [0], [1], [0, 0, 1, 1], [], []>} : vector<8x32xf32>, vector<32x128xf32>, vector<8x128xf32> -> vector<8x128xf32>
    %366 = vector.broadcast %364 : vector<8x1xf32> to vector<8x128xf32>
    %367 = arith.addf %365, %366 : vector<8x128xf32>
    %368 = vector.extract_strided_slice %367 {offsets = [0, 0], sizes = [4, 128], strides = [1, 1]} : vector<8x128xf32> to vector<4x128xf32>
    %cst_182 = arith.constant 0.000000e+00 : f32
    %369 = vector.broadcast %cst_182 : f32 to vector<4x128xf32>
    %370 = arith.cmpf olt, %368, %369 : vector<4x128xf32>
    %cst_183 = arith.constant -1.000000e+00 : f32
    %cst_184 = arith.constant 1.000000e+00 : f32
    %371 = vector.broadcast %cst_183 : f32 to vector<4x128xf32>
    %372 = vector.broadcast %cst_184 : f32 to vector<4x128xf32>
    %373 = arith.select %370, %371, %372 : vector<4x128xi1>, vector<4x128xf32>
    %374 = math.absf %368 : vector<4x128xf32>
    %cst_185 = arith.constant 2.41421366 : f32
    %375 = vector.broadcast %cst_185 : f32 to vector<4x128xf32>
    %376 = arith.cmpf ogt, %374, %375 : vector<4x128xf32>
    %cst_186 = arith.constant 0.414213568 : f32
    %377 = vector.broadcast %cst_186 : f32 to vector<4x128xf32>
    %378 = arith.cmpf ogt, %374, %377 : vector<4x128xf32>
    %cst_187 = arith.constant dense<true> : vector<4x128xi1>
    %379 = arith.xori %376, %cst_187 : vector<4x128xi1>
    %380 = arith.andi %378, %379 : vector<4x128xi1>
    %cst_188 = arith.constant 1.000000e+00 : f32
    %381 = vector.broadcast %cst_188 : f32 to vector<4x128xf32>
    %382 = arith.subf %374, %381 : vector<4x128xf32>
    %383 = arith.select %380, %382, %374 : vector<4x128xi1>, vector<4x128xf32>
    %cst_189 = arith.constant -1.000000e+00 : f32
    %384 = vector.broadcast %cst_189 : f32 to vector<4x128xf32>
    %385 = arith.select %376, %384, %383 : vector<4x128xi1>, vector<4x128xf32>
    %cst_190 = arith.constant 1.000000e-30 : f32
    %386 = vector.broadcast %cst_190 : f32 to vector<4x128xf32>
    %387 = arith.addf %374, %386 : vector<4x128xf32>
    %cst_191 = arith.constant 1.000000e+00 : f32
    %388 = vector.broadcast %cst_191 : f32 to vector<4x128xf32>
    %389 = arith.addf %374, %388 : vector<4x128xf32>
    %cst_192 = arith.constant 1.000000e+00 : f32
    %390 = vector.broadcast %cst_192 : f32 to vector<4x128xf32>
    %391 = arith.select %380, %389, %390 : vector<4x128xi1>, vector<4x128xf32>
    %392 = arith.select %376, %387, %391 : vector<4x128xi1>, vector<4x128xf32>
    %393 = arith.divf %385, %392 : vector<4x128xf32>
    %cst_193 = arith.constant 0.785398185 : f32
    %cst_194 = arith.constant 0.000000e+00 : f32
    %394 = vector.broadcast %cst_193 : f32 to vector<4x128xf32>
    %395 = vector.broadcast %cst_194 : f32 to vector<4x128xf32>
    %396 = arith.select %380, %394, %395 : vector<4x128xi1>, vector<4x128xf32>
    %cst_195 = arith.constant 1.57079637 : f32
    %397 = vector.broadcast %cst_195 : f32 to vector<4x128xf32>
    %398 = arith.select %376, %397, %396 : vector<4x128xi1>, vector<4x128xf32>
    %399 = arith.mulf %393, %393 : vector<4x128xf32>
    %cst_196 = arith.constant 0.0805374458 : f32
    %400 = vector.broadcast %cst_196 : f32 to vector<4x128xf32>
    %401 = arith.mulf %400, %399 : vector<4x128xf32>
    %cst_197 = arith.constant 0.138776854 : f32
    %402 = vector.broadcast %cst_197 : f32 to vector<4x128xf32>
    %403 = arith.subf %401, %402 : vector<4x128xf32>
    %404 = arith.mulf %403, %399 : vector<4x128xf32>
    %cst_198 = arith.constant 0.199777111 : f32
    %405 = vector.broadcast %cst_198 : f32 to vector<4x128xf32>
    %406 = arith.addf %404, %405 : vector<4x128xf32>
    %407 = arith.mulf %406, %399 : vector<4x128xf32>
    %cst_199 = arith.constant 0.333329499 : f32
    %408 = vector.broadcast %cst_199 : f32 to vector<4x128xf32>
    %409 = arith.subf %407, %408 : vector<4x128xf32>
    %410 = arith.mulf %409, %399 : vector<4x128xf32>
    %411 = arith.mulf %410, %393 : vector<4x128xf32>
    %412 = arith.addf %398, %411 : vector<4x128xf32>
    %413 = arith.addf %412, %393 : vector<4x128xf32>
    %414 = arith.mulf %373, %413 : vector<4x128xf32>
    %cst_200 = arith.constant 1.272000e+00 : f32
    %415 = vector.broadcast %cst_200 : f32 to vector<4x128xf32>
    %416 = arith.mulf %415, %414 : vector<4x128xf32>
    %417 = vector.extract_strided_slice %367 {offsets = [4, 0], sizes = [4, 128], strides = [1, 1]} : vector<8x128xf32> to vector<4x128xf32>
    %418 = math.exp %416 : vector<4x128xf32>
    %419 = arith.mulf %418, %344 : vector<4x128xf32>
    %420 = arith.addf %419, %417 : vector<4x128xf32>
    %cst_201 = arith.constant dense<0.000000e+00> : vector<128xf32>
    %421 = vector.multi_reduction <add>, %416, %cst_201 [0] : vector<4x128xf32> to vector<128xf32>
    %422 = vector.shape_cast %421 : vector<128xf32> to vector<1x128xf32>
    %423 = arith.addf %340, %422 : vector<1x128xf32>
    %c608 = arith.constant 608 : index
    %c0_202 = arith.constant 0 : index
    %424 = vector.load %arg3[%c608, %c0_202] : memref<936x32xf32, #tpu.memory_space<vmem>>, vector<32x4xf32>
    %cst_203 = arith.constant dense<0.000000e+00> : vector<32x128xf32>
    %425 = tpu.matmul %424, %420, %cst_203 {dimension_numbers = #tpu.dot_dimension_numbers<[1], [0], [0], [1], [0, 0, 1, 1], [], []>} : vector<32x4xf32>, vector<4x128xf32>, vector<32x128xf32> -> vector<32x128xf32>
    %c640 = arith.constant 640 : index
    %c0_204 = arith.constant 0 : index
    %426 = vector.load %arg3[%c640, %c0_204] : memref<936x32xf32, #tpu.memory_space<vmem>>, vector<32x8xf32>
    %c640_205 = arith.constant 640 : index
    %c0_206 = arith.constant 0 : index
    %427 = vector.load %arg4[%c640_205, %c0_206] : memref<936x1xf32, #tpu.memory_space<vmem>>, vector<32x1xf32>
    %cst_207 = arith.constant dense<0.000000e+00> : vector<32x128xf32>
    %428 = tpu.matmul %426, %19, %cst_207 {dimension_numbers = #tpu.dot_dimension_numbers<[1], [0], [0], [1], [0, 0, 1, 1], [], []>} : vector<32x8xf32>, vector<8x128xf32>, vector<32x128xf32> -> vector<32x128xf32>
    %429 = vector.broadcast %427 : vector<32x1xf32> to vector<32x128xf32>
    %430 = arith.addf %428, %429 : vector<32x128xf32>
    %431 = arith.addf %425, %430 : vector<32x128xf32>
    %cst_208 = arith.constant 0.000000e+00 : f32
    %432 = vector.broadcast %cst_208 : f32 to vector<32x128xf32>
    %433 = arith.maximumf %431, %432 : vector<32x128xf32>
    %c672 = arith.constant 672 : index
    %c0_209 = arith.constant 0 : index
    %434 = vector.load %arg3[%c672, %c0_209] : memref<936x32xf32, #tpu.memory_space<vmem>>, vector<32x32xf32>
    %c672_210 = arith.constant 672 : index
    %c0_211 = arith.constant 0 : index
    %435 = vector.load %arg4[%c672_210, %c0_211] : memref<936x1xf32, #tpu.memory_space<vmem>>, vector<32x1xf32>
    %cst_212 = arith.constant dense<0.000000e+00> : vector<32x128xf32>
    %436 = tpu.matmul %434, %433, %cst_212 {dimension_numbers = #tpu.dot_dimension_numbers<[1], [0], [0], [1], [0, 0, 1, 1], [], []>} : vector<32x32xf32>, vector<32x128xf32>, vector<32x128xf32> -> vector<32x128xf32>
    %437 = vector.broadcast %435 : vector<32x1xf32> to vector<32x128xf32>
    %438 = arith.addf %436, %437 : vector<32x128xf32>
    %cst_213 = arith.constant 0.000000e+00 : f32
    %439 = vector.broadcast %cst_213 : f32 to vector<32x128xf32>
    %440 = arith.maximumf %438, %439 : vector<32x128xf32>
    %c704 = arith.constant 704 : index
    %c0_214 = arith.constant 0 : index
    %441 = vector.load %arg3[%c704, %c0_214] : memref<936x32xf32, #tpu.memory_space<vmem>>, vector<8x32xf32>
    %c704_215 = arith.constant 704 : index
    %c0_216 = arith.constant 0 : index
    %442 = vector.load %arg4[%c704_215, %c0_216] : memref<936x1xf32, #tpu.memory_space<vmem>>, vector<8x1xf32>
    %cst_217 = arith.constant dense<0.000000e+00> : vector<8x128xf32>
    %443 = tpu.matmul %441, %440, %cst_217 {dimension_numbers = #tpu.dot_dimension_numbers<[1], [0], [0], [1], [0, 0, 1, 1], [], []>} : vector<8x32xf32>, vector<32x128xf32>, vector<8x128xf32> -> vector<8x128xf32>
    %444 = vector.broadcast %442 : vector<8x1xf32> to vector<8x128xf32>
    %445 = arith.addf %443, %444 : vector<8x128xf32>
    %446 = vector.extract_strided_slice %445 {offsets = [0, 0], sizes = [4, 128], strides = [1, 1]} : vector<8x128xf32> to vector<4x128xf32>
    %cst_218 = arith.constant 0.000000e+00 : f32
    %447 = vector.broadcast %cst_218 : f32 to vector<4x128xf32>
    %448 = arith.cmpf olt, %446, %447 : vector<4x128xf32>
    %cst_219 = arith.constant -1.000000e+00 : f32
    %cst_220 = arith.constant 1.000000e+00 : f32
    %449 = vector.broadcast %cst_219 : f32 to vector<4x128xf32>
    %450 = vector.broadcast %cst_220 : f32 to vector<4x128xf32>
    %451 = arith.select %448, %449, %450 : vector<4x128xi1>, vector<4x128xf32>
    %452 = math.absf %446 : vector<4x128xf32>
    %cst_221 = arith.constant 2.41421366 : f32
    %453 = vector.broadcast %cst_221 : f32 to vector<4x128xf32>
    %454 = arith.cmpf ogt, %452, %453 : vector<4x128xf32>
    %cst_222 = arith.constant 0.414213568 : f32
    %455 = vector.broadcast %cst_222 : f32 to vector<4x128xf32>
    %456 = arith.cmpf ogt, %452, %455 : vector<4x128xf32>
    %cst_223 = arith.constant dense<true> : vector<4x128xi1>
    %457 = arith.xori %454, %cst_223 : vector<4x128xi1>
    %458 = arith.andi %456, %457 : vector<4x128xi1>
    %cst_224 = arith.constant 1.000000e+00 : f32
    %459 = vector.broadcast %cst_224 : f32 to vector<4x128xf32>
    %460 = arith.subf %452, %459 : vector<4x128xf32>
    %461 = arith.select %458, %460, %452 : vector<4x128xi1>, vector<4x128xf32>
    %cst_225 = arith.constant -1.000000e+00 : f32
    %462 = vector.broadcast %cst_225 : f32 to vector<4x128xf32>
    %463 = arith.select %454, %462, %461 : vector<4x128xi1>, vector<4x128xf32>
    %cst_226 = arith.constant 1.000000e-30 : f32
    %464 = vector.broadcast %cst_226 : f32 to vector<4x128xf32>
    %465 = arith.addf %452, %464 : vector<4x128xf32>
    %cst_227 = arith.constant 1.000000e+00 : f32
    %466 = vector.broadcast %cst_227 : f32 to vector<4x128xf32>
    %467 = arith.addf %452, %466 : vector<4x128xf32>
    %cst_228 = arith.constant 1.000000e+00 : f32
    %468 = vector.broadcast %cst_228 : f32 to vector<4x128xf32>
    %469 = arith.select %458, %467, %468 : vector<4x128xi1>, vector<4x128xf32>
    %470 = arith.select %454, %465, %469 : vector<4x128xi1>, vector<4x128xf32>
    %471 = arith.divf %463, %470 : vector<4x128xf32>
    %cst_229 = arith.constant 0.785398185 : f32
    %cst_230 = arith.constant 0.000000e+00 : f32
    %472 = vector.broadcast %cst_229 : f32 to vector<4x128xf32>
    %473 = vector.broadcast %cst_230 : f32 to vector<4x128xf32>
    %474 = arith.select %458, %472, %473 : vector<4x128xi1>, vector<4x128xf32>
    %cst_231 = arith.constant 1.57079637 : f32
    %475 = vector.broadcast %cst_231 : f32 to vector<4x128xf32>
    %476 = arith.select %454, %475, %474 : vector<4x128xi1>, vector<4x128xf32>
    %477 = arith.mulf %471, %471 : vector<4x128xf32>
    %cst_232 = arith.constant 0.0805374458 : f32
    %478 = vector.broadcast %cst_232 : f32 to vector<4x128xf32>
    %479 = arith.mulf %478, %477 : vector<4x128xf32>
    %cst_233 = arith.constant 0.138776854 : f32
    %480 = vector.broadcast %cst_233 : f32 to vector<4x128xf32>
    %481 = arith.subf %479, %480 : vector<4x128xf32>
    %482 = arith.mulf %481, %477 : vector<4x128xf32>
    %cst_234 = arith.constant 0.199777111 : f32
    %483 = vector.broadcast %cst_234 : f32 to vector<4x128xf32>
    %484 = arith.addf %482, %483 : vector<4x128xf32>
    %485 = arith.mulf %484, %477 : vector<4x128xf32>
    %cst_235 = arith.constant 0.333329499 : f32
    %486 = vector.broadcast %cst_235 : f32 to vector<4x128xf32>
    %487 = arith.subf %485, %486 : vector<4x128xf32>
    %488 = arith.mulf %487, %477 : vector<4x128xf32>
    %489 = arith.mulf %488, %471 : vector<4x128xf32>
    %490 = arith.addf %476, %489 : vector<4x128xf32>
    %491 = arith.addf %490, %471 : vector<4x128xf32>
    %492 = arith.mulf %451, %491 : vector<4x128xf32>
    %cst_236 = arith.constant 1.272000e+00 : f32
    %493 = vector.broadcast %cst_236 : f32 to vector<4x128xf32>
    %494 = arith.mulf %493, %492 : vector<4x128xf32>
    %495 = vector.extract_strided_slice %445 {offsets = [4, 0], sizes = [4, 128], strides = [1, 1]} : vector<8x128xf32> to vector<4x128xf32>
    %496 = math.exp %494 : vector<4x128xf32>
    %497 = arith.mulf %496, %345 : vector<4x128xf32>
    %498 = arith.addf %497, %495 : vector<4x128xf32>
    %cst_237 = arith.constant dense<0.000000e+00> : vector<128xf32>
    %499 = vector.multi_reduction <add>, %494, %cst_237 [0] : vector<4x128xf32> to vector<128xf32>
    %500 = vector.shape_cast %499 : vector<128xf32> to vector<1x128xf32>
    %501 = arith.addf %423, %500 : vector<1x128xf32>
    %502 = tpu.concatenate %420, %498 in 0 : vector<4x128xf32>, vector<4x128xf32> -> vector<8x128xf32>
    %c712 = arith.constant 712 : index
    %c0_238 = arith.constant 0 : index
    %503 = vector.load %arg3[%c712, %c0_238] : memref<936x32xf32, #tpu.memory_space<vmem>>, vector<8x8xf32>
    %cst_239 = arith.constant dense<0.000000e+00> : vector<8x128xf32>
    %504 = tpu.matmul %503, %502, %cst_239 {dimension_numbers = #tpu.dot_dimension_numbers<[1], [0], [0], [1], [0, 0, 1, 1], [], []>} : vector<8x8xf32>, vector<8x128xf32>, vector<8x128xf32> -> vector<8x128xf32>
    %505 = vector.extract_strided_slice %504 {offsets = [0, 0], sizes = [4, 128], strides = [1, 1]} : vector<8x128xf32> to vector<4x128xf32>
    %506 = vector.extract_strided_slice %504 {offsets = [4, 0], sizes = [4, 128], strides = [1, 1]} : vector<8x128xf32> to vector<4x128xf32>
    %c720 = arith.constant 720 : index
    %c0_240 = arith.constant 0 : index
    %507 = vector.load %arg3[%c720, %c0_240] : memref<936x32xf32, #tpu.memory_space<vmem>>, vector<32x4xf32>
    %cst_241 = arith.constant dense<0.000000e+00> : vector<32x128xf32>
    %508 = tpu.matmul %507, %506, %cst_241 {dimension_numbers = #tpu.dot_dimension_numbers<[1], [0], [0], [1], [0, 0, 1, 1], [], []>} : vector<32x4xf32>, vector<4x128xf32>, vector<32x128xf32> -> vector<32x128xf32>
    %c752 = arith.constant 752 : index
    %c0_242 = arith.constant 0 : index
    %509 = vector.load %arg3[%c752, %c0_242] : memref<936x32xf32, #tpu.memory_space<vmem>>, vector<32x8xf32>
    %c752_243 = arith.constant 752 : index
    %c0_244 = arith.constant 0 : index
    %510 = vector.load %arg4[%c752_243, %c0_244] : memref<936x1xf32, #tpu.memory_space<vmem>>, vector<32x1xf32>
    %cst_245 = arith.constant dense<0.000000e+00> : vector<32x128xf32>
    %511 = tpu.matmul %509, %19, %cst_245 {dimension_numbers = #tpu.dot_dimension_numbers<[1], [0], [0], [1], [0, 0, 1, 1], [], []>} : vector<32x8xf32>, vector<8x128xf32>, vector<32x128xf32> -> vector<32x128xf32>
    %512 = vector.broadcast %510 : vector<32x1xf32> to vector<32x128xf32>
    %513 = arith.addf %511, %512 : vector<32x128xf32>
    %514 = arith.addf %508, %513 : vector<32x128xf32>
    %cst_246 = arith.constant 0.000000e+00 : f32
    %515 = vector.broadcast %cst_246 : f32 to vector<32x128xf32>
    %516 = arith.maximumf %514, %515 : vector<32x128xf32>
    %c784 = arith.constant 784 : index
    %c0_247 = arith.constant 0 : index
    %517 = vector.load %arg3[%c784, %c0_247] : memref<936x32xf32, #tpu.memory_space<vmem>>, vector<32x32xf32>
    %c784_248 = arith.constant 784 : index
    %c0_249 = arith.constant 0 : index
    %518 = vector.load %arg4[%c784_248, %c0_249] : memref<936x1xf32, #tpu.memory_space<vmem>>, vector<32x1xf32>
    %cst_250 = arith.constant dense<0.000000e+00> : vector<32x128xf32>
    %519 = tpu.matmul %517, %516, %cst_250 {dimension_numbers = #tpu.dot_dimension_numbers<[1], [0], [0], [1], [0, 0, 1, 1], [], []>} : vector<32x32xf32>, vector<32x128xf32>, vector<32x128xf32> -> vector<32x128xf32>
    %520 = vector.broadcast %518 : vector<32x1xf32> to vector<32x128xf32>
    %521 = arith.addf %519, %520 : vector<32x128xf32>
    %cst_251 = arith.constant 0.000000e+00 : f32
    %522 = vector.broadcast %cst_251 : f32 to vector<32x128xf32>
    %523 = arith.maximumf %521, %522 : vector<32x128xf32>
    %c816 = arith.constant 816 : index
    %c0_252 = arith.constant 0 : index
    %524 = vector.load %arg3[%c816, %c0_252] : memref<936x32xf32, #tpu.memory_space<vmem>>, vector<8x32xf32>
    %c816_253 = arith.constant 816 : index
    %c0_254 = arith.constant 0 : index
    %525 = vector.load %arg4[%c816_253, %c0_254] : memref<936x1xf32, #tpu.memory_space<vmem>>, vector<8x1xf32>
    %cst_255 = arith.constant dense<0.000000e+00> : vector<8x128xf32>
    %526 = tpu.matmul %524, %523, %cst_255 {dimension_numbers = #tpu.dot_dimension_numbers<[1], [0], [0], [1], [0, 0, 1, 1], [], []>} : vector<8x32xf32>, vector<32x128xf32>, vector<8x128xf32> -> vector<8x128xf32>
    %527 = vector.broadcast %525 : vector<8x1xf32> to vector<8x128xf32>
    %528 = arith.addf %526, %527 : vector<8x128xf32>
    %529 = vector.extract_strided_slice %528 {offsets = [0, 0], sizes = [4, 128], strides = [1, 1]} : vector<8x128xf32> to vector<4x128xf32>
    %cst_256 = arith.constant 0.000000e+00 : f32
    %530 = vector.broadcast %cst_256 : f32 to vector<4x128xf32>
    %531 = arith.cmpf olt, %529, %530 : vector<4x128xf32>
    %cst_257 = arith.constant -1.000000e+00 : f32
    %cst_258 = arith.constant 1.000000e+00 : f32
    %532 = vector.broadcast %cst_257 : f32 to vector<4x128xf32>
    %533 = vector.broadcast %cst_258 : f32 to vector<4x128xf32>
    %534 = arith.select %531, %532, %533 : vector<4x128xi1>, vector<4x128xf32>
    %535 = math.absf %529 : vector<4x128xf32>
    %cst_259 = arith.constant 2.41421366 : f32
    %536 = vector.broadcast %cst_259 : f32 to vector<4x128xf32>
    %537 = arith.cmpf ogt, %535, %536 : vector<4x128xf32>
    %cst_260 = arith.constant 0.414213568 : f32
    %538 = vector.broadcast %cst_260 : f32 to vector<4x128xf32>
    %539 = arith.cmpf ogt, %535, %538 : vector<4x128xf32>
    %cst_261 = arith.constant dense<true> : vector<4x128xi1>
    %540 = arith.xori %537, %cst_261 : vector<4x128xi1>
    %541 = arith.andi %539, %540 : vector<4x128xi1>
    %cst_262 = arith.constant 1.000000e+00 : f32
    %542 = vector.broadcast %cst_262 : f32 to vector<4x128xf32>
    %543 = arith.subf %535, %542 : vector<4x128xf32>
    %544 = arith.select %541, %543, %535 : vector<4x128xi1>, vector<4x128xf32>
    %cst_263 = arith.constant -1.000000e+00 : f32
    %545 = vector.broadcast %cst_263 : f32 to vector<4x128xf32>
    %546 = arith.select %537, %545, %544 : vector<4x128xi1>, vector<4x128xf32>
    %cst_264 = arith.constant 1.000000e-30 : f32
    %547 = vector.broadcast %cst_264 : f32 to vector<4x128xf32>
    %548 = arith.addf %535, %547 : vector<4x128xf32>
    %cst_265 = arith.constant 1.000000e+00 : f32
    %549 = vector.broadcast %cst_265 : f32 to vector<4x128xf32>
    %550 = arith.addf %535, %549 : vector<4x128xf32>
    %cst_266 = arith.constant 1.000000e+00 : f32
    %551 = vector.broadcast %cst_266 : f32 to vector<4x128xf32>
    %552 = arith.select %541, %550, %551 : vector<4x128xi1>, vector<4x128xf32>
    %553 = arith.select %537, %548, %552 : vector<4x128xi1>, vector<4x128xf32>
    %554 = arith.divf %546, %553 : vector<4x128xf32>
    %cst_267 = arith.constant 0.785398185 : f32
    %cst_268 = arith.constant 0.000000e+00 : f32
    %555 = vector.broadcast %cst_267 : f32 to vector<4x128xf32>
    %556 = vector.broadcast %cst_268 : f32 to vector<4x128xf32>
    %557 = arith.select %541, %555, %556 : vector<4x128xi1>, vector<4x128xf32>
    %cst_269 = arith.constant 1.57079637 : f32
    %558 = vector.broadcast %cst_269 : f32 to vector<4x128xf32>
    %559 = arith.select %537, %558, %557 : vector<4x128xi1>, vector<4x128xf32>
    %560 = arith.mulf %554, %554 : vector<4x128xf32>
    %cst_270 = arith.constant 0.0805374458 : f32
    %561 = vector.broadcast %cst_270 : f32 to vector<4x128xf32>
    %562 = arith.mulf %561, %560 : vector<4x128xf32>
    %cst_271 = arith.constant 0.138776854 : f32
    %563 = vector.broadcast %cst_271 : f32 to vector<4x128xf32>
    %564 = arith.subf %562, %563 : vector<4x128xf32>
    %565 = arith.mulf %564, %560 : vector<4x128xf32>
    %cst_272 = arith.constant 0.199777111 : f32
    %566 = vector.broadcast %cst_272 : f32 to vector<4x128xf32>
    %567 = arith.addf %565, %566 : vector<4x128xf32>
    %568 = arith.mulf %567, %560 : vector<4x128xf32>
    %cst_273 = arith.constant 0.333329499 : f32
    %569 = vector.broadcast %cst_273 : f32 to vector<4x128xf32>
    %570 = arith.subf %568, %569 : vector<4x128xf32>
    %571 = arith.mulf %570, %560 : vector<4x128xf32>
    %572 = arith.mulf %571, %554 : vector<4x128xf32>
    %573 = arith.addf %559, %572 : vector<4x128xf32>
    %574 = arith.addf %573, %554 : vector<4x128xf32>
    %575 = arith.mulf %534, %574 : vector<4x128xf32>
    %cst_274 = arith.constant 1.272000e+00 : f32
    %576 = vector.broadcast %cst_274 : f32 to vector<4x128xf32>
    %577 = arith.mulf %576, %575 : vector<4x128xf32>
    %578 = vector.extract_strided_slice %528 {offsets = [4, 0], sizes = [4, 128], strides = [1, 1]} : vector<8x128xf32> to vector<4x128xf32>
    %579 = math.exp %577 : vector<4x128xf32>
    %580 = arith.mulf %579, %505 : vector<4x128xf32>
    %581 = arith.addf %580, %578 : vector<4x128xf32>
    %cst_275 = arith.constant dense<0.000000e+00> : vector<128xf32>
    %582 = vector.multi_reduction <add>, %577, %cst_275 [0] : vector<4x128xf32> to vector<128xf32>
    %583 = vector.shape_cast %582 : vector<128xf32> to vector<1x128xf32>
    %584 = arith.addf %501, %583 : vector<1x128xf32>
    %c824 = arith.constant 824 : index
    %c0_276 = arith.constant 0 : index
    %585 = vector.load %arg3[%c824, %c0_276] : memref<936x32xf32, #tpu.memory_space<vmem>>, vector<32x4xf32>
    %cst_277 = arith.constant dense<0.000000e+00> : vector<32x128xf32>
    %586 = tpu.matmul %585, %581, %cst_277 {dimension_numbers = #tpu.dot_dimension_numbers<[1], [0], [0], [1], [0, 0, 1, 1], [], []>} : vector<32x4xf32>, vector<4x128xf32>, vector<32x128xf32> -> vector<32x128xf32>
    %c856 = arith.constant 856 : index
    %c0_278 = arith.constant 0 : index
    %587 = vector.load %arg3[%c856, %c0_278] : memref<936x32xf32, #tpu.memory_space<vmem>>, vector<32x8xf32>
    %c856_279 = arith.constant 856 : index
    %c0_280 = arith.constant 0 : index
    %588 = vector.load %arg4[%c856_279, %c0_280] : memref<936x1xf32, #tpu.memory_space<vmem>>, vector<32x1xf32>
    %cst_281 = arith.constant dense<0.000000e+00> : vector<32x128xf32>
    %589 = tpu.matmul %587, %19, %cst_281 {dimension_numbers = #tpu.dot_dimension_numbers<[1], [0], [0], [1], [0, 0, 1, 1], [], []>} : vector<32x8xf32>, vector<8x128xf32>, vector<32x128xf32> -> vector<32x128xf32>
    %590 = vector.broadcast %588 : vector<32x1xf32> to vector<32x128xf32>
    %591 = arith.addf %589, %590 : vector<32x128xf32>
    %592 = arith.addf %586, %591 : vector<32x128xf32>
    %cst_282 = arith.constant 0.000000e+00 : f32
    %593 = vector.broadcast %cst_282 : f32 to vector<32x128xf32>
    %594 = arith.maximumf %592, %593 : vector<32x128xf32>
    %c888 = arith.constant 888 : index
    %c0_283 = arith.constant 0 : index
    %595 = vector.load %arg3[%c888, %c0_283] : memref<936x32xf32, #tpu.memory_space<vmem>>, vector<32x32xf32>
    %c888_284 = arith.constant 888 : index
    %c0_285 = arith.constant 0 : index
    %596 = vector.load %arg4[%c888_284, %c0_285] : memref<936x1xf32, #tpu.memory_space<vmem>>, vector<32x1xf32>
    %cst_286 = arith.constant dense<0.000000e+00> : vector<32x128xf32>
    %597 = tpu.matmul %595, %594, %cst_286 {dimension_numbers = #tpu.dot_dimension_numbers<[1], [0], [0], [1], [0, 0, 1, 1], [], []>} : vector<32x32xf32>, vector<32x128xf32>, vector<32x128xf32> -> vector<32x128xf32>
    %598 = vector.broadcast %596 : vector<32x1xf32> to vector<32x128xf32>
    %599 = arith.addf %597, %598 : vector<32x128xf32>
    %cst_287 = arith.constant 0.000000e+00 : f32
    %600 = vector.broadcast %cst_287 : f32 to vector<32x128xf32>
    %601 = arith.maximumf %599, %600 : vector<32x128xf32>
    %c920 = arith.constant 920 : index
    %c0_288 = arith.constant 0 : index
    %602 = vector.load %arg3[%c920, %c0_288] : memref<936x32xf32, #tpu.memory_space<vmem>>, vector<8x32xf32>
    %c920_289 = arith.constant 920 : index
    %c0_290 = arith.constant 0 : index
    %603 = vector.load %arg4[%c920_289, %c0_290] : memref<936x1xf32, #tpu.memory_space<vmem>>, vector<8x1xf32>
    %cst_291 = arith.constant dense<0.000000e+00> : vector<8x128xf32>
    %604 = tpu.matmul %602, %601, %cst_291 {dimension_numbers = #tpu.dot_dimension_numbers<[1], [0], [0], [1], [0, 0, 1, 1], [], []>} : vector<8x32xf32>, vector<32x128xf32>, vector<8x128xf32> -> vector<8x128xf32>
    %605 = vector.broadcast %603 : vector<8x1xf32> to vector<8x128xf32>
    %606 = arith.addf %604, %605 : vector<8x128xf32>
    %607 = vector.extract_strided_slice %606 {offsets = [0, 0], sizes = [4, 128], strides = [1, 1]} : vector<8x128xf32> to vector<4x128xf32>
    %cst_292 = arith.constant 0.000000e+00 : f32
    %608 = vector.broadcast %cst_292 : f32 to vector<4x128xf32>
    %609 = arith.cmpf olt, %607, %608 : vector<4x128xf32>
    %cst_293 = arith.constant -1.000000e+00 : f32
    %cst_294 = arith.constant 1.000000e+00 : f32
    %610 = vector.broadcast %cst_293 : f32 to vector<4x128xf32>
    %611 = vector.broadcast %cst_294 : f32 to vector<4x128xf32>
    %612 = arith.select %609, %610, %611 : vector<4x128xi1>, vector<4x128xf32>
    %613 = math.absf %607 : vector<4x128xf32>
    %cst_295 = arith.constant 2.41421366 : f32
    %614 = vector.broadcast %cst_295 : f32 to vector<4x128xf32>
    %615 = arith.cmpf ogt, %613, %614 : vector<4x128xf32>
    %cst_296 = arith.constant 0.414213568 : f32
    %616 = vector.broadcast %cst_296 : f32 to vector<4x128xf32>
    %617 = arith.cmpf ogt, %613, %616 : vector<4x128xf32>
    %cst_297 = arith.constant dense<true> : vector<4x128xi1>
    %618 = arith.xori %615, %cst_297 : vector<4x128xi1>
    %619 = arith.andi %617, %618 : vector<4x128xi1>
    %cst_298 = arith.constant 1.000000e+00 : f32
    %620 = vector.broadcast %cst_298 : f32 to vector<4x128xf32>
    %621 = arith.subf %613, %620 : vector<4x128xf32>
    %622 = arith.select %619, %621, %613 : vector<4x128xi1>, vector<4x128xf32>
    %cst_299 = arith.constant -1.000000e+00 : f32
    %623 = vector.broadcast %cst_299 : f32 to vector<4x128xf32>
    %624 = arith.select %615, %623, %622 : vector<4x128xi1>, vector<4x128xf32>
    %cst_300 = arith.constant 1.000000e-30 : f32
    %625 = vector.broadcast %cst_300 : f32 to vector<4x128xf32>
    %626 = arith.addf %613, %625 : vector<4x128xf32>
    %cst_301 = arith.constant 1.000000e+00 : f32
    %627 = vector.broadcast %cst_301 : f32 to vector<4x128xf32>
    %628 = arith.addf %613, %627 : vector<4x128xf32>
    %cst_302 = arith.constant 1.000000e+00 : f32
    %629 = vector.broadcast %cst_302 : f32 to vector<4x128xf32>
    %630 = arith.select %619, %628, %629 : vector<4x128xi1>, vector<4x128xf32>
    %631 = arith.select %615, %626, %630 : vector<4x128xi1>, vector<4x128xf32>
    %632 = arith.divf %624, %631 : vector<4x128xf32>
    %cst_303 = arith.constant 0.785398185 : f32
    %cst_304 = arith.constant 0.000000e+00 : f32
    %633 = vector.broadcast %cst_303 : f32 to vector<4x128xf32>
    %634 = vector.broadcast %cst_304 : f32 to vector<4x128xf32>
    %635 = arith.select %619, %633, %634 : vector<4x128xi1>, vector<4x128xf32>
    %cst_305 = arith.constant 1.57079637 : f32
    %636 = vector.broadcast %cst_305 : f32 to vector<4x128xf32>
    %637 = arith.select %615, %636, %635 : vector<4x128xi1>, vector<4x128xf32>
    %638 = arith.mulf %632, %632 : vector<4x128xf32>
    %cst_306 = arith.constant 0.0805374458 : f32
    %639 = vector.broadcast %cst_306 : f32 to vector<4x128xf32>
    %640 = arith.mulf %639, %638 : vector<4x128xf32>
    %cst_307 = arith.constant 0.138776854 : f32
    %641 = vector.broadcast %cst_307 : f32 to vector<4x128xf32>
    %642 = arith.subf %640, %641 : vector<4x128xf32>
    %643 = arith.mulf %642, %638 : vector<4x128xf32>
    %cst_308 = arith.constant 0.199777111 : f32
    %644 = vector.broadcast %cst_308 : f32 to vector<4x128xf32>
    %645 = arith.addf %643, %644 : vector<4x128xf32>
    %646 = arith.mulf %645, %638 : vector<4x128xf32>
    %cst_309 = arith.constant 0.333329499 : f32
    %647 = vector.broadcast %cst_309 : f32 to vector<4x128xf32>
    %648 = arith.subf %646, %647 : vector<4x128xf32>
    %649 = arith.mulf %648, %638 : vector<4x128xf32>
    %650 = arith.mulf %649, %632 : vector<4x128xf32>
    %651 = arith.addf %637, %650 : vector<4x128xf32>
    %652 = arith.addf %651, %632 : vector<4x128xf32>
    %653 = arith.mulf %612, %652 : vector<4x128xf32>
    %cst_310 = arith.constant 1.272000e+00 : f32
    %654 = vector.broadcast %cst_310 : f32 to vector<4x128xf32>
    %655 = arith.mulf %654, %653 : vector<4x128xf32>
    %656 = vector.extract_strided_slice %606 {offsets = [4, 0], sizes = [4, 128], strides = [1, 1]} : vector<8x128xf32> to vector<4x128xf32>
    %657 = math.exp %655 : vector<4x128xf32>
    %658 = arith.mulf %657, %506 : vector<4x128xf32>
    %659 = arith.addf %658, %656 : vector<4x128xf32>
    %cst_311 = arith.constant dense<0.000000e+00> : vector<128xf32>
    %660 = vector.multi_reduction <add>, %655, %cst_311 [0] : vector<4x128xf32> to vector<128xf32>
    %661 = vector.shape_cast %660 : vector<128xf32> to vector<1x128xf32>
    %662 = arith.addf %584, %661 : vector<1x128xf32>
    %663 = tpu.concatenate %581, %659 in 0 : vector<4x128xf32>, vector<4x128xf32> -> vector<8x128xf32>
    %c928 = arith.constant 928 : index
    %c0_312 = arith.constant 0 : index
    %664 = vector.load %arg3[%c928, %c0_312] : memref<936x32xf32, #tpu.memory_space<vmem>>, vector<8x8xf32>
    %cst_313 = arith.constant dense<0.000000e+00> : vector<8x128xf32>
    %665 = tpu.matmul %664, %663, %cst_313 {dimension_numbers = #tpu.dot_dimension_numbers<[1], [0], [0], [1], [0, 0, 1, 1], [], []>} : vector<8x8xf32>, vector<8x128xf32>, vector<8x128xf32> -> vector<8x128xf32>
    %c0_314 = arith.constant 0 : index
    %c0_315 = arith.constant 0 : index
    %666 = vector.load %arg5[%c0_314, %c0_315] : memref<8x128xf32, #tpu.memory_space<vmem>>, vector<8x128xf32>
    tpu.vector_store %arg5[%c0_314, %c0_315], %665 {strides = array<i32>} : memref<8x128xf32, #tpu.memory_space<vmem>>, vector<8x128xf32>,
    %c0_316 = arith.constant 0 : index
    %c0_317 = arith.constant 0 : index
    %667 = vector.load %arg6[%c0_316, %c0_317] : memref<1x128xf32, #tpu.memory_space<vmem>>, vector<1x128xf32>
    tpu.vector_store %arg6[%c0_316, %c0_317], %662 {strides = array<i32>} : memref<1x128xf32, #tpu.memory_space<vmem>>, vector<1x128xf32>,
    return
  }
  func.func @transform_0(%arg0: i32) -> (i32, i32) {
    %c0_i32 = arith.constant 0 : i32
    %c0_i32_0 = arith.constant 0 : i32
    return %c0_i32, %arg0 : i32, i32
  }
  func.func @transform_1(%arg0: i32) -> (i32, i32) {
    %c0_i32 = arith.constant 0 : i32
    %c0_i32_0 = arith.constant 0 : i32
    return %c0_i32, %arg0 : i32, i32
  }
  func.func @transform_2(%arg0: i32) -> (i32, i32) {
    %c0_i32 = arith.constant 0 : i32
    %c0_i32_0 = arith.constant 0 : i32
    %c0_i32_1 = arith.constant 0 : i32
    return %c0_i32, %c0_i32_0 : i32, i32
  }
  func.func @transform_3(%arg0: i32) -> (i32, i32) {
    %c0_i32 = arith.constant 0 : i32
    %c0_i32_0 = arith.constant 0 : i32
    %c0_i32_1 = arith.constant 0 : i32
    return %c0_i32, %c0_i32_0 : i32, i32
  }
  func.func @transform_4(%arg0: i32) -> (i32, i32) {
    %c0_i32 = arith.constant 0 : i32
    %c0_i32_0 = arith.constant 0 : i32
    return %c0_i32, %arg0 : i32, i32
  }
  func.func @transform_5(%arg0: i32) -> (i32, i32) {
    %c0_i32 = arith.constant 0 : i32
    %c0_i32_0 = arith.constant 0 : i32
    return %c0_i32, %arg0 : i32, i32
  }
}

</mosaic_0001>

<llo_original>
// kernel: forward.1
$region0: #{forward.1}
  #allocation0 [shape = 'u32[]', space=smem, size = 0x4, offset = 0x4, fixed_abs, tag = 'smem constant byte address 0x4 - core index']
  #allocation1 [shape = 'u32[144,128]{1,0:T(1,128)}', space=vmem, size = 0x12000, scoped, tag = 'internal scratch']
  %s0 = inlined_call_operand.vmem [shape: f32[8,128], index: 0, kind: input, shape index: {}]
  %s1 = inlined_call_operand.vmem [shape: f32[16,128], index: 1, kind: input, shape index: {}]
  %s2 = inlined_call_operand.hbm [shape: f32[936,32], index: 2, kind: input, shape index: {}]
  %s3 = inlined_call_operand.hbm [shape: f32[936,1], index: 3, kind: input, shape index: {}]
  %s4 = inlined_call_operand.vmem [shape: f32[8,128], index: 4, kind: output, shape index: {0}]
  %s5 = inlined_call_operand.vmem [shape: f32[1,128], index: 5, kind: output, shape index: {1}]
  %6 = xla_tuple %s4, %s5
  %s7 = sld [smem:[#allocation0]]
  $region42: #{forward.1} parent=0
    _
  %s9 = ssub.s32 1, %s7
  %s10 = scalar_select 0, %s9, %s7
  $region1: #{forward.1} parent=0
    #allocation2 [shape = 'u8[479232]{0}', space=vmem, size = 0x75000, scoped, tag = 'input window, operand 2, single buffered']
    #allocation3 [shape = 's32[1]{0}', space=sflag, size = 0x4, scoped, tag = 'scoped memory for forward.1']
    #allocation4 [shape = 'u8[479232]{0}', space=vmem, size = 0x75000, scoped, tag = 'input window, operand 3, single buffered']
    #allocation5 [shape = 's32[1]{0}', space=sflag, size = 0x4, scoped, tag = 'scoped memory for forward.1']
    %11 = vsyncpa [#allocation3], 0
    %12 = vsyncpa [#allocation5], 0
    // Predicated region
    $region2: #{forward.1} parent=1 // pred_check
      _
    $region3: #{forward.1} parent=1 // pred_check_branch
      %14 = sbr.rel (0) target = $region5
    $region4: #{forward.1} parent=1 // pred_region
      _
    $region5: #{forward.1} parent=1 // pred_fallthru
      _
    // Predicated region
    $region6: #{forward.1} parent=1 // pred_check
      _
    $region7: #{forward.1} parent=1 // pred_check_branch
      %16 = sbr.rel (0) target = $region9
    $region8: #{forward.1} parent=1 // pred_region
      _
    $region9: #{forward.1} parent=1 // pred_fallthru
      _
    // Predicated region
    $region10: #{forward.1} parent=1 // pred_check
      _
    $region11: #{forward.1} parent=1 // pred_check_branch
      %18 = sbr.rel (0) target = $region13
    $region12: #{forward.1} parent=1 // pred_region
      %s20 = ssub.s32 14976, 14976
      %21 = vsyncadd [#allocation3], %s20
      %s22 = sshll.u32 [#allocation2], 4
      %s23 = int_to_ptr.vmem [resolvable:$true] %s22
      %28 = dma.hbm_to_vmem [thread:$0]  %s2, 14976, %s23, [#allocation3], 128, 128, 8
    $region13: #{forward.1} parent=1 // pred_fallthru
      _
    // Predicated region
    $region14: #{forward.1} parent=1 // pred_check
      _
    $region15: #{forward.1} parent=1 // pred_check_branch
      %30 = sbr.rel (0) target = $region17
    $region16: #{forward.1} parent=1 // pred_region
      %s32 = ssub.s32 14976, 14976
      %33 = vsyncadd [#allocation5], %s32
      %s34 = sshll.u32 [#allocation4], 4
      %s35 = int_to_ptr.vmem [resolvable:$true] %s34
      %40 = dma.hbm_to_vmem [thread:$0]  %s3, 14976, %s35, [#allocation5], 128, 128, 8
    $region17: #{forward.1} parent=1 // pred_fallthru
      _
    // Predicated region
    $region18: #{forward.1} parent=1 // pred_check
      _
    $region19: #{forward.1} parent=1 // pred_check_branch
      %42 = sbr.rel (0) target = $region21
    $region20: #{forward.1} parent=1 // pred_region
      %43 = dma.done [#allocation3], 14976
    $region21: #{forward.1} parent=1 // pred_fallthru
      _
    // Predicated region
    $region22: #{forward.1} parent=1 // pred_check
      _
    $region23: #{forward.1} parent=1 // pred_check_branch
      %45 = sbr.rel (0) target = $region25
    $region24: #{forward.1} parent=1 // pred_region
      %46 = dma.done [#allocation5], 14976
    $region25: #{forward.1} parent=1 // pred_fallthru
      _
    %v47 = vld [vmem:[%s1] sm:$0xff]
    %v48 = vld [vmem:[%s1 + $0x8] sm:$0xff]
    %v49 = vld [vmem:[#allocation2] sm:$0xff]
    %v50 = vld [vmem:[#allocation2 + $0x8] sm:$0xff]
    %v51 = vld [vmem:[#allocation2 + $0x10] sm:$0xff]
    %v52 = vld [vmem:[#allocation2 + $0x18] sm:$0xff]
    %v53 = vld [vmem:[#allocation4] sm:$0xff]
    %v54 = vld [vmem:[#allocation4 + $0x8] sm:$0xff]
    %v55 = vld [vmem:[#allocation4 + $0x10] sm:$0xff]
    %v56 = vld [vmem:[#allocation4 + $0x18] sm:$0xff]
    %58 = vset.pattern.permute.xlu0 0
    %59 = vperm.xlu0 %58, %v53
    %v60 = vpop.permute.xlu0 %59
    %63 = vset.pattern.permute.xlu0 0
    %64 = vperm.xlu0 %63, %v54
    %v65 = vpop.permute.xlu0 %64
    %68 = vset.pattern.permute.xlu0 0
    %69 = vperm.xlu0 %68, %v55
    %v70 = vpop.permute.xlu0 %69
    %73 = vset.pattern.permute.xlu0 0
    %74 = vperm.xlu0 %73, %v56
    %v75 = vpop.permute.xlu0 %74
    %vm77 = vcmask 130048
    %v79 = vsel %vm77, %v49, 0
    %v82 = vsel %vm77, %v50, 0
    %v85 = vsel %vm77, %v51, 0
    %v88 = vsel %vm77, %v52, 0
    %90 = vmatprep.subr.mxu0 0.0
    %91 = vmatpush1.msra.mxu0 0.0
    %92 = vmatprep.subr.mxu0 0.0
    %93 = vmatpush1.msra.mxu0 0.0
    %94 = vmatprep.subr.mxu0 0.0
    %95 = vmatpush1.msra.mxu0 0.0
    %96 = vmatprep.subr.mxu0 0.0
    %97 = vmatpush1.msra.mxu0 0.0
    %98 = vmatprep.subr.mxu0 0.0
    %99 = vmatpush1.msra.mxu0 0.0
    %100 = vmatprep.subr.mxu0 0.0
    %101 = vmatpush1.msra.mxu0 0.0
    %102 = vmatprep.subr.mxu0 0.0
    %103 = vmatpush1.msra.mxu0 0.0
    %104 = vmatprep.subr.mxu0 0.0
    %105 = vmatpush1.msra.mxu0 0.0
    %106 = vmatprep.subr.mxu0 0.0
    %107 = vmatpush1.msra.mxu0 0.0
    %108 = vmatprep.subr.mxu0 0.0
    %109 = vmatpush1.msra.mxu0 0.0
    %110 = vmatprep.subr.mxu0 0.0
    %111 = vmatpush1.msra.mxu0 0.0
    %112 = vmatprep.subr.mxu0 0.0
    %113 = vmatpush1.msra.mxu0 0.0
    %114 = vmatprep.subr.mxu0 0.0
    %115 = vmatpush1.msra.mxu0 0.0
    %116 = vmatprep.subr.mxu0 0.0
    %117 = vmatpush1.msra.mxu0 0.0
    %118 = vmatprep.subr.mxu0 0.0
    %119 = vmatpush1.msra.mxu0 %v48
    %120 = vmatprep.subr.mxu0 0.0
    %121 = vmatpush1.msra.mxu0 %v47
    %122 = vmatprep.subr.mxu0 0.0
    %123 = vmatpush2.msra.mxu0 0.0
    %124 = vmatprep.subr.mxu0 0.0
    %125 = vmatpush2.msra.mxu0 0.0
    %126 = vmatprep.subr.mxu0 0.0
    %127 = vmatpush2.msra.mxu0 0.0
    %128 = vmatprep.subr.mxu0 0.0
    %129 = vmatpush2.msra.mxu0 0.0
    %130 = vmatprep.subr.mxu0 0.0
    %131 = vmatpush2.msra.mxu0 0.0
    %132 = vmatprep.subr.mxu0 0.0
    %133 = vmatpush2.msra.mxu0 0.0
    %134 = vmatprep.subr.mxu0 0.0
    %135 = vmatpush2.msra.mxu0 0.0
    %136 = vmatprep.subr.mxu0 0.0
    %137 = vmatpush2.msra.mxu0 0.0
    %138 = vmatprep.subr.mxu0 0.0
    %139 = vmatpush2.msra.mxu0 0.0
    %140 = vmatprep.subr.mxu0 0.0
    %141 = vmatpush2.msra.mxu0 0.0
    %142 = vmatprep.subr.mxu0 0.0
    %143 = vmatpush2.msra.mxu0 0.0
    %144 = vmatprep.subr.mxu0 0.0
    %145 = vmatpush2.msra.mxu0 0.0
    %146 = vmatprep.subr.mxu0 0.0
    %147 = vmatpush2.msra.mxu0 0.0
    %148 = vmatprep.subr.mxu0 0.0
    %149 = vmatpush2.msra.mxu0 0.0
    %150 = vmatprep.subr.mxu0 0.0
    %151 = vmatpush2.msra.mxu0 0.0
    %152 = vmatprep.subr.mxu0 0.0
    %153 = vmatpush2.msra.mxu0 0.0
    %154 = vmatprep.mubr.f32.mxu0 0.0
    %155 = vmatmul.mubr.f32.gmra.mxu0 %v79
    %v156 = vpop.f32.mrf.mxu0
    %v157 = vadd.f32 %v60, %v156
    %v158 = vpop.f32.mrf.mxu0
    %159 = vmatprep.mubr.f32.mxu0 0.0
    %160 = vmatmul.mubr.f32.gmra.mxu0 %v82
    %v161 = vpop.f32.mrf.mxu0
    %v162 = vadd.f32 %v65, %v161
    %v163 = vpop.f32.mrf.mxu0
    %164 = vmatprep.mubr.f32.mxu0 0.0
    %165 = vmatmul.mubr.f32.gmra.mxu0 %v85
    %v166 = vpop.f32.mrf.mxu0
    %v167 = vadd.f32 %v70, %v166
    %v168 = vpop.f32.mrf.mxu0
    %169 = vmatprep.mubr.f32.mxu0 0.0
    %170 = vmatmul.mubr.f32.gmra.mxu0 %v88
    %v171 = vpop.f32.mrf.mxu0
    %v172 = vadd.f32 %v75, %v171
    %v173 = vpop.f32.mrf.mxu0
    %174 = vdwg.mxu0
    %v175 = vmax.f32 %v157, 0.0
    %v176 = vmax.f32 %v162, 0.0
    %v177 = vmax.f32 %v167, 0.0
    %v178 = vmax.f32 %v172, 0.0
    %v179 = vld [vmem:[#allocation2 + $0x20] sm:$0xff]
    %v180 = vld [vmem:[#allocation2 + $0x28] sm:$0xff]
    %v181 = vld [vmem:[#allocation2 + $0x30] sm:$0xff]
    %v182 = vld [vmem:[#allocation2 + $0x38] sm:$0xff]
    %v183 = vld [vmem:[#allocation4 + $0x20] sm:$0xff]
    %v184 = vld [vmem:[#allocation4 + $0x28] sm:$0xff]
    %v185 = vld [vmem:[#allocation4 + $0x30] sm:$0xff]
    %v186 = vld [vmem:[#allocation4 + $0x38] sm:$0xff]
    %188 = vset.pattern.permute.xlu0 0
    %189 = vperm.xlu0 %188, %v183
    %v190 = vpop.permute.xlu0 %189
    %193 = vset.pattern.permute.xlu0 0
    %194 = vperm.xlu0 %193, %v184
    %v195 = vpop.permute.xlu0 %194
    %198 = vset.pattern.permute.xlu0 0
    %199 = vperm.xlu0 %198, %v185
    %v200 = vpop.permute.xlu0 %199
    %203 = vset.pattern.permute.xlu0 0
    %204 = vperm.xlu0 %203, %v186
    %v205 = vpop.permute.xlu0 %204
    %vm207 = vcmask 261120
    %v209 = vsel %vm207, %v179, 0
    %v212 = vsel %vm207, %v180, 0
    %v215 = vsel %vm207, %v181, 0
    %v218 = vsel %vm207, %v182, 0
    %220 = vmatprep.subr.mxu0 0.0
    %221 = vmatpush1.msra.mxu0 0.0
    %222 = vmatprep.subr.mxu0 0.0
    %223 = vmatpush1.msra.mxu0 0.0
    %224 = vmatprep.subr.mxu0 0.0
    %225 = vmatpush1.msra.mxu0 0.0
    %226 = vmatprep.subr.mxu0 0.0
    %227 = vmatpush1.msra.mxu0 0.0
    %228 = vmatprep.subr.mxu0 0.0
    %229 = vmatpush1.msra.mxu0 0.0
    %230 = vmatprep.subr.mxu0 0.0
    %231 = vmatpush1.msra.mxu0 0.0
    %232 = vmatprep.subr.mxu0 0.0
    %233 = vmatpush1.msra.mxu0 0.0
    %234 = vmatprep.subr.mxu0 0.0
    %235 = vmatpush1.msra.mxu0 0.0
    %236 = vmatprep.subr.mxu0 0.0
    %237 = vmatpush1.msra.mxu0 0.0
    %238 = vmatprep.subr.mxu0 0.0
    %239 = vmatpush1.msra.mxu0 0.0
    %240 = vmatprep.subr.mxu0 0.0
    %241 = vmatpush1.msra.mxu0 0.0
    %242 = vmatprep.subr.mxu0 0.0
    %243 = vmatpush1.msra.mxu0 0.0
    %244 = vmatprep.subr.mxu0 0.0
    %245 = vmatpush1.msra.mxu0 %v178
    %246 = vmatprep.subr.mxu0 0.0
    %247 = vmatpush1.msra.mxu0 %v177
    %248 = vmatprep.subr.mxu0 0.0
    %249 = vmatpush1.msra.mxu0 %v176
    %250 = vmatprep.subr.mxu0 0.0
    %251 = vmatpush1.msra.mxu0 %v175
    %252 = vmatprep.subr.mxu0 0.0
    %253 = vmatpush2.msra.mxu0 0.0
    %254 = vmatprep.subr.mxu0 0.0
    %255 = vmatpush2.msra.mxu0 0.0
    %256 = vmatprep.subr.mxu0 0.0
    %257 = vmatpush2.msra.mxu0 0.0
    %258 = vmatprep.subr.mxu0 0.0
    %259 = vmatpush2.msra.mxu0 0.0
    %260 = vmatprep.subr.mxu0 0.0
    %261 = vmatpush2.msra.mxu0 0.0
    %262 = vmatprep.subr.mxu0 0.0
    %263 = vmatpush2.msra.mxu0 0.0
    %264 = vmatprep.subr.mxu0 0.0
    %265 = vmatpush2.msra.mxu0 0.0
    %266 = vmatprep.subr.mxu0 0.0
    %267 = vmatpush2.msra.mxu0 0.0
    %268 = vmatprep.subr.mxu0 0.0
    %269 = vmatpush2.msra.mxu0 0.0
    %270 = vmatprep.subr.mxu0 0.0
    %271 = vmatpush2.msra.mxu0 0.0
    %272 = vmatprep.subr.mxu0 0.0
    %273 = vmatpush2.msra.mxu0 0.0
    %274 = vmatprep.subr.mxu0 0.0
    %275 = vmatpush2.msra.mxu0 0.0
    %276 = vmatprep.subr.mxu0 0.0
    %277 = vmatpush2.msra.mxu0 0.0
    %278 = vmatprep.subr.mxu0 0.0
    %279 = vmatpush2.msra.mxu0 0.0
    %280 = vmatprep.subr.mxu0 0.0
    %281 = vmatpush2.msra.mxu0 0.0
    %282 = vmatprep.subr.mxu0 0.0
    %283 = vmatpush2.msra.mxu0 0.0
    %284 = vmatprep.mubr.f32.mxu0 0.0
    %285 = vmatmul.mubr.f32.gmra.mxu0 %v209
    %v286 = vpop.f32.mrf.mxu0
    %v287 = vadd.f32 %v190, %v286
    %v288 = vpop.f32.mrf.mxu0
    %289 = vmatprep.mubr.f32.mxu0 0.0
    %290 = vmatmul.mubr.f32.gmra.mxu0 %v212
    %v291 = vpop.f32.mrf.mxu0
    %v292 = vadd.f32 %v195, %v291
    %v293 = vpop.f32.mrf.mxu0
    %294 = vmatprep.mubr.f32.mxu0 0.0
    %295 = vmatmul.mubr.f32.gmra.mxu0 %v215
    %v296 = vpop.f32.mrf.mxu0
    %v297 = vadd.f32 %v200, %v296
    %v298 = vpop.f32.mrf.mxu0
    %299 = vmatprep.mubr.f32.mxu0 0.0
    %300 = vmatmul.mubr.f32.gmra.mxu0 %v218
    %v301 = vpop.f32.mrf.mxu0
    %v302 = vadd.f32 %v205, %v301
    %v303 = vpop.f32.mrf.mxu0
    %304 = vdwg.mxu0
    %v305 = vmax.f32 %v287, 0.0
    %v306 = vmax.f32 %v292, 0.0
    %v307 = vmax.f32 %v297, 0.0
    %v308 = vmax.f32 %v302, 0.0
    %v309 = vld [vmem:[#allocation2 + $0x40] sm:$0xff]
    %v310 = vld [vmem:[#allocation4 + $0x40] sm:$0xff]
    %312 = vset.pattern.permute.xlu0 0
    %313 = vperm.xlu0 %312, %v310
    %v314 = vpop.permute.xlu0 %313
    %v317 = vsel %vm207, %v309, 0
    %319 = vmatprep.subr.mxu0 0.0
    %320 = vmatpush1.msra.mxu0 0.0
    %321 = vmatprep.subr.mxu0 0.0
    %322 = vmatpush1.msra.mxu0 0.0
    %323 = vmatprep.subr.mxu0 0.0
    %324 = vmatpush1.msra.mxu0 0.0
    %325 = vmatprep.subr.mxu0 0.0
    %326 = vmatpush1.msra.mxu0 0.0
    %327 = vmatprep.subr.mxu0 0.0
    %328 = vmatpush1.msra.mxu0 0.0
    %329 = vmatprep.subr.mxu0 0.0
    %330 = vmatpush1.msra.mxu0 0.0
    %331 = vmatprep.subr.mxu0 0.0
    %332 = vmatpush1.msra.mxu0 0.0
    %333 = vmatprep.subr.mxu0 0.0
    %334 = vmatpush1.msra.mxu0 0.0
    %335 = vmatprep.subr.mxu0 0.0
    %336 = vmatpush1.msra.mxu0 0.0
    %337 = vmatprep.subr.mxu0 0.0
    %338 = vmatpush1.msra.mxu0 0.0
    %339 = vmatprep.subr.mxu0 0.0
    %340 = vmatpush1.msra.mxu0 0.0
    %341 = vmatprep.subr.mxu0 0.0
    %342 = vmatpush1.msra.mxu0 0.0
    %343 = vmatprep.subr.mxu0 0.0
    %344 = vmatpush1.msra.mxu0 %v308
    %345 = vmatprep.subr.mxu0 0.0
    %346 = vmatpush1.msra.mxu0 %v307
    %347 = vmatprep.subr.mxu0 0.0
    %348 = vmatpush1.msra.mxu0 %v306
    %349 = vmatprep.subr.mxu0 0.0
    %350 = vmatpush1.msra.mxu0 %v305
    %351 = vmatprep.subr.mxu0 0.0
    %352 = vmatpush2.msra.mxu0 0.0
    %353 = vmatprep.subr.mxu0 0.0
    %354 = vmatpush2.msra.mxu0 0.0
    %355 = vmatprep.subr.mxu0 0.0
    %356 = vmatpush2.msra.mxu0 0.0
    %357 = vmatprep.subr.mxu0 0.0
    %358 = vmatpush2.msra.mxu0 0.0
    %359 = vmatprep.subr.mxu0 0.0
    %360 = vmatpush2.msra.mxu0 0.0
    %361 = vmatprep.subr.mxu0 0.0
    %362 = vmatpush2.msra.mxu0 0.0
    %363 = vmatprep.subr.mxu0 0.0
    %364 = vmatpush2.msra.mxu0 0.0
    %365 = vmatprep.subr.mxu0 0.0
    %366 = vmatpush2.msra.mxu0 0.0
    %367 = vmatprep.subr.mxu0 0.0
    %368 = vmatpush2.msra.mxu0 0.0
    %369 = vmatprep.subr.mxu0 0.0
    %370 = vmatpush2.msra.mxu0 0.0
    %371 = vmatprep.subr.mxu0 0.0
    %372 = vmatpush2.msra.mxu0 0.0
    %373 = vmatprep.subr.mxu0 0.0
    %374 = vmatpush2.msra.mxu0 0.0
    %375 = vmatprep.subr.mxu0 0.0
    %376 = vmatpush2.msra.mxu0 0.0
    %377 = vmatprep.subr.mxu0 0.0
    %378 = vmatpush2.msra.mxu0 0.0
    %379 = vmatprep.subr.mxu0 0.0
    %380 = vmatpush2.msra.mxu0 0.0
    %381 = vmatprep.subr.mxu0 0.0
    %382 = vmatpush2.msra.mxu0 0.0
    %383 = vmatprep.mubr.f32.mxu0 0.0
    %384 = vmatmul.mubr.f32.gmra.mxu0 %v317
    %v385 = vpop.f32.mrf.mxu0
    %v386 = vadd.f32 %v314, %v385
    %v387 = vpop.f32.mrf.mxu0
    %388 = vdwg.mxu0
    %v389 = vld [vmem:[%s0] sm:$0xff]
    %v390 = vld [vmem:[#allocation2 + $0x48] sm:$0xff]
    %v391 = vld [vmem:[#allocation2 + $0x50] sm:$0xff]
    %v392 = vld [vmem:[#allocation2 + $0x58] sm:$0xff]
    %v393 = vld [vmem:[#allocation2 + $0x60] sm:$0xff]
    %v394 = vld [vmem:[#allocation2 + $0x68] sm:$0xff]
    %v395 = vld [vmem:[#allocation2 + $0x70] sm:$0xff]
    %v396 = vld [vmem:[#allocation2 + $0x78] sm:$0xff]
    %v397 = vld [vmem:[#allocation2 + $0x80] sm:$0xff]
    %v398 = vld [vmem:[#allocation4 + $0x68] sm:$0xff]
    %v399 = vld [vmem:[#allocation4 + $0x70] sm:$0xff]
    %v400 = vld [vmem:[#allocation4 + $0x78] sm:$0xff]
    %v401 = vld [vmem:[#allocation4 + $0x80] sm:$0xff]
    %403 = vset.pattern.permute.xlu0 0
    %404 = vperm.xlu0 %403, %v398
    %v405 = vpop.permute.xlu0 %404
    %408 = vset.pattern.permute.xlu0 0
    %409 = vperm.xlu0 %408, %v399
    %v410 = vpop.permute.xlu0 %409
    %413 = vset.pattern.permute.xlu0 0
    %414 = vperm.xlu0 %413, %v400
    %v415 = vpop.permute.xlu0 %414
    %418 = vset.pattern.permute.xlu0 0
    %419 = vperm.xlu0 %418, %v401
    %v420 = vpop.permute.xlu0 %419
    %vm422 = vcmask 64512
    %v424 = vsel %vm422, %v394, 0
    %v427 = vsel %vm422, %v395, 0
    %v430 = vsel %vm422, %v396, 0
    %v433 = vsel %vm422, %v397, 0
    %435 = vmatprep.subr.mxu0 0.0
    %436 = vmatpush1.msra.mxu0 0.0
    %437 = vmatprep.subr.mxu0 0.0
    %438 = vmatpush1.msra.mxu0 0.0
    %439 = vmatprep.subr.mxu0 0.0
    %440 = vmatpush1.msra.mxu0 0.0
    %441 = vmatprep.subr.mxu0 0.0
    %442 = vmatpush1.msra.mxu0 0.0
    %443 = vmatprep.subr.mxu0 0.0
    %444 = vmatpush1.msra.mxu0 0.0
    %445 = vmatprep.subr.mxu0 0.0
    %446 = vmatpush1.msra.mxu0 0.0
    %447 = vmatprep.subr.mxu0 0.0
    %448 = vmatpush1.msra.mxu0 0.0
    %449 = vmatprep.subr.mxu0 0.0
    %450 = vmatpush1.msra.mxu0 0.0
    %451 = vmatprep.subr.mxu0 0.0
    %452 = vmatpush1.msra.mxu0 0.0
    %453 = vmatprep.subr.mxu0 0.0
    %454 = vmatpush1.msra.mxu0 0.0
    %455 = vmatprep.subr.mxu0 0.0
    %456 = vmatpush1.msra.mxu0 0.0
    %457 = vmatprep.subr.mxu0 0.0
    %458 = vmatpush1.msra.mxu0 0.0
    %459 = vmatprep.subr.mxu0 0.0
    %460 = vmatpush1.msra.mxu0 0.0
    %461 = vmatprep.subr.mxu0 0.0
    %462 = vmatpush1.msra.mxu0 0.0
    %463 = vmatprep.subr.mxu0 0.0
    %464 = vmatpush1.msra.mxu0 0.0
    %465 = vmatprep.subr.mxu0 0.0
    %466 = vmatpush1.msra.mxu0 %v386
    %467 = vmatprep.subr.mxu0 0.0
    %468 = vmatpush2.msra.mxu0 0.0
    %469 = vmatprep.subr.mxu0 0.0
    %470 = vmatpush2.msra.mxu0 0.0
    %471 = vmatprep.subr.mxu0 0.0
    %472 = vmatpush2.msra.mxu0 0.0
    %473 = vmatprep.subr.mxu0 0.0
    %474 = vmatpush2.msra.mxu0 0.0
    %475 = vmatprep.subr.mxu0 0.0
    %476 = vmatpush2.msra.mxu0 0.0
    %477 = vmatprep.subr.mxu0 0.0
    %478 = vmatpush2.msra.mxu0 0.0
    %479 = vmatprep.subr.mxu0 0.0
    %480 = vmatpush2.msra.mxu0 0.0
    %481 = vmatprep.subr.mxu0 0.0
    %482 = vmatpush2.msra.mxu0 0.0
    %483 = vmatprep.subr.mxu0 0.0
    %484 = vmatpush2.msra.mxu0 0.0
    %485 = vmatprep.subr.mxu0 0.0
    %486 = vmatpush2.msra.mxu0 0.0
    %487 = vmatprep.subr.mxu0 0.0
    %488 = vmatpush2.msra.mxu0 0.0
    %489 = vmatprep.subr.mxu0 0.0
    %490 = vmatpush2.msra.mxu0 0.0
    %491 = vmatprep.subr.mxu0 0.0
    %492 = vmatpush2.msra.mxu0 0.0
    %493 = vmatprep.subr.mxu0 0.0
    %494 = vmatpush2.msra.mxu0 0.0
    %495 = vmatprep.subr.mxu0 0.0
    %496 = vmatpush2.msra.mxu0 0.0
    %497 = vmatprep.subr.mxu0 0.0
    %498 = vmatpush2.msra.mxu0 0.0
    %499 = vmatprep.mubr.f32.mxu0 0.0
    %500 = vmatmul.mubr.f32.gmra.mxu0 %v424
    %v501 = vpop.f32.mrf.mxu0
    %v502 = vadd.f32 %v405, %v501
    %v503 = vpop.f32.mrf.mxu0
    %504 = vmatprep.mubr.f32.mxu0 0.0
    %505 = vmatmul.mubr.f32.gmra.mxu0 %v427
    %v506 = vpop.f32.mrf.mxu0
    %v507 = vadd.f32 %v410, %v506
    %v508 = vpop.f32.mrf.mxu0
    %509 = vmatprep.mubr.f32.mxu0 0.0
    %510 = vmatmul.mubr.f32.gmra.mxu0 %v430
    %v511 = vpop.f32.mrf.mxu0
    %v512 = vadd.f32 %v415, %v511
    %v513 = vpop.f32.mrf.mxu0
    %514 = vmatprep.mubr.f32.mxu0 0.0
    %515 = vmatmul.mubr.f32.gmra.mxu0 %v433
    %v516 = vpop.f32.mrf.mxu0
    %v517 = vadd.f32 %v420, %v516
    %v518 = vpop.f32.mrf.mxu0
    %519 = vdwg.mxu0
    %v521 = vrot.slane %v389, 4
    %vm522 = vcmask 31744
    %v524 = vsel %vm522, %v390, 0
    %v527 = vsel %vm522, %v391, 0
    %v530 = vsel %vm522, %v392, 0
    %v533 = vsel %vm522, %v393, 0
    %vm535 = vcmask 1043456
    %v536 = vsel %vm535, %v521, 0
    %538 = vmatprep.subr.mxu0 0.0
    %539 = vmatpush1.msra.mxu0 0.0
    %540 = vmatprep.subr.mxu0 0.0
    %541 = vmatpush1.msra.mxu0 0.0
    %542 = vmatprep.subr.mxu0 0.0
    %543 = vmatpush1.msra.mxu0 0.0
    %544 = vmatprep.subr.mxu0 0.0
    %545 = vmatpush1.msra.mxu0 0.0
    %546 = vmatprep.subr.mxu0 0.0
    %547 = vmatpush1.msra.mxu0 0.0
    %548 = vmatprep.subr.mxu0 0.0
    %549 = vmatpush1.msra.mxu0 0.0
    %550 = vmatprep.subr.mxu0 0.0
    %551 = vmatpush1.msra.mxu0 0.0
    %552 = vmatprep.subr.mxu0 0.0
    %553 = vmatpush1.msra.mxu0 0.0
    %554 = vmatprep.subr.mxu0 0.0
    %555 = vmatpush1.msra.mxu0 0.0
    %556 = vmatprep.subr.mxu0 0.0
    %557 = vmatpush1.msra.mxu0 0.0
    %558 = vmatprep.subr.mxu0 0.0
    %559 = vmatpush1.msra.mxu0 0.0
    %560 = vmatprep.subr.mxu0 0.0
    %561 = vmatpush1.msra.mxu0 0.0
    %562 = vmatprep.subr.mxu0 0.0
    %563 = vmatpush1.msra.mxu0 0.0
    %564 = vmatprep.subr.mxu0 0.0
    %565 = vmatpush1.msra.mxu0 0.0
    %566 = vmatprep.subr.mxu0 0.0
    %567 = vmatpush1.msra.mxu0 0.0
    %568 = vmatprep.subr.mxu0 0.0
    %569 = vmatpush1.msra.mxu0 %v536
    %570 = vmatprep.subr.mxu0 0.0
    %571 = vmatpush2.msra.mxu0 0.0
    %572 = vmatprep.subr.mxu0 0.0
    %573 = vmatpush2.msra.mxu0 0.0
    %574 = vmatprep.subr.mxu0 0.0
    %575 = vmatpush2.msra.mxu0 0.0
    %576 = vmatprep.subr.mxu0 0.0
    %577 = vmatpush2.msra.mxu0 0.0
    %578 = vmatprep.subr.mxu0 0.0
    %579 = vmatpush2.msra.mxu0 0.0
    %580 = vmatprep.subr.mxu0 0.0
    %581 = vmatpush2.msra.mxu0 0.0
    %582 = vmatprep.subr.mxu0 0.0
    %583 = vmatpush2.msra.mxu0 0.0
    %584 = vmatprep.subr.mxu0 0.0
    %585 = vmatpush2.msra.mxu0 0.0
    %586 = vmatprep.subr.mxu0 0.0
    %587 = vmatpush2.msra.mxu0 0.0
    %588 = vmatprep.subr.mxu0 0.0
    %589 = vmatpush2.msra.mxu0 0.0
    %590 = vmatprep.subr.mxu0 0.0
    %591 = vmatpush2.msra.mxu0 0.0
    %592 = vmatprep.subr.mxu0 0.0
    %593 = vmatpush2.msra.mxu0 0.0
    %594 = vmatprep.subr.mxu0 0.0
    %595 = vmatpush2.msra.mxu0 0.0
    %596 = vmatprep.subr.mxu0 0.0
    %597 = vmatpush2.msra.mxu0 0.0
    %598 = vmatprep.subr.mxu0 0.0
    %599 = vmatpush2.msra.mxu0 0.0
    %600 = vmatprep.subr.mxu0 0.0
    %601 = vmatpush2.msra.mxu0 0.0
    %602 = vmatprep.mubr.f32.mxu0 0.0
    %603 = vmatmul.mubr.f32.gmra.mxu0 %v524
    %v604 = vpop.f32.mrf.mxu0
    %v605 = vadd.f32 %v502, %v604
    %v606 = vpop.f32.mrf.mxu0
    %607 = vmatprep.mubr.f32.mxu0 0.0
    %608 = vmatmul.mubr.f32.gmra.mxu0 %v527
    %v609 = vpop.f32.mrf.mxu0
    %v610 = vadd.f32 %v507, %v609
    %v611 = vpop.f32.mrf.mxu0
    %612 = vmatprep.mubr.f32.mxu0 0.0
    %613 = vmatmul.mubr.f32.gmra.mxu0 %v530
    %v614 = vpop.f32.mrf.mxu0
    %v615 = vadd.f32 %v512, %v614
    %v616 = vpop.f32.mrf.mxu0
    %617 = vmatprep.mubr.f32.mxu0 0.0
    %618 = vmatmul.mubr.f32.gmra.mxu0 %v533
    %v619 = vpop.f32.mrf.mxu0
    %v620 = vadd.f32 %v517, %v619
    %v621 = vpop.f32.mrf.mxu0
    %622 = vdwg.mxu0
    %v623 = vmax.f32 %v605, 0.0
    %v624 = vmax.f32 %v610, 0.0
    %v625 = vmax.f32 %v615, 0.0
    %v626 = vmax.f32 %v620, 0.0
    %v627 = vld [vmem:[#allocation2 + $0x88] sm:$0xff]
    %v628 = vld [vmem:[#allocation2 + $0x90] sm:$0xff]
    %v629 = vld [vmem:[#allocation2 + $0x98] sm:$0xff]
    %v630 = vld [vmem:[#allocation2 + $0xa0] sm:$0xff]
    %v631 = vld [vmem:[#allocation4 + $0x88] sm:$0xff]
    %v632 = vld [vmem:[#allocation4 + $0x90] sm:$0xff]
    %v633 = vld [vmem:[#allocation4 + $0x98] sm:$0xff]
    %v634 = vld [vmem:[#allocation4 + $0xa0] sm:$0xff]
    %636 = vset.pattern.permute.xlu0 0
    %637 = vperm.xlu0 %636, %v631
    %v638 = vpop.permute.xlu0 %637
    %641 = vset.pattern.permute.xlu0 0
    %642 = vperm.xlu0 %641, %v632
    %v643 = vpop.permute.xlu0 %642
    %646 = vset.pattern.permute.xlu0 0
    %647 = vperm.xlu0 %646, %v633
    %v648 = vpop.permute.xlu0 %647
    %651 = vset.pattern.permute.xlu0 0
    %652 = vperm.xlu0 %651, %v634
    %v653 = vpop.permute.xlu0 %652
    %v656 = vsel %vm207, %v627, 0
    %v659 = vsel %vm207, %v628, 0
    %v662 = vsel %vm207, %v629, 0
    %v665 = vsel %vm207, %v630, 0
    %667 = vmatprep.subr.mxu0 0.0
    %668 = vmatpush1.msra.mxu0 0.0
    %669 = vmatprep.subr.mxu0 0.0
    %670 = vmatpush1.msra.mxu0 0.0
    %671 = vmatprep.subr.mxu0 0.0
    %672 = vmatpush1.msra.mxu0 0.0
    %673 = vmatprep.subr.mxu0 0.0
    %674 = vmatpush1.msra.mxu0 0.0
    %675 = vmatprep.subr.mxu0 0.0
    %676 = vmatpush1.msra.mxu0 0.0
    %677 = vmatprep.subr.mxu0 0.0
    %678 = vmatpush1.msra.mxu0 0.0
    %679 = vmatprep.subr.mxu0 0.0
    %680 = vmatpush1.msra.mxu0 0.0
    %681 = vmatprep.subr.mxu0 0.0
    %682 = vmatpush1.msra.mxu0 0.0
    %683 = vmatprep.subr.mxu0 0.0
    %684 = vmatpush1.msra.mxu0 0.0
    %685 = vmatprep.subr.mxu0 0.0
    %686 = vmatpush1.msra.mxu0 0.0
    %687 = vmatprep.subr.mxu0 0.0
    %688 = vmatpush1.msra.mxu0 0.0
    %689 = vmatprep.subr.mxu0 0.0
    %690 = vmatpush1.msra.mxu0 0.0
    %691 = vmatprep.subr.mxu0 0.0
    %692 = vmatpush1.msra.mxu0 %v626
    %693 = vmatprep.subr.mxu0 0.0
    %694 = vmatpush1.msra.mxu0 %v625
    %695 = vmatprep.subr.mxu0 0.0
    %696 = vmatpush1.msra.mxu0 %v624
    %697 = vmatprep.subr.mxu0 0.0
    %698 = vmatpush1.msra.mxu0 %v623
    %699 = vmatprep.subr.mxu0 0.0
    %700 = vmatpush2.msra.mxu0 0.0
    %701 = vmatprep.subr.mxu0 0.0
    %702 = vmatpush2.msra.mxu0 0.0
    %703 = vmatprep.subr.mxu0 0.0
    %704 = vmatpush2.msra.mxu0 0.0
    %705 = vmatprep.subr.mxu0 0.0
    %706 = vmatpush2.msra.mxu0 0.0
    %707 = vmatprep.subr.mxu0 0.0
    %708 = vmatpush2.msra.mxu0 0.0
    %709 = vmatprep.subr.mxu0 0.0
    %710 = vmatpush2.msra.mxu0 0.0
    %711 = vmatprep.subr.mxu0 0.0
    %712 = vmatpush2.msra.mxu0 0.0
    %713 = vmatprep.subr.mxu0 0.0
    %714 = vmatpush2.msra.mxu0 0.0
    %715 = vmatprep.subr.mxu0 0.0
    %716 = vmatpush2.msra.mxu0 0.0
    %717 = vmatprep.subr.mxu0 0.0
    %718 = vmatpush2.msra.mxu0 0.0
    %719 = vmatprep.subr.mxu0 0.0
    %720 = vmatpush2.msra.mxu0 0.0
    %721 = vmatprep.subr.mxu0 0.0
    %722 = vmatpush2.msra.mxu0 0.0
    %723 = vmatprep.subr.mxu0 0.0
    %724 = vmatpush2.msra.mxu0 0.0
    %725 = vmatprep.subr.mxu0 0.0
    %726 = vmatpush2.msra.mxu0 0.0
    %727 = vmatprep.subr.mxu0 0.0
    %728 = vmatpush2.msra.mxu0 0.0
    %729 = vmatprep.subr.mxu0 0.0
    %730 = vmatpush2.msra.mxu0 0.0
    %731 = vmatprep.mubr.f32.mxu0 0.0
    %732 = vmatmul.mubr.f32.gmra.mxu0 %v656
    %v733 = vpop.f32.mrf.mxu0
    %v734 = vadd.f32 %v638, %v733
    %v735 = vpop.f32.mrf.mxu0
    %736 = vmatprep.mubr.f32.mxu0 0.0
    %737 = vmatmul.mubr.f32.gmra.mxu0 %v659
    %v738 = vpop.f32.mrf.mxu0
    %v739 = vadd.f32 %v643, %v738
    %v740 = vpop.f32.mrf.mxu0
    %741 = vmatprep.mubr.f32.mxu0 0.0
    %742 = vmatmul.mubr.f32.gmra.mxu0 %v662
    %v743 = vpop.f32.mrf.mxu0
    %v744 = vadd.f32 %v648, %v743
    %v745 = vpop.f32.mrf.mxu0
    %746 = vmatprep.mubr.f32.mxu0 0.0
    %747 = vmatmul.mubr.f32.gmra.mxu0 %v665
    %v748 = vpop.f32.mrf.mxu0
    %v749 = vadd.f32 %v653, %v748
    %v750 = vpop.f32.mrf.mxu0
    %751 = vdwg.mxu0
    %v752 = vmax.f32 %v734, 0.0
    %v753 = vmax.f32 %v739, 0.0
    %v754 = vmax.f32 %v744, 0.0
    %v755 = vmax.f32 %v749, 0.0
    %v756 = vld [vmem:[#allocation2 + $0xa8] sm:$0xff]
    %v757 = vld [vmem:[#allocation4 + $0xa8] sm:$0xff]
    %759 = vset.pattern.permute.xlu0 0
    %760 = vperm.xlu0 %759, %v757
    %v761 = vpop.permute.xlu0 %760
    %v764 = vsel %vm207, %v756, 0
    %766 = vmatprep.subr.mxu0 0.0
    %767 = vmatpush1.msra.mxu0 0.0
    %768 = vmatprep.subr.mxu0 0.0
    %769 = vmatpush1.msra.mxu0 0.0
    %770 = vmatprep.subr.mxu0 0.0
    %771 = vmatpush1.msra.mxu0 0.0
    %772 = vmatprep.subr.mxu0 0.0
    %773 = vmatpush1.msra.mxu0 0.0
    %774 = vmatprep.subr.mxu0 0.0
    %775 = vmatpush1.msra.mxu0 0.0
    %776 = vmatprep.subr.mxu0 0.0
    %777 = vmatpush1.msra.mxu0 0.0
    %778 = vmatprep.subr.mxu0 0.0
    %779 = vmatpush1.msra.mxu0 0.0
    %780 = vmatprep.subr.mxu0 0.0
    %781 = vmatpush1.msra.mxu0 0.0
    %782 = vmatprep.subr.mxu0 0.0
    %783 = vmatpush1.msra.mxu0 0.0
    %784 = vmatprep.subr.mxu0 0.0
    %785 = vmatpush1.msra.mxu0 0.0
    %786 = vmatprep.subr.mxu0 0.0
    %787 = vmatpush1.msra.mxu0 0.0
    %788 = vmatprep.subr.mxu0 0.0
    %789 = vmatpush1.msra.mxu0 0.0
    %790 = vmatprep.subr.mxu0 0.0
    %791 = vmatpush1.msra.mxu0 %v755
    %792 = vmatprep.subr.mxu0 0.0
    %793 = vmatpush1.msra.mxu0 %v754
    %794 = vmatprep.subr.mxu0 0.0
    %795 = vmatpush1.msra.mxu0 %v753
    %796 = vmatprep.subr.mxu0 0.0
    %797 = vmatpush1.msra.mxu0 %v752
    %798 = vmatprep.subr.mxu0 0.0
    %799 = vmatpush2.msra.mxu0 0.0
    %800 = vmatprep.subr.mxu0 0.0
    %801 = vmatpush2.msra.mxu0 0.0
    %802 = vmatprep.subr.mxu0 0.0
    %803 = vmatpush2.msra.mxu0 0.0
    %804 = vmatprep.subr.mxu0 0.0
    %805 = vmatpush2.msra.mxu0 0.0
    %806 = vmatprep.subr.mxu0 0.0
    %807 = vmatpush2.msra.mxu0 0.0
    %808 = vmatprep.subr.mxu0 0.0
    %809 = vmatpush2.msra.mxu0 0.0
    %810 = vmatprep.subr.mxu0 0.0
    %811 = vmatpush2.msra.mxu0 0.0
    %812 = vmatprep.subr.mxu0 0.0
    %813 = vmatpush2.msra.mxu0 0.0
    %814 = vmatprep.subr.mxu0 0.0
    %815 = vmatpush2.msra.mxu0 0.0
    %816 = vmatprep.subr.mxu0 0.0
    %817 = vmatpush2.msra.mxu0 0.0
    %818 = vmatprep.subr.mxu0 0.0
    %819 = vmatpush2.msra.mxu0 0.0
    %820 = vmatprep.subr.mxu0 0.0
    %821 = vmatpush2.msra.mxu0 0.0
    %822 = vmatprep.subr.mxu0 0.0
    %823 = vmatpush2.msra.mxu0 0.0
    %824 = vmatprep.subr.mxu0 0.0
    %825 = vmatpush2.msra.mxu0 0.0
    %826 = vmatprep.subr.mxu0 0.0
    %827 = vmatpush2.msra.mxu0 0.0
    %828 = vmatprep.subr.mxu0 0.0
    %829 = vmatpush2.msra.mxu0 0.0
    %830 = vmatprep.mubr.f32.mxu0 0.0
    %831 = vmatmul.mubr.f32.gmra.mxu0 %v764
    %v832 = vpop.f32.mrf.mxu0
    %v833 = vadd.f32 %v761, %v832
    %v834 = vpop.f32.mrf.mxu0
    %835 = vdwg.mxu0
    %vm836 = vcmp.lt.f32.partialorder %v833, 0.0
    %v837 = vsel %vm836, -1.0, 1.0
    %v838 = vand.u32 2147483647, %v833
    %vm839 = vcmp.gt.f32.partialorder %v838, 2.4142137
    %vm840 = vcmp.gt.f32.partialorder %v838, 0.41421357
    %vm841 = vmxor %vm839, 1
    %vm842 = vmand %vm840, %vm841
    %v843 = vsub.f32 %v838, 1.0
    %v844 = vsel %vm842, %v843, %v838
    %v845 = vsel %vm839, -1.0, %v844
    %v846 = vadd.f32 %v838, 1e-30
    %v847 = vadd.f32 %v838, 1.0
    %v848 = vsel %vm842, %v847, 1.0
    %v849 = vsel %vm839, %v846, %v848
    %v850 = vrcp.pop %v849
    %v851 = vmul.f32 %v845, %v850
    %v852 = vsel %vm842, 0.7853982, 0.0
    %v853 = vsel %vm839, 1.5707964, %v852
    %v854 = vmul.f32 %v851, %v851
    %v855 = vmul.f32 %v854, 0.080537446
    %v856 = vsub.f32 %v855, 0.13877685
    %v857 = vmul.f32 %v856, %v854
    %v858 = vadd.f32 %v857, 0.19977711
    %v859 = vmul.f32 %v858, %v854
    %v860 = vsub.f32 %v859, 0.3333295
    %v861 = vmul.f32 %v860, %v854
    %v862 = vmul.f32 %v861, %v851
    %v863 = vadd.f32 %v853, %v862
    %v864 = vadd.f32 %v863, %v851
    %v865 = vmul.f32 %v837, %v864
    %v866 = vmul.f32 %v865, 1.272
    %v867 = vmul.f32 %v866, 1.442695
    %v868 = vpow.pop %v867
    %v869 = vmul.f32 %v868, %v389
    %v871 = vrot.slane %v833, 4
    %v873 = vadd.f32 %v869, %v871
    %v874 = vsel %vm535, %v866, 0.0
    %v875 = vrot.slane %v874, 4
    %v876 = vadd.f32 %v874, %v875
    %v877 = vrot.slane %v876, 2
    %v878 = vadd.f32 %v876, %v877
    %v879 = vrot.slane %v878, 1
    %v880 = vadd.f32 %v878, %v879
    %v881 = vadd.f32 %v880, 0.0
    %v882 = vld [vmem:[#allocation2 + $0xb0] sm:$0xff]
    %v883 = vld [vmem:[#allocation2 + $0xb8] sm:$0xff]
    %v884 = vld [vmem:[#allocation2 + $0xc0] sm:$0xff]
    %v885 = vld [vmem:[#allocation2 + $0xc8] sm:$0xff]
    %v886 = vld [vmem:[#allocation2 + $0xd0] sm:$0xff]
    %v887 = vld [vmem:[#allocation2 + $0xd8] sm:$0xff]
    %v888 = vld [vmem:[#allocation2 + $0xe0] sm:$0xff]
    %v889 = vld [vmem:[#allocation2 + $0xe8] sm:$0xff]
    %v890 = vld [vmem:[#allocation4 + $0xd0] sm:$0xff]
    %v891 = vld [vmem:[#allocation4 + $0xd8] sm:$0xff]
    %v892 = vld [vmem:[#allocation4 + $0xe0] sm:$0xff]
    %v893 = vld [vmem:[#allocation4 + $0xe8] sm:$0xff]
    %895 = vset.pattern.permute.xlu0 0
    %896 = vperm.xlu0 %895, %v890
    %v897 = vpop.permute.xlu0 %896
    %900 = vset.pattern.permute.xlu0 0
    %901 = vperm.xlu0 %900, %v891
    %v902 = vpop.permute.xlu0 %901
    %905 = vset.pattern.permute.xlu0 0
    %906 = vperm.xlu0 %905, %v892
    %v907 = vpop.permute.xlu0 %906
    %910 = vset.pattern.permute.xlu0 0
    %911 = vperm.xlu0 %910, %v893
    %v912 = vpop.permute.xlu0 %911
    %v915 = vsel %vm422, %v886, 0
    %v918 = vsel %vm422, %v887, 0
    %v921 = vsel %vm422, %v888, 0
    %v924 = vsel %vm422, %v889, 0
    %926 = vmatprep.subr.mxu0 0.0
    %927 = vmatpush1.msra.mxu0 0.0
    %928 = vmatprep.subr.mxu0 0.0
    %929 = vmatpush1.msra.mxu0 0.0
    %930 = vmatprep.subr.mxu0 0.0
    %931 = vmatpush1.msra.mxu0 0.0
    %932 = vmatprep.subr.mxu0 0.0
    %933 = vmatpush1.msra.mxu0 0.0
    %934 = vmatprep.subr.mxu0 0.0
    %935 = vmatpush1.msra.mxu0 0.0
    %936 = vmatprep.subr.mxu0 0.0
    %937 = vmatpush1.msra.mxu0 0.0
    %938 = vmatprep.subr.mxu0 0.0
    %939 = vmatpush1.msra.mxu0 0.0
    %940 = vmatprep.subr.mxu0 0.0
    %941 = vmatpush1.msra.mxu0 0.0
    %942 = vmatprep.subr.mxu0 0.0
    %943 = vmatpush1.msra.mxu0 0.0
    %944 = vmatprep.subr.mxu0 0.0
    %945 = vmatpush1.msra.mxu0 0.0
    %946 = vmatprep.subr.mxu0 0.0
    %947 = vmatpush1.msra.mxu0 0.0
    %948 = vmatprep.subr.mxu0 0.0
    %949 = vmatpush1.msra.mxu0 0.0
    %950 = vmatprep.subr.mxu0 0.0
    %951 = vmatpush1.msra.mxu0 0.0
    %952 = vmatprep.subr.mxu0 0.0
    %953 = vmatpush1.msra.mxu0 0.0
    %954 = vmatprep.subr.mxu0 0.0
    %955 = vmatpush1.msra.mxu0 0.0
    %956 = vmatprep.subr.mxu0 0.0
    %957 = vmatpush1.msra.mxu0 %v386
    %958 = vmatprep.subr.mxu0 0.0
    %959 = vmatpush2.msra.mxu0 0.0
    %960 = vmatprep.subr.mxu0 0.0
    %961 = vmatpush2.msra.mxu0 0.0
    %962 = vmatprep.subr.mxu0 0.0
    %963 = vmatpush2.msra.mxu0 0.0
    %964 = vmatprep.subr.mxu0 0.0
    %965 = vmatpush2.msra.mxu0 0.0
    %966 = vmatprep.subr.mxu0 0.0
    %967 = vmatpush2.msra.mxu0 0.0
    %968 = vmatprep.subr.mxu0 0.0
    %969 = vmatpush2.msra.mxu0 0.0
    %970 = vmatprep.subr.mxu0 0.0
    %971 = vmatpush2.msra.mxu0 0.0
    %972 = vmatprep.subr.mxu0 0.0
    %973 = vmatpush2.msra.mxu0 0.0
    %974 = vmatprep.subr.mxu0 0.0
    %975 = vmatpush2.msra.mxu0 0.0
    %976 = vmatprep.subr.mxu0 0.0
    %977 = vmatpush2.msra.mxu0 0.0
    %978 = vmatprep.subr.mxu0 0.0
    %979 = vmatpush2.msra.mxu0 0.0
    %980 = vmatprep.subr.mxu0 0.0
    %981 = vmatpush2.msra.mxu0 0.0
    %982 = vmatprep.subr.mxu0 0.0
    %983 = vmatpush2.msra.mxu0 0.0
    %984 = vmatprep.subr.mxu0 0.0
    %985 = vmatpush2.msra.mxu0 0.0
    %986 = vmatprep.subr.mxu0 0.0
    %987 = vmatpush2.msra.mxu0 0.0
    %988 = vmatprep.subr.mxu0 0.0
    %989 = vmatpush2.msra.mxu0 0.0
    %990 = vmatprep.mubr.f32.mxu0 0.0
    %991 = vmatmul.mubr.f32.gmra.mxu0 %v915
    %v992 = vpop.f32.mrf.mxu0
    %v993 = vadd.f32 %v897, %v992
    %v994 = vpop.f32.mrf.mxu0
    %995 = vmatprep.mubr.f32.mxu0 0.0
    %996 = vmatmul.mubr.f32.gmra.mxu0 %v918
    %v997 = vpop.f32.mrf.mxu0
    %v998 = vadd.f32 %v902, %v997
    %v999 = vpop.f32.mrf.mxu0
    %1000 = vmatprep.mubr.f32.mxu0 0.0
    %1001 = vmatmul.mubr.f32.gmra.mxu0 %v921
    %v1002 = vpop.f32.mrf.mxu0
    %v1003 = vadd.f32 %v907, %v1002
    %v1004 = vpop.f32.mrf.mxu0
    %1005 = vmatprep.mubr.f32.mxu0 0.0
    %1006 = vmatmul.mubr.f32.gmra.mxu0 %v924
    %v1007 = vpop.f32.mrf.mxu0
    %v1008 = vadd.f32 %v912, %v1007
    %v1009 = vpop.f32.mrf.mxu0
    %1010 = vdwg.mxu0
    %v1012 = vsel %vm522, %v882, 0
    %v1015 = vsel %vm522, %v883, 0
    %v1018 = vsel %vm522, %v884, 0
    %v1021 = vsel %vm522, %v885, 0
    %v1024 = vsel %vm535, %v873, 0
    %1026 = vmatprep.subr.mxu0 0.0
    %1027 = vmatpush1.msra.mxu0 0.0
    %1028 = vmatprep.subr.mxu0 0.0
    %1029 = vmatpush1.msra.mxu0 0.0
    %1030 = vmatprep.subr.mxu0 0.0
    %1031 = vmatpush1.msra.mxu0 0.0
    %1032 = vmatprep.subr.mxu0 0.0
    %1033 = vmatpush1.msra.mxu0 0.0
    %1034 = vmatprep.subr.mxu0 0.0
    %1035 = vmatpush1.msra.mxu0 0.0
    %1036 = vmatprep.subr.mxu0 0.0
    %1037 = vmatpush1.msra.mxu0 0.0
    %1038 = vmatprep.subr.mxu0 0.0
    %1039 = vmatpush1.msra.mxu0 0.0
    %1040 = vmatprep.subr.mxu0 0.0
    %1041 = vmatpush1.msra.mxu0 0.0
    %1042 = vmatprep.subr.mxu0 0.0
    %1043 = vmatpush1.msra.mxu0 0.0
    %1044 = vmatprep.subr.mxu0 0.0
    %1045 = vmatpush1.msra.mxu0 0.0
    %1046 = vmatprep.subr.mxu0 0.0
    %1047 = vmatpush1.msra.mxu0 0.0
    %1048 = vmatprep.subr.mxu0 0.0
    %1049 = vmatpush1.msra.mxu0 0.0
    %1050 = vmatprep.subr.mxu0 0.0
    %1051 = vmatpush1.msra.mxu0 0.0
    %1052 = vmatprep.subr.mxu0 0.0
    %1053 = vmatpush1.msra.mxu0 0.0
    %1054 = vmatprep.subr.mxu0 0.0
    %1055 = vmatpush1.msra.mxu0 0.0
    %1056 = vmatprep.subr.mxu0 0.0
    %1057 = vmatpush1.msra.mxu0 %v1024
    %1058 = vmatprep.subr.mxu0 0.0
    %1059 = vmatpush2.msra.mxu0 0.0
    %1060 = vmatprep.subr.mxu0 0.0
    %1061 = vmatpush2.msra.mxu0 0.0
    %1062 = vmatprep.subr.mxu0 0.0
    %1063 = vmatpush2.msra.mxu0 0.0
    %1064 = vmatprep.subr.mxu0 0.0
    %1065 = vmatpush2.msra.mxu0 0.0
    %1066 = vmatprep.subr.mxu0 0.0
    %1067 = vmatpush2.msra.mxu0 0.0
    %1068 = vmatprep.subr.mxu0 0.0
    %1069 = vmatpush2.msra.mxu0 0.0
    %1070 = vmatprep.subr.mxu0 0.0
    %1071 = vmatpush2.msra.mxu0 0.0
    %1072 = vmatprep.subr.mxu0 0.0
    %1073 = vmatpush2.msra.mxu0 0.0
    %1074 = vmatprep.subr.mxu0 0.0
    %1075 = vmatpush2.msra.mxu0 0.0
    %1076 = vmatprep.subr.mxu0 0.0
    %1077 = vmatpush2.msra.mxu0 0.0
    %1078 = vmatprep.subr.mxu0 0.0
    %1079 = vmatpush2.msra.mxu0 0.0
    %1080 = vmatprep.subr.mxu0 0.0
    %1081 = vmatpush2.msra.mxu0 0.0
    %1082 = vmatprep.subr.mxu0 0.0
    %1083 = vmatpush2.msra.mxu0 0.0
    %1084 = vmatprep.subr.mxu0 0.0
    %1085 = vmatpush2.msra.mxu0 0.0
    %1086 = vmatprep.subr.mxu0 0.0
    %1087 = vmatpush2.msra.mxu0 0.0
    %1088 = vmatprep.subr.mxu0 0.0
    %1089 = vmatpush2.msra.mxu0 0.0
    %1090 = vmatprep.mubr.f32.mxu0 0.0
    %1091 = vmatmul.mubr.f32.gmra.mxu0 %v1012
    %v1092 = vpop.f32.mrf.mxu0
    %v1093 = vadd.f32 %v993, %v1092
    %v1094 = vpop.f32.mrf.mxu0
    %1095 = vmatprep.mubr.f32.mxu0 0.0
    %1096 = vmatmul.mubr.f32.gmra.mxu0 %v1015
    %v1097 = vpop.f32.mrf.mxu0
    %v1098 = vadd.f32 %v998, %v1097
    %v1099 = vpop.f32.mrf.mxu0
    %1100 = vmatprep.mubr.f32.mxu0 0.0
    %1101 = vmatmul.mubr.f32.gmra.mxu0 %v1018
    %v1102 = vpop.f32.mrf.mxu0
    %v1103 = vadd.f32 %v1003, %v1102
    %v1104 = vpop.f32.mrf.mxu0
    %1105 = vmatprep.mubr.f32.mxu0 0.0
    %1106 = vmatmul.mubr.f32.gmra.mxu0 %v1021
    %v1107 = vpop.f32.mrf.mxu0
    %v1108 = vadd.f32 %v1008, %v1107
    %v1109 = vpop.f32.mrf.mxu0
    %1110 = vdwg.mxu0
    %v1111 = vmax.f32 %v1093, 0.0
    %v1112 = vmax.f32 %v1098, 0.0
    %v1113 = vmax.f32 %v1103, 0.0
    %v1114 = vmax.f32 %v1108, 0.0
    %v1115 = vld [vmem:[#allocation2 + $0xf0] sm:$0xff]
    %v1116 = vld [vmem:[#allocation2 + $0xf8] sm:$0xff]
    %v1117 = vld [vmem:[#allocation2 + $0x100] sm:$0xff]
    %v1118 = vld [vmem:[#allocation2 + $0x108] sm:$0xff]
    %v1119 = vld [vmem:[#allocation4 + $0xf0] sm:$0xff]
    %v1120 = vld [vmem:[#allocation4 + $0xf8] sm:$0xff]
    %v1121 = vld [vmem:[#allocation4 + $0x100] sm:$0xff]
    %v1122 = vld [vmem:[#allocation4 + $0x108] sm:$0xff]
    %1124 = vset.pattern.permute.xlu0 0
    %1125 = vperm.xlu0 %1124, %v1119
    %v1126 = vpop.permute.xlu0 %1125
    %1129 = vset.pattern.permute.xlu0 0
    %1130 = vperm.xlu0 %1129, %v1120
    %v1131 = vpop.permute.xlu0 %1130
    %1134 = vset.pattern.permute.xlu0 0
    %1135 = vperm.xlu0 %1134, %v1121
    %v1136 = vpop.permute.xlu0 %1135
    %1139 = vset.pattern.permute.xlu0 0
    %1140 = vperm.xlu0 %1139, %v1122
    %v1141 = vpop.permute.xlu0 %1140
    %v1144 = vsel %vm207, %v1115, 0
    %v1147 = vsel %vm207, %v1116, 0
    %v1150 = vsel %vm207, %v1117, 0
    %v1153 = vsel %vm207, %v1118, 0
    %1155 = vmatprep.subr.mxu0 0.0
    %1156 = vmatpush1.msra.mxu0 0.0
    %1157 = vmatprep.subr.mxu0 0.0
    %1158 = vmatpush1.msra.mxu0 0.0
    %1159 = vmatprep.subr.mxu0 0.0
    %1160 = vmatpush1.msra.mxu0 0.0
    %1161 = vmatprep.subr.mxu0 0.0
    %1162 = vmatpush1.msra.mxu0 0.0
    %1163 = vmatprep.subr.mxu0 0.0
    %1164 = vmatpush1.msra.mxu0 0.0
    %1165 = vmatprep.subr.mxu0 0.0
    %1166 = vmatpush1.msra.mxu0 0.0
    %1167 = vmatprep.subr.mxu0 0.0
    %1168 = vmatpush1.msra.mxu0 0.0
    %1169 = vmatprep.subr.mxu0 0.0
    %1170 = vmatpush1.msra.mxu0 0.0
    %1171 = vmatprep.subr.mxu0 0.0
    %1172 = vmatpush1.msra.mxu0 0.0
    %1173 = vmatprep.subr.mxu0 0.0
    %1174 = vmatpush1.msra.mxu0 0.0
    %1175 = vmatprep.subr.mxu0 0.0
    %1176 = vmatpush1.msra.mxu0 0.0
    %1177 = vmatprep.subr.mxu0 0.0
    %1178 = vmatpush1.msra.mxu0 0.0
    %1179 = vmatprep.subr.mxu0 0.0
    %1180 = vmatpush1.msra.mxu0 %v1114
    %1181 = vmatprep.subr.mxu0 0.0
    %1182 = vmatpush1.msra.mxu0 %v1113
    %1183 = vmatprep.subr.mxu0 0.0
    %1184 = vmatpush1.msra.mxu0 %v1112
    %1185 = vmatprep.subr.mxu0 0.0
    %1186 = vmatpush1.msra.mxu0 %v1111
    %1187 = vmatprep.subr.mxu0 0.0
    %1188 = vmatpush2.msra.mxu0 0.0
    %1189 = vmatprep.subr.mxu0 0.0
    %1190 = vmatpush2.msra.mxu0 0.0
    %1191 = vmatprep.subr.mxu0 0.0
    %1192 = vmatpush2.msra.mxu0 0.0
    %1193 = vmatprep.subr.mxu0 0.0
    %1194 = vmatpush2.msra.mxu0 0.0
    %1195 = vmatprep.subr.mxu0 0.0
    %1196 = vmatpush2.msra.mxu0 0.0
    %1197 = vmatprep.subr.mxu0 0.0
    %1198 = vmatpush2.msra.mxu0 0.0
    %1199 = vmatprep.subr.mxu0 0.0
    %1200 = vmatpush2.msra.mxu0 0.0
    %1201 = vmatprep.subr.mxu0 0.0
    %1202 = vmatpush2.msra.mxu0 0.0
    %1203 = vmatprep.subr.mxu0 0.0
    %1204 = vmatpush2.msra.mxu0 0.0
    %1205 = vmatprep.subr.mxu0 0.0
    %1206 = vmatpush2.msra.mxu0 0.0
    %1207 = vmatprep.subr.mxu0 0.0
    %1208 = vmatpush2.msra.mxu0 0.0
    %1209 = vmatprep.subr.mxu0 0.0
    %1210 = vmatpush2.msra.mxu0 0.0
    %1211 = vmatprep.subr.mxu0 0.0
    %1212 = vmatpush2.msra.mxu0 0.0
    %1213 = vmatprep.subr.mxu0 0.0
    %1214 = vmatpush2.msra.mxu0 0.0
    %1215 = vmatprep.subr.mxu0 0.0
    %1216 = vmatpush2.msra.mxu0 0.0
    %1217 = vmatprep.subr.mxu0 0.0
    %1218 = vmatpush2.msra.mxu0 0.0
    %1219 = vmatprep.mubr.f32.mxu0 0.0
    %1220 = vmatmul.mubr.f32.gmra.mxu0 %v1144
    %v1221 = vpop.f32.mrf.mxu0
    %v1222 = vadd.f32 %v1126, %v1221
    %v1223 = vpop.f32.mrf.mxu0
    %1224 = vmatprep.mubr.f32.mxu0 0.0
    %1225 = vmatmul.mubr.f32.gmra.mxu0 %v1147
    %v1226 = vpop.f32.mrf.mxu0
    %v1227 = vadd.f32 %v1131, %v1226
    %v1228 = vpop.f32.mrf.mxu0
    %1229 = vmatprep.mubr.f32.mxu0 0.0
    %1230 = vmatmul.mubr.f32.gmra.mxu0 %v1150
    %v1231 = vpop.f32.mrf.mxu0
    %v1232 = vadd.f32 %v1136, %v1231
    %v1233 = vpop.f32.mrf.mxu0
    %1234 = vmatprep.mubr.f32.mxu0 0.0
    %1235 = vmatmul.mubr.f32.gmra.mxu0 %v1153
    %v1236 = vpop.f32.mrf.mxu0
    %v1237 = vadd.f32 %v1141, %v1236
    %v1238 = vpop.f32.mrf.mxu0
    %1239 = vdwg.mxu0
    %v1240 = vmax.f32 %v1222, 0.0
    %v1241 = vmax.f32 %v1227, 0.0
    %v1242 = vmax.f32 %v1232, 0.0
    %v1243 = vmax.f32 %v1237, 0.0
    %v1244 = vld [vmem:[#allocation2 + $0x110] sm:$0xff]
    %v1245 = vld [vmem:[#allocation4 + $0x110] sm:$0xff]
    %1247 = vset.pattern.permute.xlu0 0
    %1248 = vperm.xlu0 %1247, %v1245
    %v1249 = vpop.permute.xlu0 %1248
    %v1252 = vsel %vm207, %v1244, 0
    %1254 = vmatprep.subr.mxu0 0.0
    %1255 = vmatpush1.msra.mxu0 0.0
    %1256 = vmatprep.subr.mxu0 0.0
    %1257 = vmatpush1.msra.mxu0 0.0
    %1258 = vmatprep.subr.mxu0 0.0
    %1259 = vmatpush1.msra.mxu0 0.0
    %1260 = vmatprep.subr.mxu0 0.0
    %1261 = vmatpush1.msra.mxu0 0.0
    %1262 = vmatprep.subr.mxu0 0.0
    %1263 = vmatpush1.msra.mxu0 0.0
    %1264 = vmatprep.subr.mxu0 0.0
    %1265 = vmatpush1.msra.mxu0 0.0
    %1266 = vmatprep.subr.mxu0 0.0
    %1267 = vmatpush1.msra.mxu0 0.0
    %1268 = vmatprep.subr.mxu0 0.0
    %1269 = vmatpush1.msra.mxu0 0.0
    %1270 = vmatprep.subr.mxu0 0.0
    %1271 = vmatpush1.msra.mxu0 0.0
    %1272 = vmatprep.subr.mxu0 0.0
    %1273 = vmatpush1.msra.mxu0 0.0
    %1274 = vmatprep.subr.mxu0 0.0
    %1275 = vmatpush1.msra.mxu0 0.0
    %1276 = vmatprep.subr.mxu0 0.0
    %1277 = vmatpush1.msra.mxu0 0.0
    %1278 = vmatprep.subr.mxu0 0.0
    %1279 = vmatpush1.msra.mxu0 %v1243
    %1280 = vmatprep.subr.mxu0 0.0
    %1281 = vmatpush1.msra.mxu0 %v1242
    %1282 = vmatprep.subr.mxu0 0.0
    %1283 = vmatpush1.msra.mxu0 %v1241
    %1284 = vmatprep.subr.mxu0 0.0
    %1285 = vmatpush1.msra.mxu0 %v1240
    %1286 = vmatprep.subr.mxu0 0.0
    %1287 = vmatpush2.msra.mxu0 0.0
    %1288 = vmatprep.subr.mxu0 0.0
    %1289 = vmatpush2.msra.mxu0 0.0
    %1290 = vmatprep.subr.mxu0 0.0
    %1291 = vmatpush2.msra.mxu0 0.0
    %1292 = vmatprep.subr.mxu0 0.0
    %1293 = vmatpush2.msra.mxu0 0.0
    %1294 = vmatprep.subr.mxu0 0.0
    %1295 = vmatpush2.msra.mxu0 0.0
    %1296 = vmatprep.subr.mxu0 0.0
    %1297 = vmatpush2.msra.mxu0 0.0
    %1298 = vmatprep.subr.mxu0 0.0
    %1299 = vmatpush2.msra.mxu0 0.0
    %1300 = vmatprep.subr.mxu0 0.0
    %1301 = vmatpush2.msra.mxu0 0.0
    %1302 = vmatprep.subr.mxu0 0.0
    %1303 = vmatpush2.msra.mxu0 0.0
    %1304 = vmatprep.subr.mxu0 0.0
    %1305 = vmatpush2.msra.mxu0 0.0
    %1306 = vmatprep.subr.mxu0 0.0
    %1307 = vmatpush2.msra.mxu0 0.0
    %1308 = vmatprep.subr.mxu0 0.0
    %1309 = vmatpush2.msra.mxu0 0.0
    %1310 = vmatprep.subr.mxu0 0.0
    %1311 = vmatpush2.msra.mxu0 0.0
    %1312 = vmatprep.subr.mxu0 0.0
    %1313 = vmatpush2.msra.mxu0 0.0
    %1314 = vmatprep.subr.mxu0 0.0
    %1315 = vmatpush2.msra.mxu0 0.0
    %1316 = vmatprep.subr.mxu0 0.0
    %1317 = vmatpush2.msra.mxu0 0.0
    %1318 = vmatprep.mubr.f32.mxu0 0.0
    %1319 = vmatmul.mubr.f32.gmra.mxu0 %v1252
    %v1320 = vpop.f32.mrf.mxu0
    %v1321 = vadd.f32 %v1249, %v1320
    %v1322 = vpop.f32.mrf.mxu0
    %1323 = vdwg.mxu0
    %vm1324 = vcmp.lt.f32.partialorder %v1321, 0.0
    %v1325 = vsel %vm1324, -1.0, 1.0
    %v1326 = vand.u32 2147483647, %v1321
    %vm1327 = vcmp.gt.f32.partialorder %v1326, 2.4142137
    %vm1328 = vcmp.gt.f32.partialorder %v1326, 0.41421357
    %vm1329 = vmxor %vm1327, 1
    %vm1330 = vmand %vm1328, %vm1329
    %v1331 = vsub.f32 %v1326, 1.0
    %v1332 = vsel %vm1330, %v1331, %v1326
    %v1333 = vsel %vm1327, -1.0, %v1332
    %v1334 = vadd.f32 %v1326, 1e-30
    %v1335 = vadd.f32 %v1326, 1.0
    %v1336 = vsel %vm1330, %v1335, 1.0
    %v1337 = vsel %vm1327, %v1334, %v1336
    %v1338 = vrcp.pop %v1337
    %v1339 = vmul.f32 %v1333, %v1338
    %v1340 = vsel %vm1330, 0.7853982, 0.0
    %v1341 = vsel %vm1327, 1.5707964, %v1340
    %v1342 = vmul.f32 %v1339, %v1339
    %v1343 = vmul.f32 %v1342, 0.080537446
    %v1344 = vsub.f32 %v1343, 0.13877685
    %v1345 = vmul.f32 %v1344, %v1342
    %v1346 = vadd.f32 %v1345, 0.19977711
    %v1347 = vmul.f32 %v1346, %v1342
    %v1348 = vsub.f32 %v1347, 0.3333295
    %v1349 = vmul.f32 %v1348, %v1342
    %v1350 = vmul.f32 %v1349, %v1339
    %v1351 = vadd.f32 %v1341, %v1350
    %v1352 = vadd.f32 %v1351, %v1339
    %v1353 = vmul.f32 %v1325, %v1352
    %v1354 = vmul.f32 %v1353, 1.272
    %v1355 = vmul.f32 %v1354, 1.442695
    %v1356 = vpow.pop %v1355
    %v1358 = vmul.f32 %v1356, %v521
    %v1360 = vrot.slane %v1321, 4
    %v1362 = vadd.f32 %v1358, %v1360
    %v1363 = vsel %vm535, %v1354, 0.0
    %v1364 = vrot.slane %v1363, 4
    %v1365 = vadd.f32 %v1363, %v1364
    %v1366 = vrot.slane %v1365, 2
    %v1367 = vadd.f32 %v1365, %v1366
    %v1368 = vrot.slane %v1367, 1
    %v1369 = vadd.f32 %v1367, %v1368
    %v1370 = vadd.f32 %v881, %v1369
    %v1372 = vrot.slane %v1362, 4
    %v1374 = vsel %vm535, %v873, %v1372
    %v1375 = vld [vmem:[#allocation2 + $0x118] sm:$0xff]
    %v1377 = vsel %vm422, %v1375, 0
    %1379 = vmatprep.subr.mxu0 0.0
    %1380 = vmatpush1.msra.mxu0 0.0
    %1381 = vmatprep.subr.mxu0 0.0
    %1382 = vmatpush1.msra.mxu0 0.0
    %1383 = vmatprep.subr.mxu0 0.0
    %1384 = vmatpush1.msra.mxu0 0.0
    %1385 = vmatprep.subr.mxu0 0.0
    %1386 = vmatpush1.msra.mxu0 0.0
    %1387 = vmatprep.subr.mxu0 0.0
    %1388 = vmatpush1.msra.mxu0 0.0
    %1389 = vmatprep.subr.mxu0 0.0
    %1390 = vmatpush1.msra.mxu0 0.0
    %1391 = vmatprep.subr.mxu0 0.0
    %1392 = vmatpush1.msra.mxu0 0.0
    %1393 = vmatprep.subr.mxu0 0.0
    %1394 = vmatpush1.msra.mxu0 0.0
    %1395 = vmatprep.subr.mxu0 0.0
    %1396 = vmatpush1.msra.mxu0 0.0
    %1397 = vmatprep.subr.mxu0 0.0
    %1398 = vmatpush1.msra.mxu0 0.0
    %1399 = vmatprep.subr.mxu0 0.0
    %1400 = vmatpush1.msra.mxu0 0.0
    %1401 = vmatprep.subr.mxu0 0.0
    %1402 = vmatpush1.msra.mxu0 0.0
    %1403 = vmatprep.subr.mxu0 0.0
    %1404 = vmatpush1.msra.mxu0 0.0
    %1405 = vmatprep.subr.mxu0 0.0
    %1406 = vmatpush1.msra.mxu0 0.0
    %1407 = vmatprep.subr.mxu0 0.0
    %1408 = vmatpush1.msra.mxu0 0.0
    %1409 = vmatprep.subr.mxu0 0.0
    %1410 = vmatpush1.msra.mxu0 %v1374
    %1411 = vmatprep.subr.mxu0 0.0
    %1412 = vmatpush2.msra.mxu0 0.0
    %1413 = vmatprep.subr.mxu0 0.0
    %1414 = vmatpush2.msra.mxu0 0.0
    %1415 = vmatprep.subr.mxu0 0.0
    %1416 = vmatpush2.msra.mxu0 0.0
    %1417 = vmatprep.subr.mxu0 0.0
    %1418 = vmatpush2.msra.mxu0 0.0
    %1419 = vmatprep.subr.mxu0 0.0
    %1420 = vmatpush2.msra.mxu0 0.0
    %1421 = vmatprep.subr.mxu0 0.0
    %1422 = vmatpush2.msra.mxu0 0.0
    %1423 = vmatprep.subr.mxu0 0.0
    %1424 = vmatpush2.msra.mxu0 0.0
    %1425 = vmatprep.subr.mxu0 0.0
    %1426 = vmatpush2.msra.mxu0 0.0
    %1427 = vmatprep.subr.mxu0 0.0
    %1428 = vmatpush2.msra.mxu0 0.0
    %1429 = vmatprep.subr.mxu0 0.0
    %1430 = vmatpush2.msra.mxu0 0.0
    %1431 = vmatprep.subr.mxu0 0.0
    %1432 = vmatpush2.msra.mxu0 0.0
    %1433 = vmatprep.subr.mxu0 0.0
    %1434 = vmatpush2.msra.mxu0 0.0
    %1435 = vmatprep.subr.mxu0 0.0
    %1436 = vmatpush2.msra.mxu0 0.0
    %1437 = vmatprep.subr.mxu0 0.0
    %1438 = vmatpush2.msra.mxu0 0.0
    %1439 = vmatprep.subr.mxu0 0.0
    %1440 = vmatpush2.msra.mxu0 0.0
    %1441 = vmatprep.subr.mxu0 0.0
    %1442 = vmatpush2.msra.mxu0 0.0
    %1443 = vmatprep.mubr.f32.mxu0 0.0
    %1444 = vmatmul.mubr.f32.gmra.mxu0 %v1377
    %v1445 = vpop.f32.mrf.mxu0
    %v1446 = vadd.f32 0.0, %v1445
    %v1447 = vpop.f32.mrf.mxu0
    %1448 = vdwg.mxu0
    %v1449 = vld [vmem:[#allocation2 + $0x120] sm:$0xff]
    %v1450 = vld [vmem:[#allocation2 + $0x128] sm:$0xff]
    %v1451 = vld [vmem:[#allocation2 + $0x130] sm:$0xff]
    %v1452 = vld [vmem:[#allocation2 + $0x138] sm:$0xff]
    %v1453 = vld [vmem:[#allocation2 + $0x140] sm:$0xff]
    %v1454 = vld [vmem:[#allocation2 + $0x148] sm:$0xff]
    %v1455 = vld [vmem:[#allocation2 + $0x150] sm:$0xff]
    %v1456 = vld [vmem:[#allocation2 + $0x158] sm:$0xff]
    %v1457 = vld [vmem:[#allocation4 + $0x140] sm:$0xff]
    %v1458 = vld [vmem:[#allocation4 + $0x148] sm:$0xff]
    %v1459 = vld [vmem:[#allocation4 + $0x150] sm:$0xff]
    %v1460 = vld [vmem:[#allocation4 + $0x158] sm:$0xff]
    %1462 = vset.pattern.permute.xlu0 0
    %1463 = vperm.xlu0 %1462, %v1457
    %v1464 = vpop.permute.xlu0 %1463
    %1467 = vset.pattern.permute.xlu0 0
    %1468 = vperm.xlu0 %1467, %v1458
    %v1469 = vpop.permute.xlu0 %1468
    %1472 = vset.pattern.permute.xlu0 0
    %1473 = vperm.xlu0 %1472, %v1459
    %v1474 = vpop.permute.xlu0 %1473
    %1477 = vset.pattern.permute.xlu0 0
    %1478 = vperm.xlu0 %1477, %v1460
    %v1479 = vpop.permute.xlu0 %1478
    %v1482 = vsel %vm422, %v1453, 0
    %v1485 = vsel %vm422, %v1454, 0
    %v1488 = vsel %vm422, %v1455, 0
    %v1491 = vsel %vm422, %v1456, 0
    %1493 = vmatprep.subr.mxu0 0.0
    %1494 = vmatpush1.msra.mxu0 0.0
    %1495 = vmatprep.subr.mxu0 0.0
    %1496 = vmatpush1.msra.mxu0 0.0
    %1497 = vmatprep.subr.mxu0 0.0
    %1498 = vmatpush1.msra.mxu0 0.0
    %1499 = vmatprep.subr.mxu0 0.0
    %1500 = vmatpush1.msra.mxu0 0.0
    %1501 = vmatprep.subr.mxu0 0.0
    %1502 = vmatpush1.msra.mxu0 0.0
    %1503 = vmatprep.subr.mxu0 0.0
    %1504 = vmatpush1.msra.mxu0 0.0
    %1505 = vmatprep.subr.mxu0 0.0
    %1506 = vmatpush1.msra.mxu0 0.0
    %1507 = vmatprep.subr.mxu0 0.0
    %1508 = vmatpush1.msra.mxu0 0.0
    %1509 = vmatprep.subr.mxu0 0.0
    %1510 = vmatpush1.msra.mxu0 0.0
    %1511 = vmatprep.subr.mxu0 0.0
    %1512 = vmatpush1.msra.mxu0 0.0
    %1513 = vmatprep.subr.mxu0 0.0
    %1514 = vmatpush1.msra.mxu0 0.0
    %1515 = vmatprep.subr.mxu0 0.0
    %1516 = vmatpush1.msra.mxu0 0.0
    %1517 = vmatprep.subr.mxu0 0.0
    %1518 = vmatpush1.msra.mxu0 0.0
    %1519 = vmatprep.subr.mxu0 0.0
    %1520 = vmatpush1.msra.mxu0 0.0
    %1521 = vmatprep.subr.mxu0 0.0
    %1522 = vmatpush1.msra.mxu0 0.0
    %1523 = vmatprep.subr.mxu0 0.0
    %1524 = vmatpush1.msra.mxu0 %v386
    %1525 = vmatprep.subr.mxu0 0.0
    %1526 = vmatpush2.msra.mxu0 0.0
    %1527 = vmatprep.subr.mxu0 0.0
    %1528 = vmatpush2.msra.mxu0 0.0
    %1529 = vmatprep.subr.mxu0 0.0
    %1530 = vmatpush2.msra.mxu0 0.0
    %1531 = vmatprep.subr.mxu0 0.0
    %1532 = vmatpush2.msra.mxu0 0.0
    %1533 = vmatprep.subr.mxu0 0.0
    %1534 = vmatpush2.msra.mxu0 0.0
    %1535 = vmatprep.subr.mxu0 0.0
    %1536 = vmatpush2.msra.mxu0 0.0
    %1537 = vmatprep.subr.mxu0 0.0
    %1538 = vmatpush2.msra.mxu0 0.0
    %1539 = vmatprep.subr.mxu0 0.0
    %1540 = vmatpush2.msra.mxu0 0.0
    %1541 = vmatprep.subr.mxu0 0.0
    %1542 = vmatpush2.msra.mxu0 0.0
    %1543 = vmatprep.subr.mxu0 0.0
    %1544 = vmatpush2.msra.mxu0 0.0
    %1545 = vmatprep.subr.mxu0 0.0
    %1546 = vmatpush2.msra.mxu0 0.0
    %1547 = vmatprep.subr.mxu0 0.0
    %1548 = vmatpush2.msra.mxu0 0.0
    %1549 = vmatprep.subr.mxu0 0.0
    %1550 = vmatpush2.msra.mxu0 0.0
    %1551 = vmatprep.subr.mxu0 0.0
    %1552 = vmatpush2.msra.mxu0 0.0
    %1553 = vmatprep.subr.mxu0 0.0
    %1554 = vmatpush2.msra.mxu0 0.0
    %1555 = vmatprep.subr.mxu0 0.0
    %1556 = vmatpush2.msra.mxu0 0.0
    %1557 = vmatprep.mubr.f32.mxu0 0.0
    %1558 = vmatmul.mubr.f32.gmra.mxu0 %v1482
    %v1559 = vpop.f32.mrf.mxu0
    %v1560 = vadd.f32 %v1464, %v1559
    %v1561 = vpop.f32.mrf.mxu0
    %1562 = vmatprep.mubr.f32.mxu0 0.0
    %1563 = vmatmul.mubr.f32.gmra.mxu0 %v1485
    %v1564 = vpop.f32.mrf.mxu0
    %v1565 = vadd.f32 %v1469, %v1564
    %v1566 = vpop.f32.mrf.mxu0
    %1567 = vmatprep.mubr.f32.mxu0 0.0
    %1568 = vmatmul.mubr.f32.gmra.mxu0 %v1488
    %v1569 = vpop.f32.mrf.mxu0
    %v1570 = vadd.f32 %v1474, %v1569
    %v1571 = vpop.f32.mrf.mxu0
    %1572 = vmatprep.mubr.f32.mxu0 0.0
    %1573 = vmatmul.mubr.f32.gmra.mxu0 %v1491
    %v1574 = vpop.f32.mrf.mxu0
    %v1575 = vadd.f32 %v1479, %v1574
    %v1576 = vpop.f32.mrf.mxu0
    %1577 = vdwg.mxu0
    %v1579 = vrot.slane %v1446, 4
    %v1581 = vsel %vm522, %v1449, 0
    %v1584 = vsel %vm522, %v1450, 0
    %v1587 = vsel %vm522, %v1451, 0
    %v1590 = vsel %vm522, %v1452, 0
    %v1592 = vsel %vm535, %v1579, 0
    %1594 = vmatprep.subr.mxu0 0.0
    %1595 = vmatpush1.msra.mxu0 0.0
    %1596 = vmatprep.subr.mxu0 0.0
    %1597 = vmatpush1.msra.mxu0 0.0
    %1598 = vmatprep.subr.mxu0 0.0
    %1599 = vmatpush1.msra.mxu0 0.0
    %1600 = vmatprep.subr.mxu0 0.0
    %1601 = vmatpush1.msra.mxu0 0.0
    %1602 = vmatprep.subr.mxu0 0.0
    %1603 = vmatpush1.msra.mxu0 0.0
    %1604 = vmatprep.subr.mxu0 0.0
    %1605 = vmatpush1.msra.mxu0 0.0
    %1606 = vmatprep.subr.mxu0 0.0
    %1607 = vmatpush1.msra.mxu0 0.0
    %1608 = vmatprep.subr.mxu0 0.0
    %1609 = vmatpush1.msra.mxu0 0.0
    %1610 = vmatprep.subr.mxu0 0.0
    %1611 = vmatpush1.msra.mxu0 0.0
    %1612 = vmatprep.subr.mxu0 0.0
    %1613 = vmatpush1.msra.mxu0 0.0
    %1614 = vmatprep.subr.mxu0 0.0
    %1615 = vmatpush1.msra.mxu0 0.0
    %1616 = vmatprep.subr.mxu0 0.0
    %1617 = vmatpush1.msra.mxu0 0.0
    %1618 = vmatprep.subr.mxu0 0.0
    %1619 = vmatpush1.msra.mxu0 0.0
    %1620 = vmatprep.subr.mxu0 0.0
    %1621 = vmatpush1.msra.mxu0 0.0
    %1622 = vmatprep.subr.mxu0 0.0
    %1623 = vmatpush1.msra.mxu0 0.0
    %1624 = vmatprep.subr.mxu0 0.0
    %1625 = vmatpush1.msra.mxu0 %v1592
    %1626 = vmatprep.subr.mxu0 0.0
    %1627 = vmatpush2.msra.mxu0 0.0
    %1628 = vmatprep.subr.mxu0 0.0
    %1629 = vmatpush2.msra.mxu0 0.0
    %1630 = vmatprep.subr.mxu0 0.0
    %1631 = vmatpush2.msra.mxu0 0.0
    %1632 = vmatprep.subr.mxu0 0.0
    %1633 = vmatpush2.msra.mxu0 0.0
    %1634 = vmatprep.subr.mxu0 0.0
    %1635 = vmatpush2.msra.mxu0 0.0
    %1636 = vmatprep.subr.mxu0 0.0
    %1637 = vmatpush2.msra.mxu0 0.0
    %1638 = vmatprep.subr.mxu0 0.0
    %1639 = vmatpush2.msra.mxu0 0.0
    %1640 = vmatprep.subr.mxu0 0.0
    %1641 = vmatpush2.msra.mxu0 0.0
    %1642 = vmatprep.subr.mxu0 0.0
    %1643 = vmatpush2.msra.mxu0 0.0
    %1644 = vmatprep.subr.mxu0 0.0
    %1645 = vmatpush2.msra.mxu0 0.0
    %1646 = vmatprep.subr.mxu0 0.0
    %1647 = vmatpush2.msra.mxu0 0.0
    %1648 = vmatprep.subr.mxu0 0.0
    %1649 = vmatpush2.msra.mxu0 0.0
    %1650 = vmatprep.subr.mxu0 0.0
    %1651 = vmatpush2.msra.mxu0 0.0
    %1652 = vmatprep.subr.mxu0 0.0
    %1653 = vmatpush2.msra.mxu0 0.0
    %1654 = vmatprep.subr.mxu0 0.0
    %1655 = vmatpush2.msra.mxu0 0.0
    %1656 = vmatprep.subr.mxu0 0.0
    %1657 = vmatpush2.msra.mxu0 0.0
    %1658 = vmatprep.mubr.f32.mxu0 0.0
    %1659 = vmatmul.mubr.f32.gmra.mxu0 %v1581
    %v1660 = vpop.f32.mrf.mxu0
    %v1661 = vadd.f32 %v1560, %v1660
    %v1662 = vpop.f32.mrf.mxu0
    %1663 = vmatprep.mubr.f32.mxu0 0.0
    %1664 = vmatmul.mubr.f32.gmra.mxu0 %v1584
    %v1665 = vpop.f32.mrf.mxu0
    %v1666 = vadd.f32 %v1565, %v1665
    %v1667 = vpop.f32.mrf.mxu0
    %1668 = vmatprep.mubr.f32.mxu0 0.0
    %1669 = vmatmul.mubr.f32.gmra.mxu0 %v1587
    %v1670 = vpop.f32.mrf.mxu0
    %v1671 = vadd.f32 %v1570, %v1670
    %v1672 = vpop.f32.mrf.mxu0
    %1673 = vmatprep.mubr.f32.mxu0 0.0
    %1674 = vmatmul.mubr.f32.gmra.mxu0 %v1590
    %v1675 = vpop.f32.mrf.mxu0
    %v1676 = vadd.f32 %v1575, %v1675
    %v1677 = vpop.f32.mrf.mxu0
    %1678 = vdwg.mxu0
    %v1679 = vmax.f32 %v1661, 0.0
    %v1680 = vmax.f32 %v1666, 0.0
    %v1681 = vmax.f32 %v1671, 0.0
    %v1682 = vmax.f32 %v1676, 0.0
    %v1683 = vld [vmem:[#allocation2 + $0x160] sm:$0xff]
    %v1684 = vld [vmem:[#allocation2 + $0x168] sm:$0xff]
    %v1685 = vld [vmem:[#allocation2 + $0x170] sm:$0xff]
    %v1686 = vld [vmem:[#allocation2 + $0x178] sm:$0xff]
    %v1687 = vld [vmem:[#allocation4 + $0x160] sm:$0xff]
    %v1688 = vld [vmem:[#allocation4 + $0x168] sm:$0xff]
    %v1689 = vld [vmem:[#allocation4 + $0x170] sm:$0xff]
    %v1690 = vld [vmem:[#allocation4 + $0x178] sm:$0xff]
    %1692 = vset.pattern.permute.xlu0 0
    %1693 = vperm.xlu0 %1692, %v1687
    %v1694 = vpop.permute.xlu0 %1693
    %1697 = vset.pattern.permute.xlu0 0
    %1698 = vperm.xlu0 %1697, %v1688
    %v1699 = vpop.permute.xlu0 %1698
    %1702 = vset.pattern.permute.xlu0 0
    %1703 = vperm.xlu0 %1702, %v1689
    %v1704 = vpop.permute.xlu0 %1703
    %1707 = vset.pattern.permute.xlu0 0
    %1708 = vperm.xlu0 %1707, %v1690
    %v1709 = vpop.permute.xlu0 %1708
    %v1712 = vsel %vm207, %v1683, 0
    %v1715 = vsel %vm207, %v1684, 0
    %v1718 = vsel %vm207, %v1685, 0
    %v1721 = vsel %vm207, %v1686, 0
    %1723 = vmatprep.subr.mxu0 0.0
    %1724 = vmatpush1.msra.mxu0 0.0
    %1725 = vmatprep.subr.mxu0 0.0
    %1726 = vmatpush1.msra.mxu0 0.0
    %1727 = vmatprep.subr.mxu0 0.0
    %1728 = vmatpush1.msra.mxu0 0.0
    %1729 = vmatprep.subr.mxu0 0.0
    %1730 = vmatpush1.msra.mxu0 0.0
    %1731 = vmatprep.subr.mxu0 0.0
    %1732 = vmatpush1.msra.mxu0 0.0
    %1733 = vmatprep.subr.mxu0 0.0
    %1734 = vmatpush1.msra.mxu0 0.0
    %1735 = vmatprep.subr.mxu0 0.0
    %1736 = vmatpush1.msra.mxu0 0.0
    %1737 = vmatprep.subr.mxu0 0.0
    %1738 = vmatpush1.msra.mxu0 0.0
    %1739 = vmatprep.subr.mxu0 0.0
    %1740 = vmatpush1.msra.mxu0 0.0
    %1741 = vmatprep.subr.mxu0 0.0
    %1742 = vmatpush1.msra.mxu0 0.0
    %1743 = vmatprep.subr.mxu0 0.0
    %1744 = vmatpush1.msra.mxu0 0.0
    %1745 = vmatprep.subr.mxu0 0.0
    %1746 = vmatpush1.msra.mxu0 0.0
    %1747 = vmatprep.subr.mxu0 0.0
    %1748 = vmatpush1.msra.mxu0 %v1682
    %1749 = vmatprep.subr.mxu0 0.0
    %1750 = vmatpush1.msra.mxu0 %v1681
    %1751 = vmatprep.subr.mxu0 0.0
    %1752 = vmatpush1.msra.mxu0 %v1680
    %1753 = vmatprep.subr.mxu0 0.0
    %1754 = vmatpush1.msra.mxu0 %v1679
    %1755 = vmatprep.subr.mxu0 0.0
    %1756 = vmatpush2.msra.mxu0 0.0
    %1757 = vmatprep.subr.mxu0 0.0
    %1758 = vmatpush2.msra.mxu0 0.0
    %1759 = vmatprep.subr.mxu0 0.0
    %1760 = vmatpush2.msra.mxu0 0.0
    %1761 = vmatprep.subr.mxu0 0.0
    %1762 = vmatpush2.msra.mxu0 0.0
    %1763 = vmatprep.subr.mxu0 0.0
    %1764 = vmatpush2.msra.mxu0 0.0
    %1765 = vmatprep.subr.mxu0 0.0
    %1766 = vmatpush2.msra.mxu0 0.0
    %1767 = vmatprep.subr.mxu0 0.0
    %1768 = vmatpush2.msra.mxu0 0.0
    %1769 = vmatprep.subr.mxu0 0.0
    %1770 = vmatpush2.msra.mxu0 0.0
    %1771 = vmatprep.subr.mxu0 0.0
    %1772 = vmatpush2.msra.mxu0 0.0
    %1773 = vmatprep.subr.mxu0 0.0
    %1774 = vmatpush2.msra.mxu0 0.0
    %1775 = vmatprep.subr.mxu0 0.0
    %1776 = vmatpush2.msra.mxu0 0.0
    %1777 = vmatprep.subr.mxu0 0.0
    %1778 = vmatpush2.msra.mxu0 0.0
    %1779 = vmatprep.subr.mxu0 0.0
    %1780 = vmatpush2.msra.mxu0 0.0
    %1781 = vmatprep.subr.mxu0 0.0
    %1782 = vmatpush2.msra.mxu0 0.0
    %1783 = vmatprep.subr.mxu0 0.0
    %1784 = vmatpush2.msra.mxu0 0.0
    %1785 = vmatprep.subr.mxu0 0.0
    %1786 = vmatpush2.msra.mxu0 0.0
    %1787 = vmatprep.mubr.f32.mxu0 0.0
    %1788 = vmatmul.mubr.f32.gmra.mxu0 %v1712
    %v1789 = vpop.f32.mrf.mxu0
    %v1790 = vadd.f32 %v1694, %v1789
    %v1791 = vpop.f32.mrf.mxu0
    %1792 = vmatprep.mubr.f32.mxu0 0.0
    %1793 = vmatmul.mubr.f32.gmra.mxu0 %v1715
    %v1794 = vpop.f32.mrf.mxu0
    %v1795 = vadd.f32 %v1699, %v1794
    %v1796 = vpop.f32.mrf.mxu0
    %1797 = vmatprep.mubr.f32.mxu0 0.0
    %1798 = vmatmul.mubr.f32.gmra.mxu0 %v1718
    %v1799 = vpop.f32.mrf.mxu0
    %v1800 = vadd.f32 %v1704, %v1799
    %v1801 = vpop.f32.mrf.mxu0
    %1802 = vmatprep.mubr.f32.mxu0 0.0
    %1803 = vmatmul.mubr.f32.gmra.mxu0 %v1721
    %v1804 = vpop.f32.mrf.mxu0
    %v1805 = vadd.f32 %v1709, %v1804
    %v1806 = vpop.f32.mrf.mxu0
    %1807 = vdwg.mxu0
    %v1808 = vmax.f32 %v1790, 0.0
    %v1809 = vmax.f32 %v1795, 0.0
    %v1810 = vmax.f32 %v1800, 0.0
    %v1811 = vmax.f32 %v1805, 0.0
    %v1812 = vld [vmem:[#allocation2 + $0x180] sm:$0xff]
    %v1813 = vld [vmem:[#allocation4 + $0x180] sm:$0xff]
    %1815 = vset.pattern.permute.xlu0 0
    %1816 = vperm.xlu0 %1815, %v1813
    %v1817 = vpop.permute.xlu0 %1816
    %v1820 = vsel %vm207, %v1812, 0
    %1822 = vmatprep.subr.mxu0 0.0
    %1823 = vmatpush1.msra.mxu0 0.0
    %1824 = vmatprep.subr.mxu0 0.0
    %1825 = vmatpush1.msra.mxu0 0.0
    %1826 = vmatprep.subr.mxu0 0.0
    %1827 = vmatpush1.msra.mxu0 0.0
    %1828 = vmatprep.subr.mxu0 0.0
    %1829 = vmatpush1.msra.mxu0 0.0
    %1830 = vmatprep.subr.mxu0 0.0
    %1831 = vmatpush1.msra.mxu0 0.0
    %1832 = vmatprep.subr.mxu0 0.0
    %1833 = vmatpush1.msra.mxu0 0.0
    %1834 = vmatprep.subr.mxu0 0.0
    %1835 = vmatpush1.msra.mxu0 0.0
    %1836 = vmatprep.subr.mxu0 0.0
    %1837 = vmatpush1.msra.mxu0 0.0
    %1838 = vmatprep.subr.mxu0 0.0
    %1839 = vmatpush1.msra.mxu0 0.0
    %1840 = vmatprep.subr.mxu0 0.0
    %1841 = vmatpush1.msra.mxu0 0.0
    %1842 = vmatprep.subr.mxu0 0.0
    %1843 = vmatpush1.msra.mxu0 0.0
    %1844 = vmatprep.subr.mxu0 0.0
    %1845 = vmatpush1.msra.mxu0 0.0
    %1846 = vmatprep.subr.mxu0 0.0
    %1847 = vmatpush1.msra.mxu0 %v1811
    %1848 = vmatprep.subr.mxu0 0.0
    %1849 = vmatpush1.msra.mxu0 %v1810
    %1850 = vmatprep.subr.mxu0 0.0
    %1851 = vmatpush1.msra.mxu0 %v1809
    %1852 = vmatprep.subr.mxu0 0.0
    %1853 = vmatpush1.msra.mxu0 %v1808
    %1854 = vmatprep.subr.mxu0 0.0
    %1855 = vmatpush2.msra.mxu0 0.0
    %1856 = vmatprep.subr.mxu0 0.0
    %1857 = vmatpush2.msra.mxu0 0.0
    %1858 = vmatprep.subr.mxu0 0.0
    %1859 = vmatpush2.msra.mxu0 0.0
    %1860 = vmatprep.subr.mxu0 0.0
    %1861 = vmatpush2.msra.mxu0 0.0
    %1862 = vmatprep.subr.mxu0 0.0
    %1863 = vmatpush2.msra.mxu0 0.0
    %1864 = vmatprep.subr.mxu0 0.0
    %1865 = vmatpush2.msra.mxu0 0.0
    %1866 = vmatprep.subr.mxu0 0.0
    %1867 = vmatpush2.msra.mxu0 0.0
    %1868 = vmatprep.subr.mxu0 0.0
    %1869 = vmatpush2.msra.mxu0 0.0
    %1870 = vmatprep.subr.mxu0 0.0
    %1871 = vmatpush2.msra.mxu0 0.0
    %1872 = vmatprep.subr.mxu0 0.0
    %1873 = vmatpush2.msra.mxu0 0.0
    %1874 = vmatprep.subr.mxu0 0.0
    %1875 = vmatpush2.msra.mxu0 0.0
    %1876 = vmatprep.subr.mxu0 0.0
    %1877 = vmatpush2.msra.mxu0 0.0
    %1878 = vmatprep.subr.mxu0 0.0
    %1879 = vmatpush2.msra.mxu0 0.0
    %1880 = vmatprep.subr.mxu0 0.0
    %1881 = vmatpush2.msra.mxu0 0.0
    %1882 = vmatprep.subr.mxu0 0.0
    %1883 = vmatpush2.msra.mxu0 0.0
    %1884 = vmatprep.subr.mxu0 0.0
    %1885 = vmatpush2.msra.mxu0 0.0
    %1886 = vmatprep.mubr.f32.mxu0 0.0
    %1887 = vmatmul.mubr.f32.gmra.mxu0 %v1820
    %v1888 = vpop.f32.mrf.mxu0
    %v1889 = vadd.f32 %v1817, %v1888
    %v1890 = vpop.f32.mrf.mxu0
    %1891 = vdwg.mxu0
    %vm1892 = vcmp.lt.f32.partialorder %v1889, 0.0
    %v1893 = vsel %vm1892, -1.0, 1.0
    %v1894 = vand.u32 2147483647, %v1889
    %vm1895 = vcmp.gt.f32.partialorder %v1894, 2.4142137
    %vm1896 = vcmp.gt.f32.partialorder %v1894, 0.41421357
    %vm1897 = vmxor %vm1895, 1
    %vm1898 = vmand %vm1896, %vm1897
    %v1899 = vsub.f32 %v1894, 1.0
    %v1900 = vsel %vm1898, %v1899, %v1894
    %v1901 = vsel %vm1895, -1.0, %v1900
    %v1902 = vadd.f32 %v1894, 1e-30
    %v1903 = vadd.f32 %v1894, 1.0
    %v1904 = vsel %vm1898, %v1903, 1.0
    %v1905 = vsel %vm1895, %v1902, %v1904
    %v1906 = vrcp.pop %v1905
    %v1907 = vmul.f32 %v1901, %v1906
    %v1908 = vsel %vm1898, 0.7853982, 0.0
    %v1909 = vsel %vm1895, 1.5707964, %v1908
    %v1910 = vmul.f32 %v1907, %v1907
    %v1911 = vmul.f32 %v1910, 0.080537446
    %v1912 = vsub.f32 %v1911, 0.13877685
    %v1913 = vmul.f32 %v1912, %v1910
    %v1914 = vadd.f32 %v1913, 0.19977711
    %v1915 = vmul.f32 %v1914, %v1910
    %v1916 = vsub.f32 %v1915, 0.3333295
    %v1917 = vmul.f32 %v1916, %v1910
    %v1918 = vmul.f32 %v1917, %v1907
    %v1919 = vadd.f32 %v1909, %v1918
    %v1920 = vadd.f32 %v1919, %v1907
    %v1921 = vmul.f32 %v1893, %v1920
    %v1922 = vmul.f32 %v1921, 1.272
    %v1923 = vmul.f32 %v1922, 1.442695
    %v1924 = vpow.pop %v1923
    %v1925 = vmul.f32 %v1924, %v1446
    %v1927 = vrot.slane %v1889, 4
    %v1929 = vadd.f32 %v1925, %v1927
    %v1930 = vsel %vm535, %v1922, 0.0
    %v1931 = vrot.slane %v1930, 4
    %v1932 = vadd.f32 %v1930, %v1931
    %v1933 = vrot.slane %v1932, 2
    %v1934 = vadd.f32 %v1932, %v1933
    %v1935 = vrot.slane %v1934, 1
    %v1936 = vadd.f32 %v1934, %v1935
    %v1937 = vadd.f32 %v1370, %v1936
    %v1938 = vld [vmem:[#allocation2 + $0x188] sm:$0xff]
    %v1939 = vld [vmem:[#allocation2 + $0x190] sm:$0xff]
    %v1940 = vld [vmem:[#allocation2 + $0x198] sm:$0xff]
    %v1941 = vld [vmem:[#allocation2 + $0x1a0] sm:$0xff]
    %v1942 = vld [vmem:[#allocation2 + $0x1a8] sm:$0xff]
    %v1943 = vld [vmem:[#allocation2 + $0x1b0] sm:$0xff]
    %v1944 = vld [vmem:[#allocation2 + $0x1b8] sm:$0xff]
    %v1945 = vld [vmem:[#allocation2 + $0x1c0] sm:$0xff]
    %v1946 = vld [vmem:[#allocation4 + $0x1a8] sm:$0xff]
    %v1947 = vld [vmem:[#allocation4 + $0x1b0] sm:$0xff]
    %v1948 = vld [vmem:[#allocation4 + $0x1b8] sm:$0xff]
    %v1949 = vld [vmem:[#allocation4 + $0x1c0] sm:$0xff]
    %1951 = vset.pattern.permute.xlu0 0
    %1952 = vperm.xlu0 %1951, %v1946
    %v1953 = vpop.permute.xlu0 %1952
    %1956 = vset.pattern.permute.xlu0 0
    %1957 = vperm.xlu0 %1956, %v1947
    %v1958 = vpop.permute.xlu0 %1957
    %1961 = vset.pattern.permute.xlu0 0
    %1962 = vperm.xlu0 %1961, %v1948
    %v1963 = vpop.permute.xlu0 %1962
    %1966 = vset.pattern.permute.xlu0 0
    %1967 = vperm.xlu0 %1966, %v1949
    %v1968 = vpop.permute.xlu0 %1967
    %v1971 = vsel %vm422, %v1942, 0
    %v1974 = vsel %vm422, %v1943, 0
    %v1977 = vsel %vm422, %v1944, 0
    %v1980 = vsel %vm422, %v1945, 0
    %1982 = vmatprep.subr.mxu0 0.0
    %1983 = vmatpush1.msra.mxu0 0.0
    %1984 = vmatprep.subr.mxu0 0.0
    %1985 = vmatpush1.msra.mxu0 0.0
    %1986 = vmatprep.subr.mxu0 0.0
    %1987 = vmatpush1.msra.mxu0 0.0
    %1988 = vmatprep.subr.mxu0 0.0
    %1989 = vmatpush1.msra.mxu0 0.0
    %1990 = vmatprep.subr.mxu0 0.0
    %1991 = vmatpush1.msra.mxu0 0.0
    %1992 = vmatprep.subr.mxu0 0.0
    %1993 = vmatpush1.msra.mxu0 0.0
    %1994 = vmatprep.subr.mxu0 0.0
    %1995 = vmatpush1.msra.mxu0 0.0
    %1996 = vmatprep.subr.mxu0 0.0
    %1997 = vmatpush1.msra.mxu0 0.0
    %1998 = vmatprep.subr.mxu0 0.0
    %1999 = vmatpush1.msra.mxu0 0.0
    %2000 = vmatprep.subr.mxu0 0.0
    %2001 = vmatpush1.msra.mxu0 0.0
    %2002 = vmatprep.subr.mxu0 0.0
    %2003 = vmatpush1.msra.mxu0 0.0
    %2004 = vmatprep.subr.mxu0 0.0
    %2005 = vmatpush1.msra.mxu0 0.0
    %2006 = vmatprep.subr.mxu0 0.0
    %2007 = vmatpush1.msra.mxu0 0.0
    %2008 = vmatprep.subr.mxu0 0.0
    %2009 = vmatpush1.msra.mxu0 0.0
    %2010 = vmatprep.subr.mxu0 0.0
    %2011 = vmatpush1.msra.mxu0 0.0
    %2012 = vmatprep.subr.mxu0 0.0
    %2013 = vmatpush1.msra.mxu0 %v386
    %2014 = vmatprep.subr.mxu0 0.0
    %2015 = vmatpush2.msra.mxu0 0.0
    %2016 = vmatprep.subr.mxu0 0.0
    %2017 = vmatpush2.msra.mxu0 0.0
    %2018 = vmatprep.subr.mxu0 0.0
    %2019 = vmatpush2.msra.mxu0 0.0
    %2020 = vmatprep.subr.mxu0 0.0
    %2021 = vmatpush2.msra.mxu0 0.0
    %2022 = vmatprep.subr.mxu0 0.0
    %2023 = vmatpush2.msra.mxu0 0.0
    %2024 = vmatprep.subr.mxu0 0.0
    %2025 = vmatpush2.msra.mxu0 0.0
    %2026 = vmatprep.subr.mxu0 0.0
    %2027 = vmatpush2.msra.mxu0 0.0
    %2028 = vmatprep.subr.mxu0 0.0
    %2029 = vmatpush2.msra.mxu0 0.0
    %2030 = vmatprep.subr.mxu0 0.0
    %2031 = vmatpush2.msra.mxu0 0.0
    %2032 = vmatprep.subr.mxu0 0.0
    %2033 = vmatpush2.msra.mxu0 0.0
    %2034 = vmatprep.subr.mxu0 0.0
    %2035 = vmatpush2.msra.mxu0 0.0
    %2036 = vmatprep.subr.mxu0 0.0
    %2037 = vmatpush2.msra.mxu0 0.0
    %2038 = vmatprep.subr.mxu0 0.0
    %2039 = vmatpush2.msra.mxu0 0.0
    %2040 = vmatprep.subr.mxu0 0.0
    %2041 = vmatpush2.msra.mxu0 0.0
    %2042 = vmatprep.subr.mxu0 0.0
    %2043 = vmatpush2.msra.mxu0 0.0
    %2044 = vmatprep.subr.mxu0 0.0
    %2045 = vmatpush2.msra.mxu0 0.0
    %2046 = vmatprep.mubr.f32.mxu0 0.0
    %2047 = vmatmul.mubr.f32.gmra.mxu0 %v1971
    %v2048 = vpop.f32.mrf.mxu0
    %v2049 = vadd.f32 %v1953, %v2048
    %v2050 = vpop.f32.mrf.mxu0
    %2051 = vmatprep.mubr.f32.mxu0 0.0
    %2052 = vmatmul.mubr.f32.gmra.mxu0 %v1974
    %v2053 = vpop.f32.mrf.mxu0
    %v2054 = vadd.f32 %v1958, %v2053
    %v2055 = vpop.f32.mrf.mxu0
    %2056 = vmatprep.mubr.f32.mxu0 0.0
    %2057 = vmatmul.mubr.f32.gmra.mxu0 %v1977
    %v2058 = vpop.f32.mrf.mxu0
    %v2059 = vadd.f32 %v1963, %v2058
    %v2060 = vpop.f32.mrf.mxu0
    %2061 = vmatprep.mubr.f32.mxu0 0.0
    %2062 = vmatmul.mubr.f32.gmra.mxu0 %v1980
    %v2063 = vpop.f32.mrf.mxu0
    %v2064 = vadd.f32 %v1968, %v2063
    %v2065 = vpop.f32.mrf.mxu0
    %2066 = vdwg.mxu0
    %v2068 = vsel %vm522, %v1938, 0
    %v2071 = vsel %vm522, %v1939, 0
    %v2074 = vsel %vm522, %v1940, 0
    %v2077 = vsel %vm522, %v1941, 0
    %v2080 = vsel %vm535, %v1929, 0
    %2082 = vmatprep.subr.mxu0 0.0
    %2083 = vmatpush1.msra.mxu0 0.0
    %2084 = vmatprep.subr.mxu0 0.0
    %2085 = vmatpush1.msra.mxu0 0.0
    %2086 = vmatprep.subr.mxu0 0.0
    %2087 = vmatpush1.msra.mxu0 0.0
    %2088 = vmatprep.subr.mxu0 0.0
    %2089 = vmatpush1.msra.mxu0 0.0
    %2090 = vmatprep.subr.mxu0 0.0
    %2091 = vmatpush1.msra.mxu0 0.0
    %2092 = vmatprep.subr.mxu0 0.0
    %2093 = vmatpush1.msra.mxu0 0.0
    %2094 = vmatprep.subr.mxu0 0.0
    %2095 = vmatpush1.msra.mxu0 0.0
    %2096 = vmatprep.subr.mxu0 0.0
    %2097 = vmatpush1.msra.mxu0 0.0
    %2098 = vmatprep.subr.mxu0 0.0
    %2099 = vmatpush1.msra.mxu0 0.0
    %2100 = vmatprep.subr.mxu0 0.0
    %2101 = vmatpush1.msra.mxu0 0.0
    %2102 = vmatprep.subr.mxu0 0.0
    %2103 = vmatpush1.msra.mxu0 0.0
    %2104 = vmatprep.subr.mxu0 0.0
    %2105 = vmatpush1.msra.mxu0 0.0
    %2106 = vmatprep.subr.mxu0 0.0
    %2107 = vmatpush1.msra.mxu0 0.0
    %2108 = vmatprep.subr.mxu0 0.0
    %2109 = vmatpush1.msra.mxu0 0.0
    %2110 = vmatprep.subr.mxu0 0.0
    %2111 = vmatpush1.msra.mxu0 0.0
    %2112 = vmatprep.subr.mxu0 0.0
    %2113 = vmatpush1.msra.mxu0 %v2080
    %2114 = vmatprep.subr.mxu0 0.0
    %2115 = vmatpush2.msra.mxu0 0.0
    %2116 = vmatprep.subr.mxu0 0.0
    %2117 = vmatpush2.msra.mxu0 0.0
    %2118 = vmatprep.subr.mxu0 0.0
    %2119 = vmatpush2.msra.mxu0 0.0
    %2120 = vmatprep.subr.mxu0 0.0
    %2121 = vmatpush2.msra.mxu0 0.0
    %2122 = vmatprep.subr.mxu0 0.0
    %2123 = vmatpush2.msra.mxu0 0.0
    %2124 = vmatprep.subr.mxu0 0.0
    %2125 = vmatpush2.msra.mxu0 0.0
    %2126 = vmatprep.subr.mxu0 0.0
    %2127 = vmatpush2.msra.mxu0 0.0
    %2128 = vmatprep.subr.mxu0 0.0
    %2129 = vmatpush2.msra.mxu0 0.0
    %2130 = vmatprep.subr.mxu0 0.0
    %2131 = vmatpush2.msra.mxu0 0.0
    %2132 = vmatprep.subr.mxu0 0.0
    %2133 = vmatpush2.msra.mxu0 0.0
    %2134 = vmatprep.subr.mxu0 0.0
    %2135 = vmatpush2.msra.mxu0 0.0
    %2136 = vmatprep.subr.mxu0 0.0
    %2137 = vmatpush2.msra.mxu0 0.0
    %2138 = vmatprep.subr.mxu0 0.0
    %2139 = vmatpush2.msra.mxu0 0.0
    %2140 = vmatprep.subr.mxu0 0.0
    %2141 = vmatpush2.msra.mxu0 0.0
    %2142 = vmatprep.subr.mxu0 0.0
    %2143 = vmatpush2.msra.mxu0 0.0
    %2144 = vmatprep.subr.mxu0 0.0
    %2145 = vmatpush2.msra.mxu0 0.0
    %2146 = vmatprep.mubr.f32.mxu0 0.0
    %2147 = vmatmul.mubr.f32.gmra.mxu0 %v2068
    %v2148 = vpop.f32.mrf.mxu0
    %v2149 = vadd.f32 %v2049, %v2148
    %v2150 = vpop.f32.mrf.mxu0
    %2151 = vmatprep.mubr.f32.mxu0 0.0
    %2152 = vmatmul.mubr.f32.gmra.mxu0 %v2071
    %v2153 = vpop.f32.mrf.mxu0
    %v2154 = vadd.f32 %v2054, %v2153
    %v2155 = vpop.f32.mrf.mxu0
    %2156 = vmatprep.mubr.f32.mxu0 0.0
    %2157 = vmatmul.mubr.f32.gmra.mxu0 %v2074
    %v2158 = vpop.f32.mrf.mxu0
    %v2159 = vadd.f32 %v2059, %v2158
    %v2160 = vpop.f32.mrf.mxu0
    %2161 = vmatprep.mubr.f32.mxu0 0.0
    %2162 = vmatmul.mubr.f32.gmra.mxu0 %v2077
    %v2163 = vpop.f32.mrf.mxu0
    %v2164 = vadd.f32 %v2064, %v2163
    %v2165 = vpop.f32.mrf.mxu0
    %2166 = vdwg.mxu0
    %v2167 = vmax.f32 %v2149, 0.0
    %v2168 = vmax.f32 %v2154, 0.0
    %v2169 = vmax.f32 %v2159, 0.0
    %v2170 = vmax.f32 %v2164, 0.0
    %v2171 = vld [vmem:[#allocation2 + $0x1c8] sm:$0xff]
    %v2172 = vld [vmem:[#allocation2 + $0x1d0] sm:$0xff]
    %v2173 = vld [vmem:[#allocation2 + $0x1d8] sm:$0xff]
    %v2174 = vld [vmem:[#allocation2 + $0x1e0] sm:$0xff]
    %v2175 = vld [vmem:[#allocation4 + $0x1c8] sm:$0xff]
    %v2176 = vld [vmem:[#allocation4 + $0x1d0] sm:$0xff]
    %v2177 = vld [vmem:[#allocation4 + $0x1d8] sm:$0xff]
    %v2178 = vld [vmem:[#allocation4 + $0x1e0] sm:$0xff]
    %2180 = vset.pattern.permute.xlu0 0
    %2181 = vperm.xlu0 %2180, %v2175
    %v2182 = vpop.permute.xlu0 %2181
    %2185 = vset.pattern.permute.xlu0 0
    %2186 = vperm.xlu0 %2185, %v2176
    %v2187 = vpop.permute.xlu0 %2186
    %2190 = vset.pattern.permute.xlu0 0
    %2191 = vperm.xlu0 %2190, %v2177
    %v2192 = vpop.permute.xlu0 %2191
    %2195 = vset.pattern.permute.xlu0 0
    %2196 = vperm.xlu0 %2195, %v2178
    %v2197 = vpop.permute.xlu0 %2196
    %v2200 = vsel %vm207, %v2171, 0
    %v2203 = vsel %vm207, %v2172, 0
    %v2206 = vsel %vm207, %v2173, 0
    %v2209 = vsel %vm207, %v2174, 0
    %2211 = vmatprep.subr.mxu0 0.0
    %2212 = vmatpush1.msra.mxu0 0.0
    %2213 = vmatprep.subr.mxu0 0.0
    %2214 = vmatpush1.msra.mxu0 0.0
    %2215 = vmatprep.subr.mxu0 0.0
    %2216 = vmatpush1.msra.mxu0 0.0
    %2217 = vmatprep.subr.mxu0 0.0
    %2218 = vmatpush1.msra.mxu0 0.0
    %2219 = vmatprep.subr.mxu0 0.0
    %2220 = vmatpush1.msra.mxu0 0.0
    %2221 = vmatprep.subr.mxu0 0.0
    %2222 = vmatpush1.msra.mxu0 0.0
    %2223 = vmatprep.subr.mxu0 0.0
    %2224 = vmatpush1.msra.mxu0 0.0
    %2225 = vmatprep.subr.mxu0 0.0
    %2226 = vmatpush1.msra.mxu0 0.0
    %2227 = vmatprep.subr.mxu0 0.0
    %2228 = vmatpush1.msra.mxu0 0.0
    %2229 = vmatprep.subr.mxu0 0.0
    %2230 = vmatpush1.msra.mxu0 0.0
    %2231 = vmatprep.subr.mxu0 0.0
    %2232 = vmatpush1.msra.mxu0 0.0
    %2233 = vmatprep.subr.mxu0 0.0
    %2234 = vmatpush1.msra.mxu0 0.0
    %2235 = vmatprep.subr.mxu0 0.0
    %2236 = vmatpush1.msra.mxu0 %v2170
    %2237 = vmatprep.subr.mxu0 0.0
    %2238 = vmatpush1.msra.mxu0 %v2169
    %2239 = vmatprep.subr.mxu0 0.0
    %2240 = vmatpush1.msra.mxu0 %v2168
    %2241 = vmatprep.subr.mxu0 0.0
    %2242 = vmatpush1.msra.mxu0 %v2167
    %2243 = vmatprep.subr.mxu0 0.0
    %2244 = vmatpush2.msra.mxu0 0.0
    %2245 = vmatprep.subr.mxu0 0.0
    %2246 = vmatpush2.msra.mxu0 0.0
    %2247 = vmatprep.subr.mxu0 0.0
    %2248 = vmatpush2.msra.mxu0 0.0
    %2249 = vmatprep.subr.mxu0 0.0
    %2250 = vmatpush2.msra.mxu0 0.0
    %2251 = vmatprep.subr.mxu0 0.0
    %2252 = vmatpush2.msra.mxu0 0.0
    %2253 = vmatprep.subr.mxu0 0.0
    %2254 = vmatpush2.msra.mxu0 0.0
    %2255 = vmatprep.subr.mxu0 0.0
    %2256 = vmatpush2.msra.mxu0 0.0
    %2257 = vmatprep.subr.mxu0 0.0
    %2258 = vmatpush2.msra.mxu0 0.0
    %2259 = vmatprep.subr.mxu0 0.0
    %2260 = vmatpush2.msra.mxu0 0.0
    %2261 = vmatprep.subr.mxu0 0.0
    %2262 = vmatpush2.msra.mxu0 0.0
    %2263 = vmatprep.subr.mxu0 0.0
    %2264 = vmatpush2.msra.mxu0 0.0
    %2265 = vmatprep.subr.mxu0 0.0
    %2266 = vmatpush2.msra.mxu0 0.0
    %2267 = vmatprep.subr.mxu0 0.0
    %2268 = vmatpush2.msra.mxu0 0.0
    %2269 = vmatprep.subr.mxu0 0.0
    %2270 = vmatpush2.msra.mxu0 0.0
    %2271 = vmatprep.subr.mxu0 0.0
    %2272 = vmatpush2.msra.mxu0 0.0
    %2273 = vmatprep.subr.mxu0 0.0
    %2274 = vmatpush2.msra.mxu0 0.0
    %2275 = vmatprep.mubr.f32.mxu0 0.0
    %2276 = vmatmul.mubr.f32.gmra.mxu0 %v2200
    %v2277 = vpop.f32.mrf.mxu0
    %v2278 = vadd.f32 %v2182, %v2277
    %v2279 = vpop.f32.mrf.mxu0
    %2280 = vmatprep.mubr.f32.mxu0 0.0
    %2281 = vmatmul.mubr.f32.gmra.mxu0 %v2203
    %v2282 = vpop.f32.mrf.mxu0
    %v2283 = vadd.f32 %v2187, %v2282
    %v2284 = vpop.f32.mrf.mxu0
    %2285 = vmatprep.mubr.f32.mxu0 0.0
    %2286 = vmatmul.mubr.f32.gmra.mxu0 %v2206
    %v2287 = vpop.f32.mrf.mxu0
    %v2288 = vadd.f32 %v2192, %v2287
    %v2289 = vpop.f32.mrf.mxu0
    %2290 = vmatprep.mubr.f32.mxu0 0.0
    %2291 = vmatmul.mubr.f32.gmra.mxu0 %v2209
    %v2292 = vpop.f32.mrf.mxu0
    %v2293 = vadd.f32 %v2197, %v2292
    %v2294 = vpop.f32.mrf.mxu0
    %2295 = vdwg.mxu0
    %v2296 = vmax.f32 %v2278, 0.0
    %v2297 = vmax.f32 %v2283, 0.0
    %v2298 = vmax.f32 %v2288, 0.0
    %v2299 = vmax.f32 %v2293, 0.0
    %v2300 = vld [vmem:[#allocation2 + $0x1e8] sm:$0xff]
    %v2301 = vld [vmem:[#allocation4 + $0x1e8] sm:$0xff]
    %2303 = vset.pattern.permute.xlu0 0
    %2304 = vperm.xlu0 %2303, %v2301
    %v2305 = vpop.permute.xlu0 %2304
    %v2308 = vsel %vm207, %v2300, 0
    %2310 = vmatprep.subr.mxu0 0.0
    %2311 = vmatpush1.msra.mxu0 0.0
    %2312 = vmatprep.subr.mxu0 0.0
    %2313 = vmatpush1.msra.mxu0 0.0
    %2314 = vmatprep.subr.mxu0 0.0
    %2315 = vmatpush1.msra.mxu0 0.0
    %2316 = vmatprep.subr.mxu0 0.0
    %2317 = vmatpush1.msra.mxu0 0.0
    %2318 = vmatprep.subr.mxu0 0.0
    %2319 = vmatpush1.msra.mxu0 0.0
    %2320 = vmatprep.subr.mxu0 0.0
    %2321 = vmatpush1.msra.mxu0 0.0
    %2322 = vmatprep.subr.mxu0 0.0
    %2323 = vmatpush1.msra.mxu0 0.0
    %2324 = vmatprep.subr.mxu0 0.0
    %2325 = vmatpush1.msra.mxu0 0.0
    %2326 = vmatprep.subr.mxu0 0.0
    %2327 = vmatpush1.msra.mxu0 0.0
    %2328 = vmatprep.subr.mxu0 0.0
    %2329 = vmatpush1.msra.mxu0 0.0
    %2330 = vmatprep.subr.mxu0 0.0
    %2331 = vmatpush1.msra.mxu0 0.0
    %2332 = vmatprep.subr.mxu0 0.0
    %2333 = vmatpush1.msra.mxu0 0.0
    %2334 = vmatprep.subr.mxu0 0.0
    %2335 = vmatpush1.msra.mxu0 %v2299
    %2336 = vmatprep.subr.mxu0 0.0
    %2337 = vmatpush1.msra.mxu0 %v2298
    %2338 = vmatprep.subr.mxu0 0.0
    %2339 = vmatpush1.msra.mxu0 %v2297
    %2340 = vmatprep.subr.mxu0 0.0
    %2341 = vmatpush1.msra.mxu0 %v2296
    %2342 = vmatprep.subr.mxu0 0.0
    %2343 = vmatpush2.msra.mxu0 0.0
    %2344 = vmatprep.subr.mxu0 0.0
    %2345 = vmatpush2.msra.mxu0 0.0
    %2346 = vmatprep.subr.mxu0 0.0
    %2347 = vmatpush2.msra.mxu0 0.0
    %2348 = vmatprep.subr.mxu0 0.0
    %2349 = vmatpush2.msra.mxu0 0.0
    %2350 = vmatprep.subr.mxu0 0.0
    %2351 = vmatpush2.msra.mxu0 0.0
    %2352 = vmatprep.subr.mxu0 0.0
    %2353 = vmatpush2.msra.mxu0 0.0
    %2354 = vmatprep.subr.mxu0 0.0
    %2355 = vmatpush2.msra.mxu0 0.0
    %2356 = vmatprep.subr.mxu0 0.0
    %2357 = vmatpush2.msra.mxu0 0.0
    %2358 = vmatprep.subr.mxu0 0.0
    %2359 = vmatpush2.msra.mxu0 0.0
    %2360 = vmatprep.subr.mxu0 0.0
    %2361 = vmatpush2.msra.mxu0 0.0
    %2362 = vmatprep.subr.mxu0 0.0
    %2363 = vmatpush2.msra.mxu0 0.0
    %2364 = vmatprep.subr.mxu0 0.0
    %2365 = vmatpush2.msra.mxu0 0.0
    %2366 = vmatprep.subr.mxu0 0.0
    %2367 = vmatpush2.msra.mxu0 0.0
    %2368 = vmatprep.subr.mxu0 0.0
    %2369 = vmatpush2.msra.mxu0 0.0
    %2370 = vmatprep.subr.mxu0 0.0
    %2371 = vmatpush2.msra.mxu0 0.0
    %2372 = vmatprep.subr.mxu0 0.0
    %2373 = vmatpush2.msra.mxu0 0.0
    %2374 = vmatprep.mubr.f32.mxu0 0.0
    %2375 = vmatmul.mubr.f32.gmra.mxu0 %v2308
    %v2376 = vpop.f32.mrf.mxu0
    %v2377 = vadd.f32 %v2305, %v2376
    %v2378 = vpop.f32.mrf.mxu0
    %2379 = vdwg.mxu0
    %vm2380 = vcmp.lt.f32.partialorder %v2377, 0.0
    %v2381 = vsel %vm2380, -1.0, 1.0
    %v2382 = vand.u32 2147483647, %v2377
    %vm2383 = vcmp.gt.f32.partialorder %v2382, 2.4142137
    %vm2384 = vcmp.gt.f32.partialorder %v2382, 0.41421357
    %vm2385 = vmxor %vm2383, 1
    %vm2386 = vmand %vm2384, %vm2385
    %v2387 = vsub.f32 %v2382, 1.0
    %v2388 = vsel %vm2386, %v2387, %v2382
    %v2389 = vsel %vm2383, -1.0, %v2388
    %v2390 = vadd.f32 %v2382, 1e-30
    %v2391 = vadd.f32 %v2382, 1.0
    %v2392 = vsel %vm2386, %v2391, 1.0
    %v2393 = vsel %vm2383, %v2390, %v2392
    %v2394 = vrcp.pop %v2393
    %v2395 = vmul.f32 %v2389, %v2394
    %v2396 = vsel %vm2386, 0.7853982, 0.0
    %v2397 = vsel %vm2383, 1.5707964, %v2396
    %v2398 = vmul.f32 %v2395, %v2395
    %v2399 = vmul.f32 %v2398, 0.080537446
    %v2400 = vsub.f32 %v2399, 0.13877685
    %v2401 = vmul.f32 %v2400, %v2398
    %v2402 = vadd.f32 %v2401, 0.19977711
    %v2403 = vmul.f32 %v2402, %v2398
    %v2404 = vsub.f32 %v2403, 0.3333295
    %v2405 = vmul.f32 %v2404, %v2398
    %v2406 = vmul.f32 %v2405, %v2395
    %v2407 = vadd.f32 %v2397, %v2406
    %v2408 = vadd.f32 %v2407, %v2395
    %v2409 = vmul.f32 %v2381, %v2408
    %v2410 = vmul.f32 %v2409, 1.272
    %v2411 = vmul.f32 %v2410, 1.442695
    %v2412 = vpow.pop %v2411
    %v2414 = vmul.f32 %v2412, %v1579
    %v2416 = vrot.slane %v2377, 4
    %v2418 = vadd.f32 %v2414, %v2416
    %v2419 = vsel %vm535, %v2410, 0.0
    %v2420 = vrot.slane %v2419, 4
    %v2421 = vadd.f32 %v2419, %v2420
    %v2422 = vrot.slane %v2421, 2
    %v2423 = vadd.f32 %v2421, %v2422
    %v2424 = vrot.slane %v2423, 1
    %v2425 = vadd.f32 %v2423, %v2424
    %v2426 = vadd.f32 %v1937, %v2425
    %v2428 = vrot.slane %v2418, 4
    %v2430 = vsel %vm535, %v1929, %v2428
    %v2431 = vld [vmem:[#allocation2 + $0x1f0] sm:$0xff]
    %v2433 = vsel %vm422, %v2431, 0
    %2435 = vmatprep.subr.mxu0 0.0
    %2436 = vmatpush1.msra.mxu0 0.0
    %2437 = vmatprep.subr.mxu0 0.0
    %2438 = vmatpush1.msra.mxu0 0.0
    %2439 = vmatprep.subr.mxu0 0.0
    %2440 = vmatpush1.msra.mxu0 0.0
    %2441 = vmatprep.subr.mxu0 0.0
    %2442 = vmatpush1.msra.mxu0 0.0
    %2443 = vmatprep.subr.mxu0 0.0
    %2444 = vmatpush1.msra.mxu0 0.0
    %2445 = vmatprep.subr.mxu0 0.0
    %2446 = vmatpush1.msra.mxu0 0.0
    %2447 = vmatprep.subr.mxu0 0.0
    %2448 = vmatpush1.msra.mxu0 0.0
    %2449 = vmatprep.subr.mxu0 0.0
    %2450 = vmatpush1.msra.mxu0 0.0
    %2451 = vmatprep.subr.mxu0 0.0
    %2452 = vmatpush1.msra.mxu0 0.0
    %2453 = vmatprep.subr.mxu0 0.0
    %2454 = vmatpush1.msra.mxu0 0.0
    %2455 = vmatprep.subr.mxu0 0.0
    %2456 = vmatpush1.msra.mxu0 0.0
    %2457 = vmatprep.subr.mxu0 0.0
    %2458 = vmatpush1.msra.mxu0 0.0
    %2459 = vmatprep.subr.mxu0 0.0
    %2460 = vmatpush1.msra.mxu0 0.0
    %2461 = vmatprep.subr.mxu0 0.0
    %2462 = vmatpush1.msra.mxu0 0.0
    %2463 = vmatprep.subr.mxu0 0.0
    %2464 = vmatpush1.msra.mxu0 0.0
    %2465 = vmatprep.subr.mxu0 0.0
    %2466 = vmatpush1.msra.mxu0 %v2430
    %2467 = vmatprep.subr.mxu0 0.0
    %2468 = vmatpush2.msra.mxu0 0.0
    %2469 = vmatprep.subr.mxu0 0.0
    %2470 = vmatpush2.msra.mxu0 0.0
    %2471 = vmatprep.subr.mxu0 0.0
    %2472 = vmatpush2.msra.mxu0 0.0
    %2473 = vmatprep.subr.mxu0 0.0
    %2474 = vmatpush2.msra.mxu0 0.0
    %2475 = vmatprep.subr.mxu0 0.0
    %2476 = vmatpush2.msra.mxu0 0.0
    %2477 = vmatprep.subr.mxu0 0.0
    %2478 = vmatpush2.msra.mxu0 0.0
    %2479 = vmatprep.subr.mxu0 0.0
    %2480 = vmatpush2.msra.mxu0 0.0
    %2481 = vmatprep.subr.mxu0 0.0
    %2482 = vmatpush2.msra.mxu0 0.0
    %2483 = vmatprep.subr.mxu0 0.0
    %2484 = vmatpush2.msra.mxu0 0.0
    %2485 = vmatprep.subr.mxu0 0.0
    %2486 = vmatpush2.msra.mxu0 0.0
    %2487 = vmatprep.subr.mxu0 0.0
    %2488 = vmatpush2.msra.mxu0 0.0
    %2489 = vmatprep.subr.mxu0 0.0
    %2490 = vmatpush2.msra.mxu0 0.0
    %2491 = vmatprep.subr.mxu0 0.0
    %2492 = vmatpush2.msra.mxu0 0.0
    %2493 = vmatprep.subr.mxu0 0.0
    %2494 = vmatpush2.msra.mxu0 0.0
    %2495 = vmatprep.subr.mxu0 0.0
    %2496 = vmatpush2.msra.mxu0 0.0
    %2497 = vmatprep.subr.mxu0 0.0
    %2498 = vmatpush2.msra.mxu0 0.0
    %2499 = vmatprep.mubr.f32.mxu0 0.0
    %2500 = vmatmul.mubr.f32.gmra.mxu0 %v2433
    %v2501 = vpop.f32.mrf.mxu0
    %v2502 = vadd.f32 0.0, %v2501
    %v2503 = vpop.f32.mrf.mxu0
    %2504 = vdwg.mxu0
    %v2505 = vld [vmem:[#allocation2 + $0x1f8] sm:$0xff]
    %v2506 = vld [vmem:[#allocation2 + $0x200] sm:$0xff]
    %v2507 = vld [vmem:[#allocation2 + $0x208] sm:$0xff]
    %v2508 = vld [vmem:[#allocation2 + $0x210] sm:$0xff]
    %v2509 = vld [vmem:[#allocation2 + $0x218] sm:$0xff]
    %v2510 = vld [vmem:[#allocation2 + $0x220] sm:$0xff]
    %v2511 = vld [vmem:[#allocation2 + $0x228] sm:$0xff]
    %v2512 = vld [vmem:[#allocation2 + $0x230] sm:$0xff]
    %v2513 = vld [vmem:[#allocation4 + $0x218] sm:$0xff]
    %v2514 = vld [vmem:[#allocation4 + $0x220] sm:$0xff]
    %v2515 = vld [vmem:[#allocation4 + $0x228] sm:$0xff]
    %v2516 = vld [vmem:[#allocation4 + $0x230] sm:$0xff]
    %2518 = vset.pattern.permute.xlu0 0
    %2519 = vperm.xlu0 %2518, %v2513
    %v2520 = vpop.permute.xlu0 %2519
    %2523 = vset.pattern.permute.xlu0 0
    %2524 = vperm.xlu0 %2523, %v2514
    %v2525 = vpop.permute.xlu0 %2524
    %2528 = vset.pattern.permute.xlu0 0
    %2529 = vperm.xlu0 %2528, %v2515
    %v2530 = vpop.permute.xlu0 %2529
    %2533 = vset.pattern.permute.xlu0 0
    %2534 = vperm.xlu0 %2533, %v2516
    %v2535 = vpop.permute.xlu0 %2534
    %v2538 = vsel %vm422, %v2509, 0
    %v2541 = vsel %vm422, %v2510, 0
    %v2544 = vsel %vm422, %v2511, 0
    %v2547 = vsel %vm422, %v2512, 0
    %2549 = vmatprep.subr.mxu0 0.0
    %2550 = vmatpush1.msra.mxu0 0.0
    %2551 = vmatprep.subr.mxu0 0.0
    %2552 = vmatpush1.msra.mxu0 0.0
    %2553 = vmatprep.subr.mxu0 0.0
    %2554 = vmatpush1.msra.mxu0 0.0
    %2555 = vmatprep.subr.mxu0 0.0
    %2556 = vmatpush1.msra.mxu0 0.0
    %2557 = vmatprep.subr.mxu0 0.0
    %2558 = vmatpush1.msra.mxu0 0.0
    %2559 = vmatprep.subr.mxu0 0.0
    %2560 = vmatpush1.msra.mxu0 0.0
    %2561 = vmatprep.subr.mxu0 0.0
    %2562 = vmatpush1.msra.mxu0 0.0
    %2563 = vmatprep.subr.mxu0 0.0
    %2564 = vmatpush1.msra.mxu0 0.0
    %2565 = vmatprep.subr.mxu0 0.0
    %2566 = vmatpush1.msra.mxu0 0.0
    %2567 = vmatprep.subr.mxu0 0.0
    %2568 = vmatpush1.msra.mxu0 0.0
    %2569 = vmatprep.subr.mxu0 0.0
    %2570 = vmatpush1.msra.mxu0 0.0
    %2571 = vmatprep.subr.mxu0 0.0
    %2572 = vmatpush1.msra.mxu0 0.0
    %2573 = vmatprep.subr.mxu0 0.0
    %2574 = vmatpush1.msra.mxu0 0.0
    %2575 = vmatprep.subr.mxu0 0.0
    %2576 = vmatpush1.msra.mxu0 0.0
    %2577 = vmatprep.subr.mxu0 0.0
    %2578 = vmatpush1.msra.mxu0 0.0
    %2579 = vmatprep.subr.mxu0 0.0
    %2580 = vmatpush1.msra.mxu0 %v386
    %2581 = vmatprep.subr.mxu0 0.0
    %2582 = vmatpush2.msra.mxu0 0.0
    %2583 = vmatprep.subr.mxu0 0.0
    %2584 = vmatpush2.msra.mxu0 0.0
    %2585 = vmatprep.subr.mxu0 0.0
    %2586 = vmatpush2.msra.mxu0 0.0
    %2587 = vmatprep.subr.mxu0 0.0
    %2588 = vmatpush2.msra.mxu0 0.0
    %2589 = vmatprep.subr.mxu0 0.0
    %2590 = vmatpush2.msra.mxu0 0.0
    %2591 = vmatprep.subr.mxu0 0.0
    %2592 = vmatpush2.msra.mxu0 0.0
    %2593 = vmatprep.subr.mxu0 0.0
    %2594 = vmatpush2.msra.mxu0 0.0
    %2595 = vmatprep.subr.mxu0 0.0
    %2596 = vmatpush2.msra.mxu0 0.0
    %2597 = vmatprep.subr.mxu0 0.0
    %2598 = vmatpush2.msra.mxu0 0.0
    %2599 = vmatprep.subr.mxu0 0.0
    %2600 = vmatpush2.msra.mxu0 0.0
    %2601 = vmatprep.subr.mxu0 0.0
    %2602 = vmatpush2.msra.mxu0 0.0
    %2603 = vmatprep.subr.mxu0 0.0
    %2604 = vmatpush2.msra.mxu0 0.0
    %2605 = vmatprep.subr.mxu0 0.0
    %2606 = vmatpush2.msra.mxu0 0.0
    %2607 = vmatprep.subr.mxu0 0.0
    %2608 = vmatpush2.msra.mxu0 0.0
    %2609 = vmatprep.subr.mxu0 0.0
    %2610 = vmatpush2.msra.mxu0 0.0
    %2611 = vmatprep.subr.mxu0 0.0
    %2612 = vmatpush2.msra.mxu0 0.0
    %2613 = vmatprep.mubr.f32.mxu0 0.0
    %2614 = vmatmul.mubr.f32.gmra.mxu0 %v2538
    %v2615 = vpop.f32.mrf.mxu0
    %v2616 = vadd.f32 %v2520, %v2615
    %v2617 = vpop.f32.mrf.mxu0
    %2618 = vmatprep.mubr.f32.mxu0 0.0
    %2619 = vmatmul.mubr.f32.gmra.mxu0 %v2541
    %v2620 = vpop.f32.mrf.mxu0
    %v2621 = vadd.f32 %v2525, %v2620
    %v2622 = vpop.f32.mrf.mxu0
    %2623 = vmatprep.mubr.f32.mxu0 0.0
    %2624 = vmatmul.mubr.f32.gmra.mxu0 %v2544
    %v2625 = vpop.f32.mrf.mxu0
    %v2626 = vadd.f32 %v2530, %v2625
    %v2627 = vpop.f32.mrf.mxu0
    %2628 = vmatprep.mubr.f32.mxu0 0.0
    %2629 = vmatmul.mubr.f32.gmra.mxu0 %v2547
    %v2630 = vpop.f32.mrf.mxu0
    %v2631 = vadd.f32 %v2535, %v2630
    %v2632 = vpop.f32.mrf.mxu0
    %2633 = vdwg.mxu0
    %v2635 = vrot.slane %v2502, 4
    %v2637 = vsel %vm522, %v2505, 0
    %v2640 = vsel %vm522, %v2506, 0
    %v2643 = vsel %vm522, %v2507, 0
    %v2646 = vsel %vm522, %v2508, 0
    %v2648 = vsel %vm535, %v2635, 0
    %2650 = vmatprep.subr.mxu0 0.0
    %2651 = vmatpush1.msra.mxu0 0.0
    %2652 = vmatprep.subr.mxu0 0.0
    %2653 = vmatpush1.msra.mxu0 0.0
    %2654 = vmatprep.subr.mxu0 0.0
    %2655 = vmatpush1.msra.mxu0 0.0
    %2656 = vmatprep.subr.mxu0 0.0
    %2657 = vmatpush1.msra.mxu0 0.0
    %2658 = vmatprep.subr.mxu0 0.0
    %2659 = vmatpush1.msra.mxu0 0.0
    %2660 = vmatprep.subr.mxu0 0.0
    %2661 = vmatpush1.msra.mxu0 0.0
    %2662 = vmatprep.subr.mxu0 0.0
    %2663 = vmatpush1.msra.mxu0 0.0
    %2664 = vmatprep.subr.mxu0 0.0
    %2665 = vmatpush1.msra.mxu0 0.0
    %2666 = vmatprep.subr.mxu0 0.0
    %2667 = vmatpush1.msra.mxu0 0.0
    %2668 = vmatprep.subr.mxu0 0.0
    %2669 = vmatpush1.msra.mxu0 0.0
    %2670 = vmatprep.subr.mxu0 0.0
    %2671 = vmatpush1.msra.mxu0 0.0
    %2672 = vmatprep.subr.mxu0 0.0
    %2673 = vmatpush1.msra.mxu0 0.0
    %2674 = vmatprep.subr.mxu0 0.0
    %2675 = vmatpush1.msra.mxu0 0.0
    %2676 = vmatprep.subr.mxu0 0.0
    %2677 = vmatpush1.msra.mxu0 0.0
    %2678 = vmatprep.subr.mxu0 0.0
    %2679 = vmatpush1.msra.mxu0 0.0
    %2680 = vmatprep.subr.mxu0 0.0
    %2681 = vmatpush1.msra.mxu0 %v2648
    %2682 = vmatprep.subr.mxu0 0.0
    %2683 = vmatpush2.msra.mxu0 0.0
    %2684 = vmatprep.subr.mxu0 0.0
    %2685 = vmatpush2.msra.mxu0 0.0
    %2686 = vmatprep.subr.mxu0 0.0
    %2687 = vmatpush2.msra.mxu0 0.0
    %2688 = vmatprep.subr.mxu0 0.0
    %2689 = vmatpush2.msra.mxu0 0.0
    %2690 = vmatprep.subr.mxu0 0.0
    %2691 = vmatpush2.msra.mxu0 0.0
    %2692 = vmatprep.subr.mxu0 0.0
    %2693 = vmatpush2.msra.mxu0 0.0
    %2694 = vmatprep.subr.mxu0 0.0
    %2695 = vmatpush2.msra.mxu0 0.0
    %2696 = vmatprep.subr.mxu0 0.0
    %2697 = vmatpush2.msra.mxu0 0.0
    %2698 = vmatprep.subr.mxu0 0.0
    %2699 = vmatpush2.msra.mxu0 0.0
    %2700 = vmatprep.subr.mxu0 0.0
    %2701 = vmatpush2.msra.mxu0 0.0
    %2702 = vmatprep.subr.mxu0 0.0
    %2703 = vmatpush2.msra.mxu0 0.0
    %2704 = vmatprep.subr.mxu0 0.0
    %2705 = vmatpush2.msra.mxu0 0.0
    %2706 = vmatprep.subr.mxu0 0.0
    %2707 = vmatpush2.msra.mxu0 0.0
    %2708 = vmatprep.subr.mxu0 0.0
    %2709 = vmatpush2.msra.mxu0 0.0
    %2710 = vmatprep.subr.mxu0 0.0
    %2711 = vmatpush2.msra.mxu0 0.0
    %2712 = vmatprep.subr.mxu0 0.0
    %2713 = vmatpush2.msra.mxu0 0.0
    %2714 = vmatprep.mubr.f32.mxu0 0.0
    %2715 = vmatmul.mubr.f32.gmra.mxu0 %v2637
    %v2716 = vpop.f32.mrf.mxu0
    %v2717 = vadd.f32 %v2616, %v2716
    %v2718 = vpop.f32.mrf.mxu0
    %2719 = vmatprep.mubr.f32.mxu0 0.0
    %2720 = vmatmul.mubr.f32.gmra.mxu0 %v2640
    %v2721 = vpop.f32.mrf.mxu0
    %v2722 = vadd.f32 %v2621, %v2721
    %v2723 = vpop.f32.mrf.mxu0
    %2724 = vmatprep.mubr.f32.mxu0 0.0
    %2725 = vmatmul.mubr.f32.gmra.mxu0 %v2643
    %v2726 = vpop.f32.mrf.mxu0
    %v2727 = vadd.f32 %v2626, %v2726
    %v2728 = vpop.f32.mrf.mxu0
    %2729 = vmatprep.mubr.f32.mxu0 0.0
    %2730 = vmatmul.mubr.f32.gmra.mxu0 %v2646
    %v2731 = vpop.f32.mrf.mxu0
    %v2732 = vadd.f32 %v2631, %v2731
    %v2733 = vpop.f32.mrf.mxu0
    %2734 = vdwg.mxu0
    %v2735 = vmax.f32 %v2717, 0.0
    %v2736 = vmax.f32 %v2722, 0.0
    %v2737 = vmax.f32 %v2727, 0.0
    %v2738 = vmax.f32 %v2732, 0.0
    %v2739 = vld [vmem:[#allocation2 + $0x238] sm:$0xff]
    %v2740 = vld [vmem:[#allocation2 + $0x240] sm:$0xff]
    %v2741 = vld [vmem:[#allocation2 + $0x248] sm:$0xff]
    %v2742 = vld [vmem:[#allocation2 + $0x250] sm:$0xff]
    %v2743 = vld [vmem:[#allocation4 + $0x238] sm:$0xff]
    %v2744 = vld [vmem:[#allocation4 + $0x240] sm:$0xff]
    %v2745 = vld [vmem:[#allocation4 + $0x248] sm:$0xff]
    %v2746 = vld [vmem:[#allocation4 + $0x250] sm:$0xff]
    %2748 = vset.pattern.permute.xlu0 0
    %2749 = vperm.xlu0 %2748, %v2743
    %v2750 = vpop.permute.xlu0 %2749
    %2753 = vset.pattern.permute.xlu0 0
    %2754 = vperm.xlu0 %2753, %v2744
    %v2755 = vpop.permute.xlu0 %2754
    %2758 = vset.pattern.permute.xlu0 0
    %2759 = vperm.xlu0 %2758, %v2745
    %v2760 = vpop.permute.xlu0 %2759
    %2763 = vset.pattern.permute.xlu0 0
    %2764 = vperm.xlu0 %2763, %v2746
    %v2765 = vpop.permute.xlu0 %2764
    %v2768 = vsel %vm207, %v2739, 0
    %v2771 = vsel %vm207, %v2740, 0
    %v2774 = vsel %vm207, %v2741, 0
    %v2777 = vsel %vm207, %v2742, 0
    %2779 = vmatprep.subr.mxu0 0.0
    %2780 = vmatpush1.msra.mxu0 0.0
    %2781 = vmatprep.subr.mxu0 0.0
    %2782 = vmatpush1.msra.mxu0 0.0
    %2783 = vmatprep.subr.mxu0 0.0
    %2784 = vmatpush1.msra.mxu0 0.0
    %2785 = vmatprep.subr.mxu0 0.0
    %2786 = vmatpush1.msra.mxu0 0.0
    %2787 = vmatprep.subr.mxu0 0.0
    %2788 = vmatpush1.msra.mxu0 0.0
    %2789 = vmatprep.subr.mxu0 0.0
    %2790 = vmatpush1.msra.mxu0 0.0
    %2791 = vmatprep.subr.mxu0 0.0
    %2792 = vmatpush1.msra.mxu0 0.0
    %2793 = vmatprep.subr.mxu0 0.0
    %2794 = vmatpush1.msra.mxu0 0.0
    %2795 = vmatprep.subr.mxu0 0.0
    %2796 = vmatpush1.msra.mxu0 0.0
    %2797 = vmatprep.subr.mxu0 0.0
    %2798 = vmatpush1.msra.mxu0 0.0
    %2799 = vmatprep.subr.mxu0 0.0
    %2800 = vmatpush1.msra.mxu0 0.0
    %2801 = vmatprep.subr.mxu0 0.0
    %2802 = vmatpush1.msra.mxu0 0.0
    %2803 = vmatprep.subr.mxu0 0.0
    %2804 = vmatpush1.msra.mxu0 %v2738
    %2805 = vmatprep.subr.mxu0 0.0
    %2806 = vmatpush1.msra.mxu0 %v2737
    %2807 = vmatprep.subr.mxu0 0.0
    %2808 = vmatpush1.msra.mxu0 %v2736
    %2809 = vmatprep.subr.mxu0 0.0
    %2810 = vmatpush1.msra.mxu0 %v2735
    %2811 = vmatprep.subr.mxu0 0.0
    %2812 = vmatpush2.msra.mxu0 0.0
    %2813 = vmatprep.subr.mxu0 0.0
    %2814 = vmatpush2.msra.mxu0 0.0
    %2815 = vmatprep.subr.mxu0 0.0
    %2816 = vmatpush2.msra.mxu0 0.0
    %2817 = vmatprep.subr.mxu0 0.0
    %2818 = vmatpush2.msra.mxu0 0.0
    %2819 = vmatprep.subr.mxu0 0.0
    %2820 = vmatpush2.msra.mxu0 0.0
    %2821 = vmatprep.subr.mxu0 0.0
    %2822 = vmatpush2.msra.mxu0 0.0
    %2823 = vmatprep.subr.mxu0 0.0
    %2824 = vmatpush2.msra.mxu0 0.0
    %2825 = vmatprep.subr.mxu0 0.0
    %2826 = vmatpush2.msra.mxu0 0.0
    %2827 = vmatprep.subr.mxu0 0.0
    %2828 = vmatpush2.msra.mxu0 0.0
    %2829 = vmatprep.subr.mxu0 0.0
    %2830 = vmatpush2.msra.mxu0 0.0
    %2831 = vmatprep.subr.mxu0 0.0
    %2832 = vmatpush2.msra.mxu0 0.0
    %2833 = vmatprep.subr.mxu0 0.0
    %2834 = vmatpush2.msra.mxu0 0.0
    %2835 = vmatprep.subr.mxu0 0.0
    %2836 = vmatpush2.msra.mxu0 0.0
    %2837 = vmatprep.subr.mxu0 0.0
    %2838 = vmatpush2.msra.mxu0 0.0
    %2839 = vmatprep.subr.mxu0 0.0
    %2840 = vmatpush2.msra.mxu0 0.0
    %2841 = vmatprep.subr.mxu0 0.0
    %2842 = vmatpush2.msra.mxu0 0.0
    %2843 = vmatprep.mubr.f32.mxu0 0.0
    %2844 = vmatmul.mubr.f32.gmra.mxu0 %v2768
    %v2845 = vpop.f32.mrf.mxu0
    %v2846 = vadd.f32 %v2750, %v2845
    %v2847 = vpop.f32.mrf.mxu0
    %2848 = vmatprep.mubr.f32.mxu0 0.0
    %2849 = vmatmul.mubr.f32.gmra.mxu0 %v2771
    %v2850 = vpop.f32.mrf.mxu0
    %v2851 = vadd.f32 %v2755, %v2850
    %v2852 = vpop.f32.mrf.mxu0
    %2853 = vmatprep.mubr.f32.mxu0 0.0
    %2854 = vmatmul.mubr.f32.gmra.mxu0 %v2774
    %v2855 = vpop.f32.mrf.mxu0
    %v2856 = vadd.f32 %v2760, %v2855
    %v2857 = vpop.f32.mrf.mxu0
    %2858 = vmatprep.mubr.f32.mxu0 0.0
    %2859 = vmatmul.mubr.f32.gmra.mxu0 %v2777
    %v2860 = vpop.f32.mrf.mxu0
    %v2861 = vadd.f32 %v2765, %v2860
    %v2862 = vpop.f32.mrf.mxu0
    %2863 = vdwg.mxu0
    %v2864 = vmax.f32 %v2846, 0.0
    %v2865 = vmax.f32 %v2851, 0.0
    %v2866 = vmax.f32 %v2856, 0.0
    %v2867 = vmax.f32 %v2861, 0.0
    %v2868 = vld [vmem:[#allocation2 + $0x258] sm:$0xff]
    %v2869 = vld [vmem:[#allocation4 + $0x258] sm:$0xff]
    %2871 = vset.pattern.permute.xlu0 0
    %2872 = vperm.xlu0 %2871, %v2869
    %v2873 = vpop.permute.xlu0 %2872
    %v2876 = vsel %vm207, %v2868, 0
    %2878 = vmatprep.subr.mxu0 0.0
    %2879 = vmatpush1.msra.mxu0 0.0
    %2880 = vmatprep.subr.mxu0 0.0
    %2881 = vmatpush1.msra.mxu0 0.0
    %2882 = vmatprep.subr.mxu0 0.0
    %2883 = vmatpush1.msra.mxu0 0.0
    %2884 = vmatprep.subr.mxu0 0.0
    %2885 = vmatpush1.msra.mxu0 0.0
    %2886 = vmatprep.subr.mxu0 0.0
    %2887 = vmatpush1.msra.mxu0 0.0
    %2888 = vmatprep.subr.mxu0 0.0
    %2889 = vmatpush1.msra.mxu0 0.0
    %2890 = vmatprep.subr.mxu0 0.0
    %2891 = vmatpush1.msra.mxu0 0.0
    %2892 = vmatprep.subr.mxu0 0.0
    %2893 = vmatpush1.msra.mxu0 0.0
    %2894 = vmatprep.subr.mxu0 0.0
    %2895 = vmatpush1.msra.mxu0 0.0
    %2896 = vmatprep.subr.mxu0 0.0
    %2897 = vmatpush1.msra.mxu0 0.0
    %2898 = vmatprep.subr.mxu0 0.0
    %2899 = vmatpush1.msra.mxu0 0.0
    %2900 = vmatprep.subr.mxu0 0.0
    %2901 = vmatpush1.msra.mxu0 0.0
    %2902 = vmatprep.subr.mxu0 0.0
    %2903 = vmatpush1.msra.mxu0 %v2867
    %2904 = vmatprep.subr.mxu0 0.0
    %2905 = vmatpush1.msra.mxu0 %v2866
    %2906 = vmatprep.subr.mxu0 0.0
    %2907 = vmatpush1.msra.mxu0 %v2865
    %2908 = vmatprep.subr.mxu0 0.0
    %2909 = vmatpush1.msra.mxu0 %v2864
    %2910 = vmatprep.subr.mxu0 0.0
    %2911 = vmatpush2.msra.mxu0 0.0
    %2912 = vmatprep.subr.mxu0 0.0
    %2913 = vmatpush2.msra.mxu0 0.0
    %2914 = vmatprep.subr.mxu0 0.0
    %2915 = vmatpush2.msra.mxu0 0.0
    %2916 = vmatprep.subr.mxu0 0.0
    %2917 = vmatpush2.msra.mxu0 0.0
    %2918 = vmatprep.subr.mxu0 0.0
    %2919 = vmatpush2.msra.mxu0 0.0
    %2920 = vmatprep.subr.mxu0 0.0
    %2921 = vmatpush2.msra.mxu0 0.0
    %2922 = vmatprep.subr.mxu0 0.0
    %2923 = vmatpush2.msra.mxu0 0.0
    %2924 = vmatprep.subr.mxu0 0.0
    %2925 = vmatpush2.msra.mxu0 0.0
    %2926 = vmatprep.subr.mxu0 0.0
    %2927 = vmatpush2.msra.mxu0 0.0
    %2928 = vmatprep.subr.mxu0 0.0
    %2929 = vmatpush2.msra.mxu0 0.0
    %2930 = vmatprep.subr.mxu0 0.0
    %2931 = vmatpush2.msra.mxu0 0.0
    %2932 = vmatprep.subr.mxu0 0.0
    %2933 = vmatpush2.msra.mxu0 0.0
    %2934 = vmatprep.subr.mxu0 0.0
    %2935 = vmatpush2.msra.mxu0 0.0
    %2936 = vmatprep.subr.mxu0 0.0
    %2937 = vmatpush2.msra.mxu0 0.0
    %2938 = vmatprep.subr.mxu0 0.0
    %2939 = vmatpush2.msra.mxu0 0.0
    %2940 = vmatprep.subr.mxu0 0.0
    %2941 = vmatpush2.msra.mxu0 0.0
    %2942 = vmatprep.mubr.f32.mxu0 0.0
    %2943 = vmatmul.mubr.f32.gmra.mxu0 %v2876
    %v2944 = vpop.f32.mrf.mxu0
    %v2945 = vadd.f32 %v2873, %v2944
    %v2946 = vpop.f32.mrf.mxu0
    %2947 = vdwg.mxu0
    %vm2948 = vcmp.lt.f32.partialorder %v2945, 0.0
    %v2949 = vsel %vm2948, -1.0, 1.0
    %v2950 = vand.u32 2147483647, %v2945
    %vm2951 = vcmp.gt.f32.partialorder %v2950, 2.4142137
    %vm2952 = vcmp.gt.f32.partialorder %v2950, 0.41421357
    %vm2953 = vmxor %vm2951, 1
    %vm2954 = vmand %vm2952, %vm2953
    %v2955 = vsub.f32 %v2950, 1.0
    %v2956 = vsel %vm2954, %v2955, %v2950
    %v2957 = vsel %vm2951, -1.0, %v2956
    %v2958 = vadd.f32 %v2950, 1e-30
    %v2959 = vadd.f32 %v2950, 1.0
    %v2960 = vsel %vm2954, %v2959, 1.0
    %v2961 = vsel %vm2951, %v2958, %v2960
    %v2962 = vrcp.pop %v2961
    %v2963 = vmul.f32 %v2957, %v2962
    %v2964 = vsel %vm2954, 0.7853982, 0.0
    %v2965 = vsel %vm2951, 1.5707964, %v2964
    %v2966 = vmul.f32 %v2963, %v2963
    %v2967 = vmul.f32 %v2966, 0.080537446
    %v2968 = vsub.f32 %v2967, 0.13877685
    %v2969 = vmul.f32 %v2968, %v2966
    %v2970 = vadd.f32 %v2969, 0.19977711
    %v2971 = vmul.f32 %v2970, %v2966
    %v2972 = vsub.f32 %v2971, 0.3333295
    %v2973 = vmul.f32 %v2972, %v2966
    %v2974 = vmul.f32 %v2973, %v2963
    %v2975 = vadd.f32 %v2965, %v2974
    %v2976 = vadd.f32 %v2975, %v2963
    %v2977 = vmul.f32 %v2949, %v2976
    %v2978 = vmul.f32 %v2977, 1.272
    %v2979 = vmul.f32 %v2978, 1.442695
    %v2980 = vpow.pop %v2979
    %v2981 = vmul.f32 %v2980, %v2502
    %v2983 = vrot.slane %v2945, 4
    %v2985 = vadd.f32 %v2981, %v2983
    %v2986 = vsel %vm535, %v2978, 0.0
    %v2987 = vrot.slane %v2986, 4
    %v2988 = vadd.f32 %v2986, %v2987
    %v2989 = vrot.slane %v2988, 2
    %v2990 = vadd.f32 %v2988, %v2989
    %v2991 = vrot.slane %v2990, 1
    %v2992 = vadd.f32 %v2990, %v2991
    %v2993 = vadd.f32 %v2426, %v2992
    %v2994 = vld [vmem:[#allocation2 + $0x260] sm:$0xff]
    %v2995 = vld [vmem:[#allocation2 + $0x268] sm:$0xff]
    %v2996 = vld [vmem:[#allocation2 + $0x270] sm:$0xff]
    %v2997 = vld [vmem:[#allocation2 + $0x278] sm:$0xff]
    %v2998 = vld [vmem:[#allocation2 + $0x280] sm:$0xff]
    %v2999 = vld [vmem:[#allocation2 + $0x288] sm:$0xff]
    %v3000 = vld [vmem:[#allocation2 + $0x290] sm:$0xff]
    %v3001 = vld [vmem:[#allocation2 + $0x298] sm:$0xff]
    %v3002 = vld [vmem:[#allocation4 + $0x280] sm:$0xff]
    %v3003 = vld [vmem:[#allocation4 + $0x288] sm:$0xff]
    %v3004 = vld [vmem:[#allocation4 + $0x290] sm:$0xff]
    %v3005 = vld [vmem:[#allocation4 + $0x298] sm:$0xff]
    %3007 = vset.pattern.permute.xlu0 0
    %3008 = vperm.xlu0 %3007, %v3002
    %v3009 = vpop.permute.xlu0 %3008
    %3012 = vset.pattern.permute.xlu0 0
    %3013 = vperm.xlu0 %3012, %v3003
    %v3014 = vpop.permute.xlu0 %3013
    %3017 = vset.pattern.permute.xlu0 0
    %3018 = vperm.xlu0 %3017, %v3004
    %v3019 = vpop.permute.xlu0 %3018
    %3022 = vset.pattern.permute.xlu0 0
    %3023 = vperm.xlu0 %3022, %v3005
    %v3024 = vpop.permute.xlu0 %3023
    %v3027 = vsel %vm422, %v2998, 0
    %v3030 = vsel %vm422, %v2999, 0
    %v3033 = vsel %vm422, %v3000, 0
    %v3036 = vsel %vm422, %v3001, 0
    %3038 = vmatprep.subr.mxu0 0.0
    %3039 = vmatpush1.msra.mxu0 0.0
    %3040 = vmatprep.subr.mxu0 0.0
    %3041 = vmatpush1.msra.mxu0 0.0
    %3042 = vmatprep.subr.mxu0 0.0
    %3043 = vmatpush1.msra.mxu0 0.0
    %3044 = vmatprep.subr.mxu0 0.0
    %3045 = vmatpush1.msra.mxu0 0.0
    %3046 = vmatprep.subr.mxu0 0.0
    %3047 = vmatpush1.msra.mxu0 0.0
    %3048 = vmatprep.subr.mxu0 0.0
    %3049 = vmatpush1.msra.mxu0 0.0
    %3050 = vmatprep.subr.mxu0 0.0
    %3051 = vmatpush1.msra.mxu0 0.0
    %3052 = vmatprep.subr.mxu0 0.0
    %3053 = vmatpush1.msra.mxu0 0.0
    %3054 = vmatprep.subr.mxu0 0.0
    %3055 = vmatpush1.msra.mxu0 0.0
    %3056 = vmatprep.subr.mxu0 0.0
    %3057 = vmatpush1.msra.mxu0 0.0
    %3058 = vmatprep.subr.mxu0 0.0
    %3059 = vmatpush1.msra.mxu0 0.0
    %3060 = vmatprep.subr.mxu0 0.0
    %3061 = vmatpush1.msra.mxu0 0.0
    %3062 = vmatprep.subr.mxu0 0.0
    %3063 = vmatpush1.msra.mxu0 0.0
    %3064 = vmatprep.subr.mxu0 0.0
    %3065 = vmatpush1.msra.mxu0 0.0
    %3066 = vmatprep.subr.mxu0 0.0
    %3067 = vmatpush1.msra.mxu0 0.0
    %3068 = vmatprep.subr.mxu0 0.0
    %3069 = vmatpush1.msra.mxu0 %v386
    %3070 = vmatprep.subr.mxu0 0.0
    %3071 = vmatpush2.msra.mxu0 0.0
    %3072 = vmatprep.subr.mxu0 0.0
    %3073 = vmatpush2.msra.mxu0 0.0
    %3074 = vmatprep.subr.mxu0 0.0
    %3075 = vmatpush2.msra.mxu0 0.0
    %3076 = vmatprep.subr.mxu0 0.0
    %3077 = vmatpush2.msra.mxu0 0.0
    %3078 = vmatprep.subr.mxu0 0.0
    %3079 = vmatpush2.msra.mxu0 0.0
    %3080 = vmatprep.subr.mxu0 0.0
    %3081 = vmatpush2.msra.mxu0 0.0
    %3082 = vmatprep.subr.mxu0 0.0
    %3083 = vmatpush2.msra.mxu0 0.0
    %3084 = vmatprep.subr.mxu0 0.0
    %3085 = vmatpush2.msra.mxu0 0.0
    %3086 = vmatprep.subr.mxu0 0.0
    %3087 = vmatpush2.msra.mxu0 0.0
    %3088 = vmatprep.subr.mxu0 0.0
    %3089 = vmatpush2.msra.mxu0 0.0
    %3090 = vmatprep.subr.mxu0 0.0
    %3091 = vmatpush2.msra.mxu0 0.0
    %3092 = vmatprep.subr.mxu0 0.0
    %3093 = vmatpush2.msra.mxu0 0.0
    %3094 = vmatprep.subr.mxu0 0.0
    %3095 = vmatpush2.msra.mxu0 0.0
    %3096 = vmatprep.subr.mxu0 0.0
    %3097 = vmatpush2.msra.mxu0 0.0
    %3098 = vmatprep.subr.mxu0 0.0
    %3099 = vmatpush2.msra.mxu0 0.0
    %3100 = vmatprep.subr.mxu0 0.0
    %3101 = vmatpush2.msra.mxu0 0.0
    %3102 = vmatprep.mubr.f32.mxu0 0.0
    %3103 = vmatmul.mubr.f32.gmra.mxu0 %v3027
    %v3104 = vpop.f32.mrf.mxu0
    %v3105 = vadd.f32 %v3009, %v3104
    %v3106 = vpop.f32.mrf.mxu0
    %3107 = vmatprep.mubr.f32.mxu0 0.0
    %3108 = vmatmul.mubr.f32.gmra.mxu0 %v3030
    %v3109 = vpop.f32.mrf.mxu0
    %v3110 = vadd.f32 %v3014, %v3109
    %v3111 = vpop.f32.mrf.mxu0
    %3112 = vmatprep.mubr.f32.mxu0 0.0
    %3113 = vmatmul.mubr.f32.gmra.mxu0 %v3033
    %v3114 = vpop.f32.mrf.mxu0
    %v3115 = vadd.f32 %v3019, %v3114
    %v3116 = vpop.f32.mrf.mxu0
    %3117 = vmatprep.mubr.f32.mxu0 0.0
    %3118 = vmatmul.mubr.f32.gmra.mxu0 %v3036
    %v3119 = vpop.f32.mrf.mxu0
    %v3120 = vadd.f32 %v3024, %v3119
    %v3121 = vpop.f32.mrf.mxu0
    %3122 = vdwg.mxu0
    %v3124 = vsel %vm522, %v2994, 0
    %v3127 = vsel %vm522, %v2995, 0
    %v3130 = vsel %vm522, %v2996, 0
    %v3133 = vsel %vm522, %v2997, 0
    %v3136 = vsel %vm535, %v2985, 0
    %3138 = vmatprep.subr.mxu0 0.0
    %3139 = vmatpush1.msra.mxu0 0.0
    %3140 = vmatprep.subr.mxu0 0.0
    %3141 = vmatpush1.msra.mxu0 0.0
    %3142 = vmatprep.subr.mxu0 0.0
    %3143 = vmatpush1.msra.mxu0 0.0
    %3144 = vmatprep.subr.mxu0 0.0
    %3145 = vmatpush1.msra.mxu0 0.0
    %3146 = vmatprep.subr.mxu0 0.0
    %3147 = vmatpush1.msra.mxu0 0.0
    %3148 = vmatprep.subr.mxu0 0.0
    %3149 = vmatpush1.msra.mxu0 0.0
    %3150 = vmatprep.subr.mxu0 0.0
    %3151 = vmatpush1.msra.mxu0 0.0
    %3152 = vmatprep.subr.mxu0 0.0
    %3153 = vmatpush1.msra.mxu0 0.0
    %3154 = vmatprep.subr.mxu0 0.0
    %3155 = vmatpush1.msra.mxu0 0.0
    %3156 = vmatprep.subr.mxu0 0.0
    %3157 = vmatpush1.msra.mxu0 0.0
    %3158 = vmatprep.subr.mxu0 0.0
    %3159 = vmatpush1.msra.mxu0 0.0
    %3160 = vmatprep.subr.mxu0 0.0
    %3161 = vmatpush1.msra.mxu0 0.0
    %3162 = vmatprep.subr.mxu0 0.0
    %3163 = vmatpush1.msra.mxu0 0.0
    %3164 = vmatprep.subr.mxu0 0.0
    %3165 = vmatpush1.msra.mxu0 0.0
    %3166 = vmatprep.subr.mxu0 0.0
    %3167 = vmatpush1.msra.mxu0 0.0
    %3168 = vmatprep.subr.mxu0 0.0
    %3169 = vmatpush1.msra.mxu0 %v3136
    %3170 = vmatprep.subr.mxu0 0.0
    %3171 = vmatpush2.msra.mxu0 0.0
    %3172 = vmatprep.subr.mxu0 0.0
    %3173 = vmatpush2.msra.mxu0 0.0
    %3174 = vmatprep.subr.mxu0 0.0
    %3175 = vmatpush2.msra.mxu0 0.0
    %3176 = vmatprep.subr.mxu0 0.0
    %3177 = vmatpush2.msra.mxu0 0.0
    %3178 = vmatprep.subr.mxu0 0.0
    %3179 = vmatpush2.msra.mxu0 0.0
    %3180 = vmatprep.subr.mxu0 0.0
    %3181 = vmatpush2.msra.mxu0 0.0
    %3182 = vmatprep.subr.mxu0 0.0
    %3183 = vmatpush2.msra.mxu0 0.0
    %3184 = vmatprep.subr.mxu0 0.0
    %3185 = vmatpush2.msra.mxu0 0.0
    %3186 = vmatprep.subr.mxu0 0.0
    %3187 = vmatpush2.msra.mxu0 0.0
    %3188 = vmatprep.subr.mxu0 0.0
    %3189 = vmatpush2.msra.mxu0 0.0
    %3190 = vmatprep.subr.mxu0 0.0
    %3191 = vmatpush2.msra.mxu0 0.0
    %3192 = vmatprep.subr.mxu0 0.0
    %3193 = vmatpush2.msra.mxu0 0.0
    %3194 = vmatprep.subr.mxu0 0.0
    %3195 = vmatpush2.msra.mxu0 0.0
    %3196 = vmatprep.subr.mxu0 0.0
    %3197 = vmatpush2.msra.mxu0 0.0
    %3198 = vmatprep.subr.mxu0 0.0
    %3199 = vmatpush2.msra.mxu0 0.0
    %3200 = vmatprep.subr.mxu0 0.0
    %3201 = vmatpush2.msra.mxu0 0.0
    %3202 = vmatprep.mubr.f32.mxu0 0.0
    %3203 = vmatmul.mubr.f32.gmra.mxu0 %v3124
    %v3204 = vpop.f32.mrf.mxu0
    %v3205 = vadd.f32 %v3105, %v3204
    %v3206 = vpop.f32.mrf.mxu0
    %3207 = vmatprep.mubr.f32.mxu0 0.0
    %3208 = vmatmul.mubr.f32.gmra.mxu0 %v3127
    %v3209 = vpop.f32.mrf.mxu0
    %v3210 = vadd.f32 %v3110, %v3209
    %v3211 = vpop.f32.mrf.mxu0
    %3212 = vmatprep.mubr.f32.mxu0 0.0
    %3213 = vmatmul.mubr.f32.gmra.mxu0 %v3130
    %v3214 = vpop.f32.mrf.mxu0
    %v3215 = vadd.f32 %v3115, %v3214
    %v3216 = vpop.f32.mrf.mxu0
    %3217 = vmatprep.mubr.f32.mxu0 0.0
    %3218 = vmatmul.mubr.f32.gmra.mxu0 %v3133
    %v3219 = vpop.f32.mrf.mxu0
    %v3220 = vadd.f32 %v3120, %v3219
    %v3221 = vpop.f32.mrf.mxu0
    %3222 = vdwg.mxu0
    %v3223 = vmax.f32 %v3205, 0.0
    %v3224 = vmax.f32 %v3210, 0.0
    %v3225 = vmax.f32 %v3215, 0.0
    %v3226 = vmax.f32 %v3220, 0.0
    %v3227 = vld [vmem:[#allocation2 + $0x2a0] sm:$0xff]
    %v3228 = vld [vmem:[#allocation2 + $0x2a8] sm:$0xff]
    %v3229 = vld [vmem:[#allocation2 + $0x2b0] sm:$0xff]
    %v3230 = vld [vmem:[#allocation2 + $0x2b8] sm:$0xff]
    %v3231 = vld [vmem:[#allocation4 + $0x2a0] sm:$0xff]
    %v3232 = vld [vmem:[#allocation4 + $0x2a8] sm:$0xff]
    %v3233 = vld [vmem:[#allocation4 + $0x2b0] sm:$0xff]
    %v3234 = vld [vmem:[#allocation4 + $0x2b8] sm:$0xff]
    %3236 = vset.pattern.permute.xlu0 0
    %3237 = vperm.xlu0 %3236, %v3231
    %v3238 = vpop.permute.xlu0 %3237
    %3241 = vset.pattern.permute.xlu0 0
    %3242 = vperm.xlu0 %3241, %v3232
    %v3243 = vpop.permute.xlu0 %3242
    %3246 = vset.pattern.permute.xlu0 0
    %3247 = vperm.xlu0 %3246, %v3233
    %v3248 = vpop.permute.xlu0 %3247
    %3251 = vset.pattern.permute.xlu0 0
    %3252 = vperm.xlu0 %3251, %v3234
    %v3253 = vpop.permute.xlu0 %3252
    %v3256 = vsel %vm207, %v3227, 0
    %v3259 = vsel %vm207, %v3228, 0
    %v3262 = vsel %vm207, %v3229, 0
    %v3265 = vsel %vm207, %v3230, 0
    %3267 = vmatprep.subr.mxu0 0.0
    %3268 = vmatpush1.msra.mxu0 0.0
    %3269 = vmatprep.subr.mxu0 0.0
    %3270 = vmatpush1.msra.mxu0 0.0
    %3271 = vmatprep.subr.mxu0 0.0
    %3272 = vmatpush1.msra.mxu0 0.0
    %3273 = vmatprep.subr.mxu0 0.0
    %3274 = vmatpush1.msra.mxu0 0.0
    %3275 = vmatprep.subr.mxu0 0.0
    %3276 = vmatpush1.msra.mxu0 0.0
    %3277 = vmatprep.subr.mxu0 0.0
    %3278 = vmatpush1.msra.mxu0 0.0
    %3279 = vmatprep.subr.mxu0 0.0
    %3280 = vmatpush1.msra.mxu0 0.0
    %3281 = vmatprep.subr.mxu0 0.0
    %3282 = vmatpush1.msra.mxu0 0.0
    %3283 = vmatprep.subr.mxu0 0.0
    %3284 = vmatpush1.msra.mxu0 0.0
    %3285 = vmatprep.subr.mxu0 0.0
    %3286 = vmatpush1.msra.mxu0 0.0
    %3287 = vmatprep.subr.mxu0 0.0
    %3288 = vmatpush1.msra.mxu0 0.0
    %3289 = vmatprep.subr.mxu0 0.0
    %3290 = vmatpush1.msra.mxu0 0.0
    %3291 = vmatprep.subr.mxu0 0.0
    %3292 = vmatpush1.msra.mxu0 %v3226
    %3293 = vmatprep.subr.mxu0 0.0
    %3294 = vmatpush1.msra.mxu0 %v3225
    %3295 = vmatprep.subr.mxu0 0.0
    %3296 = vmatpush1.msra.mxu0 %v3224
    %3297 = vmatprep.subr.mxu0 0.0
    %3298 = vmatpush1.msra.mxu0 %v3223
    %3299 = vmatprep.subr.mxu0 0.0
    %3300 = vmatpush2.msra.mxu0 0.0
    %3301 = vmatprep.subr.mxu0 0.0
    %3302 = vmatpush2.msra.mxu0 0.0
    %3303 = vmatprep.subr.mxu0 0.0
    %3304 = vmatpush2.msra.mxu0 0.0
    %3305 = vmatprep.subr.mxu0 0.0
    %3306 = vmatpush2.msra.mxu0 0.0
    %3307 = vmatprep.subr.mxu0 0.0
    %3308 = vmatpush2.msra.mxu0 0.0
    %3309 = vmatprep.subr.mxu0 0.0
    %3310 = vmatpush2.msra.mxu0 0.0
    %3311 = vmatprep.subr.mxu0 0.0
    %3312 = vmatpush2.msra.mxu0 0.0
    %3313 = vmatprep.subr.mxu0 0.0
    %3314 = vmatpush2.msra.mxu0 0.0
    %3315 = vmatprep.subr.mxu0 0.0
    %3316 = vmatpush2.msra.mxu0 0.0
    %3317 = vmatprep.subr.mxu0 0.0
    %3318 = vmatpush2.msra.mxu0 0.0
    %3319 = vmatprep.subr.mxu0 0.0
    %3320 = vmatpush2.msra.mxu0 0.0
    %3321 = vmatprep.subr.mxu0 0.0
    %3322 = vmatpush2.msra.mxu0 0.0
    %3323 = vmatprep.subr.mxu0 0.0
    %3324 = vmatpush2.msra.mxu0 0.0
    %3325 = vmatprep.subr.mxu0 0.0
    %3326 = vmatpush2.msra.mxu0 0.0
    %3327 = vmatprep.subr.mxu0 0.0
    %3328 = vmatpush2.msra.mxu0 0.0
    %3329 = vmatprep.subr.mxu0 0.0
    %3330 = vmatpush2.msra.mxu0 0.0
    %3331 = vmatprep.mubr.f32.mxu0 0.0
    %3332 = vmatmul.mubr.f32.gmra.mxu0 %v3256
    %v3333 = vpop.f32.mrf.mxu0
    %v3334 = vadd.f32 %v3238, %v3333
    %v3335 = vpop.f32.mrf.mxu0
    %3336 = vmatprep.mubr.f32.mxu0 0.0
    %3337 = vmatmul.mubr.f32.gmra.mxu0 %v3259
    %v3338 = vpop.f32.mrf.mxu0
    %v3339 = vadd.f32 %v3243, %v3338
    %v3340 = vpop.f32.mrf.mxu0
    %3341 = vmatprep.mubr.f32.mxu0 0.0
    %3342 = vmatmul.mubr.f32.gmra.mxu0 %v3262
    %v3343 = vpop.f32.mrf.mxu0
    %v3344 = vadd.f32 %v3248, %v3343
    %v3345 = vpop.f32.mrf.mxu0
    %3346 = vmatprep.mubr.f32.mxu0 0.0
    %3347 = vmatmul.mubr.f32.gmra.mxu0 %v3265
    %v3348 = vpop.f32.mrf.mxu0
    %v3349 = vadd.f32 %v3253, %v3348
    %v3350 = vpop.f32.mrf.mxu0
    %3351 = vdwg.mxu0
    %v3352 = vmax.f32 %v3334, 0.0
    %v3353 = vmax.f32 %v3339, 0.0
    %v3354 = vmax.f32 %v3344, 0.0
    %v3355 = vmax.f32 %v3349, 0.0
    %v3356 = vld [vmem:[#allocation2 + $0x2c0] sm:$0xff]
    %v3357 = vld [vmem:[#allocation4 + $0x2c0] sm:$0xff]
    %3359 = vset.pattern.permute.xlu0 0
    %3360 = vperm.xlu0 %3359, %v3357
    %v3361 = vpop.permute.xlu0 %3360
    %v3364 = vsel %vm207, %v3356, 0
    %3366 = vmatprep.subr.mxu0 0.0
    %3367 = vmatpush1.msra.mxu0 0.0
    %3368 = vmatprep.subr.mxu0 0.0
    %3369 = vmatpush1.msra.mxu0 0.0
    %3370 = vmatprep.subr.mxu0 0.0
    %3371 = vmatpush1.msra.mxu0 0.0
    %3372 = vmatprep.subr.mxu0 0.0
    %3373 = vmatpush1.msra.mxu0 0.0
    %3374 = vmatprep.subr.mxu0 0.0
    %3375 = vmatpush1.msra.mxu0 0.0
    %3376 = vmatprep.subr.mxu0 0.0
    %3377 = vmatpush1.msra.mxu0 0.0
    %3378 = vmatprep.subr.mxu0 0.0
    %3379 = vmatpush1.msra.mxu0 0.0
    %3380 = vmatprep.subr.mxu0 0.0
    %3381 = vmatpush1.msra.mxu0 0.0
    %3382 = vmatprep.subr.mxu0 0.0
    %3383 = vmatpush1.msra.mxu0 0.0
    %3384 = vmatprep.subr.mxu0 0.0
    %3385 = vmatpush1.msra.mxu0 0.0
    %3386 = vmatprep.subr.mxu0 0.0
    %3387 = vmatpush1.msra.mxu0 0.0
    %3388 = vmatprep.subr.mxu0 0.0
    %3389 = vmatpush1.msra.mxu0 0.0
    %3390 = vmatprep.subr.mxu0 0.0
    %3391 = vmatpush1.msra.mxu0 %v3355
    %3392 = vmatprep.subr.mxu0 0.0
    %3393 = vmatpush1.msra.mxu0 %v3354
    %3394 = vmatprep.subr.mxu0 0.0
    %3395 = vmatpush1.msra.mxu0 %v3353
    %3396 = vmatprep.subr.mxu0 0.0
    %3397 = vmatpush1.msra.mxu0 %v3352
    %3398 = vmatprep.subr.mxu0 0.0
    %3399 = vmatpush2.msra.mxu0 0.0
    %3400 = vmatprep.subr.mxu0 0.0
    %3401 = vmatpush2.msra.mxu0 0.0
    %3402 = vmatprep.subr.mxu0 0.0
    %3403 = vmatpush2.msra.mxu0 0.0
    %3404 = vmatprep.subr.mxu0 0.0
    %3405 = vmatpush2.msra.mxu0 0.0
    %3406 = vmatprep.subr.mxu0 0.0
    %3407 = vmatpush2.msra.mxu0 0.0
    %3408 = vmatprep.subr.mxu0 0.0
    %3409 = vmatpush2.msra.mxu0 0.0
    %3410 = vmatprep.subr.mxu0 0.0
    %3411 = vmatpush2.msra.mxu0 0.0
    %3412 = vmatprep.subr.mxu0 0.0
    %3413 = vmatpush2.msra.mxu0 0.0
    %3414 = vmatprep.subr.mxu0 0.0
    %3415 = vmatpush2.msra.mxu0 0.0
    %3416 = vmatprep.subr.mxu0 0.0
    %3417 = vmatpush2.msra.mxu0 0.0
    %3418 = vmatprep.subr.mxu0 0.0
    %3419 = vmatpush2.msra.mxu0 0.0
    %3420 = vmatprep.subr.mxu0 0.0
    %3421 = vmatpush2.msra.mxu0 0.0
    %3422 = vmatprep.subr.mxu0 0.0
    %3423 = vmatpush2.msra.mxu0 0.0
    %3424 = vmatprep.subr.mxu0 0.0
    %3425 = vmatpush2.msra.mxu0 0.0
    %3426 = vmatprep.subr.mxu0 0.0
    %3427 = vmatpush2.msra.mxu0 0.0
    %3428 = vmatprep.subr.mxu0 0.0
    %3429 = vmatpush2.msra.mxu0 0.0
    %3430 = vmatprep.mubr.f32.mxu0 0.0
    %3431 = vmatmul.mubr.f32.gmra.mxu0 %v3364
    %v3432 = vpop.f32.mrf.mxu0
    %v3433 = vadd.f32 %v3361, %v3432
    %v3434 = vpop.f32.mrf.mxu0
    %3435 = vdwg.mxu0
    %vm3436 = vcmp.lt.f32.partialorder %v3433, 0.0
    %v3437 = vsel %vm3436, -1.0, 1.0
    %v3438 = vand.u32 2147483647, %v3433
    %vm3439 = vcmp.gt.f32.partialorder %v3438, 2.4142137
    %vm3440 = vcmp.gt.f32.partialorder %v3438, 0.41421357
    %vm3441 = vmxor %vm3439, 1
    %vm3442 = vmand %vm3440, %vm3441
    %v3443 = vsub.f32 %v3438, 1.0
    %v3444 = vsel %vm3442, %v3443, %v3438
    %v3445 = vsel %vm3439, -1.0, %v3444
    %v3446 = vadd.f32 %v3438, 1e-30
    %v3447 = vadd.f32 %v3438, 1.0
    %v3448 = vsel %vm3442, %v3447, 1.0
    %v3449 = vsel %vm3439, %v3446, %v3448
    %v3450 = vrcp.pop %v3449
    %v3451 = vmul.f32 %v3445, %v3450
    %v3452 = vsel %vm3442, 0.7853982, 0.0
    %v3453 = vsel %vm3439, 1.5707964, %v3452
    %v3454 = vmul.f32 %v3451, %v3451
    %v3455 = vmul.f32 %v3454, 0.080537446
    %v3456 = vsub.f32 %v3455, 0.13877685
    %v3457 = vmul.f32 %v3456, %v3454
    %v3458 = vadd.f32 %v3457, 0.19977711
    %v3459 = vmul.f32 %v3458, %v3454
    %v3460 = vsub.f32 %v3459, 0.3333295
    %v3461 = vmul.f32 %v3460, %v3454
    %v3462 = vmul.f32 %v3461, %v3451
    %v3463 = vadd.f32 %v3453, %v3462
    %v3464 = vadd.f32 %v3463, %v3451
    %v3465 = vmul.f32 %v3437, %v3464
    %v3466 = vmul.f32 %v3465, 1.272
    %v3467 = vmul.f32 %v3466, 1.442695
    %v3468 = vpow.pop %v3467
    %v3470 = vmul.f32 %v3468, %v2635
    %v3472 = vrot.slane %v3433, 4
    %v3474 = vadd.f32 %v3470, %v3472
    %v3475 = vsel %vm535, %v3466, 0.0
    %v3476 = vrot.slane %v3475, 4
    %v3477 = vadd.f32 %v3475, %v3476
    %v3478 = vrot.slane %v3477, 2
    %v3479 = vadd.f32 %v3477, %v3478
    %v3480 = vrot.slane %v3479, 1
    %v3481 = vadd.f32 %v3479, %v3480
    %v3482 = vadd.f32 %v2993, %v3481
    %v3484 = vrot.slane %v3474, 4
    %v3486 = vsel %vm535, %v2985, %v3484
    %v3487 = vld [vmem:[#allocation2 + $0x2c8] sm:$0xff]
    %v3489 = vsel %vm422, %v3487, 0
    %3491 = vmatprep.subr.mxu0 0.0
    %3492 = vmatpush1.msra.mxu0 0.0
    %3493 = vmatprep.subr.mxu0 0.0
    %3494 = vmatpush1.msra.mxu0 0.0
    %3495 = vmatprep.subr.mxu0 0.0
    %3496 = vmatpush1.msra.mxu0 0.0
    %3497 = vmatprep.subr.mxu0 0.0
    %3498 = vmatpush1.msra.mxu0 0.0
    %3499 = vmatprep.subr.mxu0 0.0
    %3500 = vmatpush1.msra.mxu0 0.0
    %3501 = vmatprep.subr.mxu0 0.0
    %3502 = vmatpush1.msra.mxu0 0.0
    %3503 = vmatprep.subr.mxu0 0.0
    %3504 = vmatpush1.msra.mxu0 0.0
    %3505 = vmatprep.subr.mxu0 0.0
    %3506 = vmatpush1.msra.mxu0 0.0
    %3507 = vmatprep.subr.mxu0 0.0
    %3508 = vmatpush1.msra.mxu0 0.0
    %3509 = vmatprep.subr.mxu0 0.0
    %3510 = vmatpush1.msra.mxu0 0.0
    %3511 = vmatprep.subr.mxu0 0.0
    %3512 = vmatpush1.msra.mxu0 0.0
    %3513 = vmatprep.subr.mxu0 0.0
    %3514 = vmatpush1.msra.mxu0 0.0
    %3515 = vmatprep.subr.mxu0 0.0
    %3516 = vmatpush1.msra.mxu0 0.0
    %3517 = vmatprep.subr.mxu0 0.0
    %3518 = vmatpush1.msra.mxu0 0.0
    %3519 = vmatprep.subr.mxu0 0.0
    %3520 = vmatpush1.msra.mxu0 0.0
    %3521 = vmatprep.subr.mxu0 0.0
    %3522 = vmatpush1.msra.mxu0 %v3486
    %3523 = vmatprep.subr.mxu0 0.0
    %3524 = vmatpush2.msra.mxu0 0.0
    %3525 = vmatprep.subr.mxu0 0.0
    %3526 = vmatpush2.msra.mxu0 0.0
    %3527 = vmatprep.subr.mxu0 0.0
    %3528 = vmatpush2.msra.mxu0 0.0
    %3529 = vmatprep.subr.mxu0 0.0
    %3530 = vmatpush2.msra.mxu0 0.0
    %3531 = vmatprep.subr.mxu0 0.0
    %3532 = vmatpush2.msra.mxu0 0.0
    %3533 = vmatprep.subr.mxu0 0.0
    %3534 = vmatpush2.msra.mxu0 0.0
    %3535 = vmatprep.subr.mxu0 0.0
    %3536 = vmatpush2.msra.mxu0 0.0
    %3537 = vmatprep.subr.mxu0 0.0
    %3538 = vmatpush2.msra.mxu0 0.0
    %3539 = vmatprep.subr.mxu0 0.0
    %3540 = vmatpush2.msra.mxu0 0.0
    %3541 = vmatprep.subr.mxu0 0.0
    %3542 = vmatpush2.msra.mxu0 0.0
    %3543 = vmatprep.subr.mxu0 0.0
    %3544 = vmatpush2.msra.mxu0 0.0
    %3545 = vmatprep.subr.mxu0 0.0
    %3546 = vmatpush2.msra.mxu0 0.0
    %3547 = vmatprep.subr.mxu0 0.0
    %3548 = vmatpush2.msra.mxu0 0.0
    %3549 = vmatprep.subr.mxu0 0.0
    %3550 = vmatpush2.msra.mxu0 0.0
    %3551 = vmatprep.subr.mxu0 0.0
    %3552 = vmatpush2.msra.mxu0 0.0
    %3553 = vmatprep.subr.mxu0 0.0
    %3554 = vmatpush2.msra.mxu0 0.0
    %3555 = vmatprep.mubr.f32.mxu0 0.0
    %3556 = vmatmul.mubr.f32.gmra.mxu0 %v3489
    %v3557 = vpop.f32.mrf.mxu0
    %v3558 = vadd.f32 0.0, %v3557
    %v3559 = vpop.f32.mrf.mxu0
    %3560 = vdwg.mxu0
    %v3561 = vld [vmem:[#allocation2 + $0x2d0] sm:$0xff]
    %v3562 = vld [vmem:[#allocation2 + $0x2d8] sm:$0xff]
    %v3563 = vld [vmem:[#allocation2 + $0x2e0] sm:$0xff]
    %v3564 = vld [vmem:[#allocation2 + $0x2e8] sm:$0xff]
    %v3565 = vld [vmem:[#allocation2 + $0x2f0] sm:$0xff]
    %v3566 = vld [vmem:[#allocation2 + $0x2f8] sm:$0xff]
    %v3567 = vld [vmem:[#allocation2 + $0x300] sm:$0xff]
    %v3568 = vld [vmem:[#allocation2 + $0x308] sm:$0xff]
    %v3569 = vld [vmem:[#allocation4 + $0x2f0] sm:$0xff]
    %v3570 = vld [vmem:[#allocation4 + $0x2f8] sm:$0xff]
    %v3571 = vld [vmem:[#allocation4 + $0x300] sm:$0xff]
    %v3572 = vld [vmem:[#allocation4 + $0x308] sm:$0xff]
    %3574 = vset.pattern.permute.xlu0 0
    %3575 = vperm.xlu0 %3574, %v3569
    %v3576 = vpop.permute.xlu0 %3575
    %3579 = vset.pattern.permute.xlu0 0
    %3580 = vperm.xlu0 %3579, %v3570
    %v3581 = vpop.permute.xlu0 %3580
    %3584 = vset.pattern.permute.xlu0 0
    %3585 = vperm.xlu0 %3584, %v3571
    %v3586 = vpop.permute.xlu0 %3585
    %3589 = vset.pattern.permute.xlu0 0
    %3590 = vperm.xlu0 %3589, %v3572
    %v3591 = vpop.permute.xlu0 %3590
    %v3594 = vsel %vm422, %v3565, 0
    %v3597 = vsel %vm422, %v3566, 0
    %v3600 = vsel %vm422, %v3567, 0
    %v3603 = vsel %vm422, %v3568, 0
    %3605 = vmatprep.subr.mxu0 0.0
    %3606 = vmatpush1.msra.mxu0 0.0
    %3607 = vmatprep.subr.mxu0 0.0
    %3608 = vmatpush1.msra.mxu0 0.0
    %3609 = vmatprep.subr.mxu0 0.0
    %3610 = vmatpush1.msra.mxu0 0.0
    %3611 = vmatprep.subr.mxu0 0.0
    %3612 = vmatpush1.msra.mxu0 0.0
    %3613 = vmatprep.subr.mxu0 0.0
    %3614 = vmatpush1.msra.mxu0 0.0
    %3615 = vmatprep.subr.mxu0 0.0
    %3616 = vmatpush1.msra.mxu0 0.0
    %3617 = vmatprep.subr.mxu0 0.0
    %3618 = vmatpush1.msra.mxu0 0.0
    %3619 = vmatprep.subr.mxu0 0.0
    %3620 = vmatpush1.msra.mxu0 0.0
    %3621 = vmatprep.subr.mxu0 0.0
    %3622 = vmatpush1.msra.mxu0 0.0
    %3623 = vmatprep.subr.mxu0 0.0
    %3624 = vmatpush1.msra.mxu0 0.0
    %3625 = vmatprep.subr.mxu0 0.0
    %3626 = vmatpush1.msra.mxu0 0.0
    %3627 = vmatprep.subr.mxu0 0.0
    %3628 = vmatpush1.msra.mxu0 0.0
    %3629 = vmatprep.subr.mxu0 0.0
    %3630 = vmatpush1.msra.mxu0 0.0
    %3631 = vmatprep.subr.mxu0 0.0
    %3632 = vmatpush1.msra.mxu0 0.0
    %3633 = vmatprep.subr.mxu0 0.0
    %3634 = vmatpush1.msra.mxu0 0.0
    %3635 = vmatprep.subr.mxu0 0.0
    %3636 = vmatpush1.msra.mxu0 %v386
    %3637 = vmatprep.subr.mxu0 0.0
    %3638 = vmatpush2.msra.mxu0 0.0
    %3639 = vmatprep.subr.mxu0 0.0
    %3640 = vmatpush2.msra.mxu0 0.0
    %3641 = vmatprep.subr.mxu0 0.0
    %3642 = vmatpush2.msra.mxu0 0.0
    %3643 = vmatprep.subr.mxu0 0.0
    %3644 = vmatpush2.msra.mxu0 0.0
    %3645 = vmatprep.subr.mxu0 0.0
    %3646 = vmatpush2.msra.mxu0 0.0
    %3647 = vmatprep.subr.mxu0 0.0
    %3648 = vmatpush2.msra.mxu0 0.0
    %3649 = vmatprep.subr.mxu0 0.0
    %3650 = vmatpush2.msra.mxu0 0.0
    %3651 = vmatprep.subr.mxu0 0.0
    %3652 = vmatpush2.msra.mxu0 0.0
    %3653 = vmatprep.subr.mxu0 0.0
    %3654 = vmatpush2.msra.mxu0 0.0
    %3655 = vmatprep.subr.mxu0 0.0
    %3656 = vmatpush2.msra.mxu0 0.0
    %3657 = vmatprep.subr.mxu0 0.0
    %3658 = vmatpush2.msra.mxu0 0.0
    %3659 = vmatprep.subr.mxu0 0.0
    %3660 = vmatpush2.msra.mxu0 0.0
    %3661 = vmatprep.subr.mxu0 0.0
    %3662 = vmatpush2.msra.mxu0 0.0
    %3663 = vmatprep.subr.mxu0 0.0
    %3664 = vmatpush2.msra.mxu0 0.0
    %3665 = vmatprep.subr.mxu0 0.0
    %3666 = vmatpush2.msra.mxu0 0.0
    %3667 = vmatprep.subr.mxu0 0.0
    %3668 = vmatpush2.msra.mxu0 0.0
    %3669 = vmatprep.mubr.f32.mxu0 0.0
    %3670 = vmatmul.mubr.f32.gmra.mxu0 %v3594
    %v3671 = vpop.f32.mrf.mxu0
    %v3672 = vadd.f32 %v3576, %v3671
    %v3673 = vpop.f32.mrf.mxu0
    %3674 = vmatprep.mubr.f32.mxu0 0.0
    %3675 = vmatmul.mubr.f32.gmra.mxu0 %v3597
    %v3676 = vpop.f32.mrf.mxu0
    %v3677 = vadd.f32 %v3581, %v3676
    %v3678 = vpop.f32.mrf.mxu0
    %3679 = vmatprep.mubr.f32.mxu0 0.0
    %3680 = vmatmul.mubr.f32.gmra.mxu0 %v3600
    %v3681 = vpop.f32.mrf.mxu0
    %v3682 = vadd.f32 %v3586, %v3681
    %v3683 = vpop.f32.mrf.mxu0
    %3684 = vmatprep.mubr.f32.mxu0 0.0
    %3685 = vmatmul.mubr.f32.gmra.mxu0 %v3603
    %v3686 = vpop.f32.mrf.mxu0
    %v3687 = vadd.f32 %v3591, %v3686
    %v3688 = vpop.f32.mrf.mxu0
    %3689 = vdwg.mxu0
    %v3691 = vrot.slane %v3558, 4
    %v3693 = vsel %vm522, %v3561, 0
    %v3696 = vsel %vm522, %v3562, 0
    %v3699 = vsel %vm522, %v3563, 0
    %v3702 = vsel %vm522, %v3564, 0
    %v3704 = vsel %vm535, %v3691, 0
    %3706 = vmatprep.subr.mxu0 0.0
    %3707 = vmatpush1.msra.mxu0 0.0
    %3708 = vmatprep.subr.mxu0 0.0
    %3709 = vmatpush1.msra.mxu0 0.0
    %3710 = vmatprep.subr.mxu0 0.0
    %3711 = vmatpush1.msra.mxu0 0.0
    %3712 = vmatprep.subr.mxu0 0.0
    %3713 = vmatpush1.msra.mxu0 0.0
    %3714 = vmatprep.subr.mxu0 0.0
    %3715 = vmatpush1.msra.mxu0 0.0
    %3716 = vmatprep.subr.mxu0 0.0
    %3717 = vmatpush1.msra.mxu0 0.0
    %3718 = vmatprep.subr.mxu0 0.0
    %3719 = vmatpush1.msra.mxu0 0.0
    %3720 = vmatprep.subr.mxu0 0.0
    %3721 = vmatpush1.msra.mxu0 0.0
    %3722 = vmatprep.subr.mxu0 0.0
    %3723 = vmatpush1.msra.mxu0 0.0
    %3724 = vmatprep.subr.mxu0 0.0
    %3725 = vmatpush1.msra.mxu0 0.0
    %3726 = vmatprep.subr.mxu0 0.0
    %3727 = vmatpush1.msra.mxu0 0.0
    %3728 = vmatprep.subr.mxu0 0.0
    %3729 = vmatpush1.msra.mxu0 0.0
    %3730 = vmatprep.subr.mxu0 0.0
    %3731 = vmatpush1.msra.mxu0 0.0
    %3732 = vmatprep.subr.mxu0 0.0
    %3733 = vmatpush1.msra.mxu0 0.0
    %3734 = vmatprep.subr.mxu0 0.0
    %3735 = vmatpush1.msra.mxu0 0.0
    %3736 = vmatprep.subr.mxu0 0.0
    %3737 = vmatpush1.msra.mxu0 %v3704
    %3738 = vmatprep.subr.mxu0 0.0
    %3739 = vmatpush2.msra.mxu0 0.0
    %3740 = vmatprep.subr.mxu0 0.0
    %3741 = vmatpush2.msra.mxu0 0.0
    %3742 = vmatprep.subr.mxu0 0.0
    %3743 = vmatpush2.msra.mxu0 0.0
    %3744 = vmatprep.subr.mxu0 0.0
    %3745 = vmatpush2.msra.mxu0 0.0
    %3746 = vmatprep.subr.mxu0 0.0
    %3747 = vmatpush2.msra.mxu0 0.0
    %3748 = vmatprep.subr.mxu0 0.0
    %3749 = vmatpush2.msra.mxu0 0.0
    %3750 = vmatprep.subr.mxu0 0.0
    %3751 = vmatpush2.msra.mxu0 0.0
    %3752 = vmatprep.subr.mxu0 0.0
    %3753 = vmatpush2.msra.mxu0 0.0
    %3754 = vmatprep.subr.mxu0 0.0
    %3755 = vmatpush2.msra.mxu0 0.0
    %3756 = vmatprep.subr.mxu0 0.0
    %3757 = vmatpush2.msra.mxu0 0.0
    %3758 = vmatprep.subr.mxu0 0.0
    %3759 = vmatpush2.msra.mxu0 0.0
    %3760 = vmatprep.subr.mxu0 0.0
    %3761 = vmatpush2.msra.mxu0 0.0
    %3762 = vmatprep.subr.mxu0 0.0
    %3763 = vmatpush2.msra.mxu0 0.0
    %3764 = vmatprep.subr.mxu0 0.0
    %3765 = vmatpush2.msra.mxu0 0.0
    %3766 = vmatprep.subr.mxu0 0.0
    %3767 = vmatpush2.msra.mxu0 0.0
    %3768 = vmatprep.subr.mxu0 0.0
    %3769 = vmatpush2.msra.mxu0 0.0
    %3770 = vmatprep.mubr.f32.mxu0 0.0
    %3771 = vmatmul.mubr.f32.gmra.mxu0 %v3693
    %v3772 = vpop.f32.mrf.mxu0
    %v3773 = vadd.f32 %v3672, %v3772
    %v3774 = vpop.f32.mrf.mxu0
    %3775 = vmatprep.mubr.f32.mxu0 0.0
    %3776 = vmatmul.mubr.f32.gmra.mxu0 %v3696
    %v3777 = vpop.f32.mrf.mxu0
    %v3778 = vadd.f32 %v3677, %v3777
    %v3779 = vpop.f32.mrf.mxu0
    %3780 = vmatprep.mubr.f32.mxu0 0.0
    %3781 = vmatmul.mubr.f32.gmra.mxu0 %v3699
    %v3782 = vpop.f32.mrf.mxu0
    %v3783 = vadd.f32 %v3682, %v3782
    %v3784 = vpop.f32.mrf.mxu0
    %3785 = vmatprep.mubr.f32.mxu0 0.0
    %3786 = vmatmul.mubr.f32.gmra.mxu0 %v3702
    %v3787 = vpop.f32.mrf.mxu0
    %v3788 = vadd.f32 %v3687, %v3787
    %v3789 = vpop.f32.mrf.mxu0
    %3790 = vdwg.mxu0
    %v3791 = vmax.f32 %v3773, 0.0
    %v3792 = vmax.f32 %v3778, 0.0
    %v3793 = vmax.f32 %v3783, 0.0
    %v3794 = vmax.f32 %v3788, 0.0
    %v3795 = vld [vmem:[#allocation2 + $0x310] sm:$0xff]
    %v3796 = vld [vmem:[#allocation2 + $0x318] sm:$0xff]
    %v3797 = vld [vmem:[#allocation2 + $0x320] sm:$0xff]
    %v3798 = vld [vmem:[#allocation2 + $0x328] sm:$0xff]
    %v3799 = vld [vmem:[#allocation4 + $0x310] sm:$0xff]
    %v3800 = vld [vmem:[#allocation4 + $0x318] sm:$0xff]
    %v3801 = vld [vmem:[#allocation4 + $0x320] sm:$0xff]
    %v3802 = vld [vmem:[#allocation4 + $0x328] sm:$0xff]
    %3804 = vset.pattern.permute.xlu0 0
    %3805 = vperm.xlu0 %3804, %v3799
    %v3806 = vpop.permute.xlu0 %3805
    %3809 = vset.pattern.permute.xlu0 0
    %3810 = vperm.xlu0 %3809, %v3800
    %v3811 = vpop.permute.xlu0 %3810
    %3814 = vset.pattern.permute.xlu0 0
    %3815 = vperm.xlu0 %3814, %v3801
    %v3816 = vpop.permute.xlu0 %3815
    %3819 = vset.pattern.permute.xlu0 0
    %3820 = vperm.xlu0 %3819, %v3802
    %v3821 = vpop.permute.xlu0 %3820
    %v3824 = vsel %vm207, %v3795, 0
    %v3827 = vsel %vm207, %v3796, 0
    %v3830 = vsel %vm207, %v3797, 0
    %v3833 = vsel %vm207, %v3798, 0
    %3835 = vmatprep.subr.mxu0 0.0
    %3836 = vmatpush1.msra.mxu0 0.0
    %3837 = vmatprep.subr.mxu0 0.0
    %3838 = vmatpush1.msra.mxu0 0.0
    %3839 = vmatprep.subr.mxu0 0.0
    %3840 = vmatpush1.msra.mxu0 0.0
    %3841 = vmatprep.subr.mxu0 0.0
    %3842 = vmatpush1.msra.mxu0 0.0
    %3843 = vmatprep.subr.mxu0 0.0
    %3844 = vmatpush1.msra.mxu0 0.0
    %3845 = vmatprep.subr.mxu0 0.0
    %3846 = vmatpush1.msra.mxu0 0.0
    %3847 = vmatprep.subr.mxu0 0.0
    %3848 = vmatpush1.msra.mxu0 0.0
    %3849 = vmatprep.subr.mxu0 0.0
    %3850 = vmatpush1.msra.mxu0 0.0
    %3851 = vmatprep.subr.mxu0 0.0
    %3852 = vmatpush1.msra.mxu0 0.0
    %3853 = vmatprep.subr.mxu0 0.0
    %3854 = vmatpush1.msra.mxu0 0.0
    %3855 = vmatprep.subr.mxu0 0.0
    %3856 = vmatpush1.msra.mxu0 0.0
    %3857 = vmatprep.subr.mxu0 0.0
    %3858 = vmatpush1.msra.mxu0 0.0
    %3859 = vmatprep.subr.mxu0 0.0
    %3860 = vmatpush1.msra.mxu0 %v3794
    %3861 = vmatprep.subr.mxu0 0.0
    %3862 = vmatpush1.msra.mxu0 %v3793
    %3863 = vmatprep.subr.mxu0 0.0
    %3864 = vmatpush1.msra.mxu0 %v3792
    %3865 = vmatprep.subr.mxu0 0.0
    %3866 = vmatpush1.msra.mxu0 %v3791
    %3867 = vmatprep.subr.mxu0 0.0
    %3868 = vmatpush2.msra.mxu0 0.0
    %3869 = vmatprep.subr.mxu0 0.0
    %3870 = vmatpush2.msra.mxu0 0.0
    %3871 = vmatprep.subr.mxu0 0.0
    %3872 = vmatpush2.msra.mxu0 0.0
    %3873 = vmatprep.subr.mxu0 0.0
    %3874 = vmatpush2.msra.mxu0 0.0
    %3875 = vmatprep.subr.mxu0 0.0
    %3876 = vmatpush2.msra.mxu0 0.0
    %3877 = vmatprep.subr.mxu0 0.0
    %3878 = vmatpush2.msra.mxu0 0.0
    %3879 = vmatprep.subr.mxu0 0.0
    %3880 = vmatpush2.msra.mxu0 0.0
    %3881 = vmatprep.subr.mxu0 0.0
    %3882 = vmatpush2.msra.mxu0 0.0
    %3883 = vmatprep.subr.mxu0 0.0
    %3884 = vmatpush2.msra.mxu0 0.0
    %3885 = vmatprep.subr.mxu0 0.0
    %3886 = vmatpush2.msra.mxu0 0.0
    %3887 = vmatprep.subr.mxu0 0.0
    %3888 = vmatpush2.msra.mxu0 0.0
    %3889 = vmatprep.subr.mxu0 0.0
    %3890 = vmatpush2.msra.mxu0 0.0
    %3891 = vmatprep.subr.mxu0 0.0
    %3892 = vmatpush2.msra.mxu0 0.0
    %3893 = vmatprep.subr.mxu0 0.0
    %3894 = vmatpush2.msra.mxu0 0.0
    %3895 = vmatprep.subr.mxu0 0.0
    %3896 = vmatpush2.msra.mxu0 0.0
    %3897 = vmatprep.subr.mxu0 0.0
    %3898 = vmatpush2.msra.mxu0 0.0
    %3899 = vmatprep.mubr.f32.mxu0 0.0
    %3900 = vmatmul.mubr.f32.gmra.mxu0 %v3824
    %v3901 = vpop.f32.mrf.mxu0
    %v3902 = vadd.f32 %v3806, %v3901
    %v3903 = vpop.f32.mrf.mxu0
    %3904 = vmatprep.mubr.f32.mxu0 0.0
    %3905 = vmatmul.mubr.f32.gmra.mxu0 %v3827
    %v3906 = vpop.f32.mrf.mxu0
    %v3907 = vadd.f32 %v3811, %v3906
    %v3908 = vpop.f32.mrf.mxu0
    %3909 = vmatprep.mubr.f32.mxu0 0.0
    %3910 = vmatmul.mubr.f32.gmra.mxu0 %v3830
    %v3911 = vpop.f32.mrf.mxu0
    %v3912 = vadd.f32 %v3816, %v3911
    %v3913 = vpop.f32.mrf.mxu0
    %3914 = vmatprep.mubr.f32.mxu0 0.0
    %3915 = vmatmul.mubr.f32.gmra.mxu0 %v3833
    %v3916 = vpop.f32.mrf.mxu0
    %v3917 = vadd.f32 %v3821, %v3916
    %v3918 = vpop.f32.mrf.mxu0
    %3919 = vdwg.mxu0
    %v3920 = vmax.f32 %v3902, 0.0
    %v3921 = vmax.f32 %v3907, 0.0
    %v3922 = vmax.f32 %v3912, 0.0
    %v3923 = vmax.f32 %v3917, 0.0
    %v3924 = vld [vmem:[#allocation2 + $0x330] sm:$0xff]
    %v3925 = vld [vmem:[#allocation4 + $0x330] sm:$0xff]
    %3927 = vset.pattern.permute.xlu0 0
    %3928 = vperm.xlu0 %3927, %v3925
    %v3929 = vpop.permute.xlu0 %3928
    %v3932 = vsel %vm207, %v3924, 0
    %3934 = vmatprep.subr.mxu0 0.0
    %3935 = vmatpush1.msra.mxu0 0.0
    %3936 = vmatprep.subr.mxu0 0.0
    %3937 = vmatpush1.msra.mxu0 0.0
    %3938 = vmatprep.subr.mxu0 0.0
    %3939 = vmatpush1.msra.mxu0 0.0
    %3940 = vmatprep.subr.mxu0 0.0
    %3941 = vmatpush1.msra.mxu0 0.0
    %3942 = vmatprep.subr.mxu0 0.0
    %3943 = vmatpush1.msra.mxu0 0.0
    %3944 = vmatprep.subr.mxu0 0.0
    %3945 = vmatpush1.msra.mxu0 0.0
    %3946 = vmatprep.subr.mxu0 0.0
    %3947 = vmatpush1.msra.mxu0 0.0
    %3948 = vmatprep.subr.mxu0 0.0
    %3949 = vmatpush1.msra.mxu0 0.0
    %3950 = vmatprep.subr.mxu0 0.0
    %3951 = vmatpush1.msra.mxu0 0.0
    %3952 = vmatprep.subr.mxu0 0.0
    %3953 = vmatpush1.msra.mxu0 0.0
    %3954 = vmatprep.subr.mxu0 0.0
    %3955 = vmatpush1.msra.mxu0 0.0
    %3956 = vmatprep.subr.mxu0 0.0
    %3957 = vmatpush1.msra.mxu0 0.0
    %3958 = vmatprep.subr.mxu0 0.0
    %3959 = vmatpush1.msra.mxu0 %v3923
    %3960 = vmatprep.subr.mxu0 0.0
    %3961 = vmatpush1.msra.mxu0 %v3922
    %3962 = vmatprep.subr.mxu0 0.0
    %3963 = vmatpush1.msra.mxu0 %v3921
    %3964 = vmatprep.subr.mxu0 0.0
    %3965 = vmatpush1.msra.mxu0 %v3920
    %3966 = vmatprep.subr.mxu0 0.0
    %3967 = vmatpush2.msra.mxu0 0.0
    %3968 = vmatprep.subr.mxu0 0.0
    %3969 = vmatpush2.msra.mxu0 0.0
    %3970 = vmatprep.subr.mxu0 0.0
    %3971 = vmatpush2.msra.mxu0 0.0
    %3972 = vmatprep.subr.mxu0 0.0
    %3973 = vmatpush2.msra.mxu0 0.0
    %3974 = vmatprep.subr.mxu0 0.0
    %3975 = vmatpush2.msra.mxu0 0.0
    %3976 = vmatprep.subr.mxu0 0.0
    %3977 = vmatpush2.msra.mxu0 0.0
    %3978 = vmatprep.subr.mxu0 0.0
    %3979 = vmatpush2.msra.mxu0 0.0
    %3980 = vmatprep.subr.mxu0 0.0
    %3981 = vmatpush2.msra.mxu0 0.0
    %3982 = vmatprep.subr.mxu0 0.0
    %3983 = vmatpush2.msra.mxu0 0.0
    %3984 = vmatprep.subr.mxu0 0.0
    %3985 = vmatpush2.msra.mxu0 0.0
    %3986 = vmatprep.subr.mxu0 0.0
    %3987 = vmatpush2.msra.mxu0 0.0
    %3988 = vmatprep.subr.mxu0 0.0
    %3989 = vmatpush2.msra.mxu0 0.0
    %3990 = vmatprep.subr.mxu0 0.0
    %3991 = vmatpush2.msra.mxu0 0.0
    %3992 = vmatprep.subr.mxu0 0.0
    %3993 = vmatpush2.msra.mxu0 0.0
    %3994 = vmatprep.subr.mxu0 0.0
    %3995 = vmatpush2.msra.mxu0 0.0
    %3996 = vmatprep.subr.mxu0 0.0
    %3997 = vmatpush2.msra.mxu0 0.0
    %3998 = vmatprep.mubr.f32.mxu0 0.0
    %3999 = vmatmul.mubr.f32.gmra.mxu0 %v3932
    %v4000 = vpop.f32.mrf.mxu0
    %v4001 = vadd.f32 %v3929, %v4000
    %v4002 = vpop.f32.mrf.mxu0
    %4003 = vdwg.mxu0
    %vm4004 = vcmp.lt.f32.partialorder %v4001, 0.0
    %v4005 = vsel %vm4004, -1.0, 1.0
    %v4006 = vand.u32 2147483647, %v4001
    %vm4007 = vcmp.gt.f32.partialorder %v4006, 2.4142137
    %vm4008 = vcmp.gt.f32.partialorder %v4006, 0.41421357
    %vm4009 = vmxor %vm4007, 1
    %vm4010 = vmand %vm4008, %vm4009
    %v4011 = vsub.f32 %v4006, 1.0
    %v4012 = vsel %vm4010, %v4011, %v4006
    %v4013 = vsel %vm4007, -1.0, %v4012
    %v4014 = vadd.f32 %v4006, 1e-30
    %v4015 = vadd.f32 %v4006, 1.0
    %v4016 = vsel %vm4010, %v4015, 1.0
    %v4017 = vsel %vm4007, %v4014, %v4016
    %v4018 = vrcp.pop %v4017
    %v4019 = vmul.f32 %v4013, %v4018
    %v4020 = vsel %vm4010, 0.7853982, 0.0
    %v4021 = vsel %vm4007, 1.5707964, %v4020
    %v4022 = vmul.f32 %v4019, %v4019
    %v4023 = vmul.f32 %v4022, 0.080537446
    %v4024 = vsub.f32 %v4023, 0.13877685
    %v4025 = vmul.f32 %v4024, %v4022
    %v4026 = vadd.f32 %v4025, 0.19977711
    %v4027 = vmul.f32 %v4026, %v4022
    %v4028 = vsub.f32 %v4027, 0.3333295
    %v4029 = vmul.f32 %v4028, %v4022
    %v4030 = vmul.f32 %v4029, %v4019
    %v4031 = vadd.f32 %v4021, %v4030
    %v4032 = vadd.f32 %v4031, %v4019
    %v4033 = vmul.f32 %v4005, %v4032
    %v4034 = vmul.f32 %v4033, 1.272
    %v4035 = vmul.f32 %v4034, 1.442695
    %v4036 = vpow.pop %v4035
    %v4037 = vmul.f32 %v4036, %v3558
    %v4039 = vrot.slane %v4001, 4
    %v4041 = vadd.f32 %v4037, %v4039
    %v4042 = vsel %vm535, %v4034, 0.0
    %v4043 = vrot.slane %v4042, 4
    %v4044 = vadd.f32 %v4042, %v4043
    %v4045 = vrot.slane %v4044, 2
    %v4046 = vadd.f32 %v4044, %v4045
    %v4047 = vrot.slane %v4046, 1
    %v4048 = vadd.f32 %v4046, %v4047
    %v4049 = vadd.f32 %v3482, %v4048
    %v4050 = vld [vmem:[#allocation2 + $0x338] sm:$0xff]
    %v4051 = vld [vmem:[#allocation2 + $0x340] sm:$0xff]
    %v4052 = vld [vmem:[#allocation2 + $0x348] sm:$0xff]
    %v4053 = vld [vmem:[#allocation2 + $0x350] sm:$0xff]
    %v4054 = vld [vmem:[#allocation2 + $0x358] sm:$0xff]
    %v4055 = vld [vmem:[#allocation2 + $0x360] sm:$0xff]
    %v4056 = vld [vmem:[#allocation2 + $0x368] sm:$0xff]
    %v4057 = vld [vmem:[#allocation2 + $0x370] sm:$0xff]
    %v4058 = vld [vmem:[#allocation4 + $0x358] sm:$0xff]
    %v4059 = vld [vmem:[#allocation4 + $0x360] sm:$0xff]
    %v4060 = vld [vmem:[#allocation4 + $0x368] sm:$0xff]
    %v4061 = vld [vmem:[#allocation4 + $0x370] sm:$0xff]
    %4063 = vset.pattern.permute.xlu0 0
    %4064 = vperm.xlu0 %4063, %v4058
    %v4065 = vpop.permute.xlu0 %4064
    %4068 = vset.pattern.permute.xlu0 0
    %4069 = vperm.xlu0 %4068, %v4059
    %v4070 = vpop.permute.xlu0 %4069
    %4073 = vset.pattern.permute.xlu0 0
    %4074 = vperm.xlu0 %4073, %v4060
    %v4075 = vpop.permute.xlu0 %4074
    %4078 = vset.pattern.permute.xlu0 0
    %4079 = vperm.xlu0 %4078, %v4061
    %v4080 = vpop.permute.xlu0 %4079
    %v4083 = vsel %vm422, %v4054, 0
    %v4086 = vsel %vm422, %v4055, 0
    %v4089 = vsel %vm422, %v4056, 0
    %v4092 = vsel %vm422, %v4057, 0
    %4094 = vmatprep.subr.mxu0 0.0
    %4095 = vmatpush1.msra.mxu0 0.0
    %4096 = vmatprep.subr.mxu0 0.0
    %4097 = vmatpush1.msra.mxu0 0.0
    %4098 = vmatprep.subr.mxu0 0.0
    %4099 = vmatpush1.msra.mxu0 0.0
    %4100 = vmatprep.subr.mxu0 0.0
    %4101 = vmatpush1.msra.mxu0 0.0
    %4102 = vmatprep.subr.mxu0 0.0
    %4103 = vmatpush1.msra.mxu0 0.0
    %4104 = vmatprep.subr.mxu0 0.0
    %4105 = vmatpush1.msra.mxu0 0.0
    %4106 = vmatprep.subr.mxu0 0.0
    %4107 = vmatpush1.msra.mxu0 0.0
    %4108 = vmatprep.subr.mxu0 0.0
    %4109 = vmatpush1.msra.mxu0 0.0
    %4110 = vmatprep.subr.mxu0 0.0
    %4111 = vmatpush1.msra.mxu0 0.0
    %4112 = vmatprep.subr.mxu0 0.0
    %4113 = vmatpush1.msra.mxu0 0.0
    %4114 = vmatprep.subr.mxu0 0.0
    %4115 = vmatpush1.msra.mxu0 0.0
    %4116 = vmatprep.subr.mxu0 0.0
    %4117 = vmatpush1.msra.mxu0 0.0
    %4118 = vmatprep.subr.mxu0 0.0
    %4119 = vmatpush1.msra.mxu0 0.0
    %4120 = vmatprep.subr.mxu0 0.0
    %4121 = vmatpush1.msra.mxu0 0.0
    %4122 = vmatprep.subr.mxu0 0.0
    %4123 = vmatpush1.msra.mxu0 0.0
    %4124 = vmatprep.subr.mxu0 0.0
    %4125 = vmatpush1.msra.mxu0 %v386
    %4126 = vmatprep.subr.mxu0 0.0
    %4127 = vmatpush2.msra.mxu0 0.0
    %4128 = vmatprep.subr.mxu0 0.0
    %4129 = vmatpush2.msra.mxu0 0.0
    %4130 = vmatprep.subr.mxu0 0.0
    %4131 = vmatpush2.msra.mxu0 0.0
    %4132 = vmatprep.subr.mxu0 0.0
    %4133 = vmatpush2.msra.mxu0 0.0
    %4134 = vmatprep.subr.mxu0 0.0
    %4135 = vmatpush2.msra.mxu0 0.0
    %4136 = vmatprep.subr.mxu0 0.0
    %4137 = vmatpush2.msra.mxu0 0.0
    %4138 = vmatprep.subr.mxu0 0.0
    %4139 = vmatpush2.msra.mxu0 0.0
    %4140 = vmatprep.subr.mxu0 0.0
    %4141 = vmatpush2.msra.mxu0 0.0
    %4142 = vmatprep.subr.mxu0 0.0
    %4143 = vmatpush2.msra.mxu0 0.0
    %4144 = vmatprep.subr.mxu0 0.0
    %4145 = vmatpush2.msra.mxu0 0.0
    %4146 = vmatprep.subr.mxu0 0.0
    %4147 = vmatpush2.msra.mxu0 0.0
    %4148 = vmatprep.subr.mxu0 0.0
    %4149 = vmatpush2.msra.mxu0 0.0
    %4150 = vmatprep.subr.mxu0 0.0
    %4151 = vmatpush2.msra.mxu0 0.0
    %4152 = vmatprep.subr.mxu0 0.0
    %4153 = vmatpush2.msra.mxu0 0.0
    %4154 = vmatprep.subr.mxu0 0.0
    %4155 = vmatpush2.msra.mxu0 0.0
    %4156 = vmatprep.subr.mxu0 0.0
    %4157 = vmatpush2.msra.mxu0 0.0
    %4158 = vmatprep.mubr.f32.mxu0 0.0
    %4159 = vmatmul.mubr.f32.gmra.mxu0 %v4083
    %v4160 = vpop.f32.mrf.mxu0
    %v4161 = vadd.f32 %v4065, %v4160
    %v4162 = vpop.f32.mrf.mxu0
    %4163 = vmatprep.mubr.f32.mxu0 0.0
    %4164 = vmatmul.mubr.f32.gmra.mxu0 %v4086
    %v4165 = vpop.f32.mrf.mxu0
    %v4166 = vadd.f32 %v4070, %v4165
    %v4167 = vpop.f32.mrf.mxu0
    %4168 = vmatprep.mubr.f32.mxu0 0.0
    %4169 = vmatmul.mubr.f32.gmra.mxu0 %v4089
    %v4170 = vpop.f32.mrf.mxu0
    %v4171 = vadd.f32 %v4075, %v4170
    %v4172 = vpop.f32.mrf.mxu0
    %4173 = vmatprep.mubr.f32.mxu0 0.0
    %4174 = vmatmul.mubr.f32.gmra.mxu0 %v4092
    %v4175 = vpop.f32.mrf.mxu0
    %v4176 = vadd.f32 %v4080, %v4175
    %v4177 = vpop.f32.mrf.mxu0
    %4178 = vdwg.mxu0
    %v4180 = vsel %vm522, %v4050, 0
    %v4183 = vsel %vm522, %v4051, 0
    %v4186 = vsel %vm522, %v4052, 0
    %v4189 = vsel %vm522, %v4053, 0
    %v4192 = vsel %vm535, %v4041, 0
    %4194 = vmatprep.subr.mxu0 0.0
    %4195 = vmatpush1.msra.mxu0 0.0
    %4196 = vmatprep.subr.mxu0 0.0
    %4197 = vmatpush1.msra.mxu0 0.0
    %4198 = vmatprep.subr.mxu0 0.0
    %4199 = vmatpush1.msra.mxu0 0.0
    %4200 = vmatprep.subr.mxu0 0.0
    %4201 = vmatpush1.msra.mxu0 0.0
    %4202 = vmatprep.subr.mxu0 0.0
    %4203 = vmatpush1.msra.mxu0 0.0
    %4204 = vmatprep.subr.mxu0 0.0
    %4205 = vmatpush1.msra.mxu0 0.0
    %4206 = vmatprep.subr.mxu0 0.0
    %4207 = vmatpush1.msra.mxu0 0.0
    %4208 = vmatprep.subr.mxu0 0.0
    %4209 = vmatpush1.msra.mxu0 0.0
    %4210 = vmatprep.subr.mxu0 0.0
    %4211 = vmatpush1.msra.mxu0 0.0
    %4212 = vmatprep.subr.mxu0 0.0
    %4213 = vmatpush1.msra.mxu0 0.0
    %4214 = vmatprep.subr.mxu0 0.0
    %4215 = vmatpush1.msra.mxu0 0.0
    %4216 = vmatprep.subr.mxu0 0.0
    %4217 = vmatpush1.msra.mxu0 0.0
    %4218 = vmatprep.subr.mxu0 0.0
    %4219 = vmatpush1.msra.mxu0 0.0
    %4220 = vmatprep.subr.mxu0 0.0
    %4221 = vmatpush1.msra.mxu0 0.0
    %4222 = vmatprep.subr.mxu0 0.0
    %4223 = vmatpush1.msra.mxu0 0.0
    %4224 = vmatprep.subr.mxu0 0.0
    %4225 = vmatpush1.msra.mxu0 %v4192
    %4226 = vmatprep.subr.mxu0 0.0
    %4227 = vmatpush2.msra.mxu0 0.0
    %4228 = vmatprep.subr.mxu0 0.0
    %4229 = vmatpush2.msra.mxu0 0.0
    %4230 = vmatprep.subr.mxu0 0.0
    %4231 = vmatpush2.msra.mxu0 0.0
    %4232 = vmatprep.subr.mxu0 0.0
    %4233 = vmatpush2.msra.mxu0 0.0
    %4234 = vmatprep.subr.mxu0 0.0
    %4235 = vmatpush2.msra.mxu0 0.0
    %4236 = vmatprep.subr.mxu0 0.0
    %4237 = vmatpush2.msra.mxu0 0.0
    %4238 = vmatprep.subr.mxu0 0.0
    %4239 = vmatpush2.msra.mxu0 0.0
    %4240 = vmatprep.subr.mxu0 0.0
    %4241 = vmatpush2.msra.mxu0 0.0
    %4242 = vmatprep.subr.mxu0 0.0
    %4243 = vmatpush2.msra.mxu0 0.0
    %4244 = vmatprep.subr.mxu0 0.0
    %4245 = vmatpush2.msra.mxu0 0.0
    %4246 = vmatprep.subr.mxu0 0.0
    %4247 = vmatpush2.msra.mxu0 0.0
    %4248 = vmatprep.subr.mxu0 0.0
    %4249 = vmatpush2.msra.mxu0 0.0
    %4250 = vmatprep.subr.mxu0 0.0
    %4251 = vmatpush2.msra.mxu0 0.0
    %4252 = vmatprep.subr.mxu0 0.0
    %4253 = vmatpush2.msra.mxu0 0.0
    %4254 = vmatprep.subr.mxu0 0.0
    %4255 = vmatpush2.msra.mxu0 0.0
    %4256 = vmatprep.subr.mxu0 0.0
    %4257 = vmatpush2.msra.mxu0 0.0
    %4258 = vmatprep.mubr.f32.mxu0 0.0
    %4259 = vmatmul.mubr.f32.gmra.mxu0 %v4180
    %v4260 = vpop.f32.mrf.mxu0
    %v4261 = vadd.f32 %v4161, %v4260
    %v4262 = vpop.f32.mrf.mxu0
    %4263 = vmatprep.mubr.f32.mxu0 0.0
    %4264 = vmatmul.mubr.f32.gmra.mxu0 %v4183
    %v4265 = vpop.f32.mrf.mxu0
    %v4266 = vadd.f32 %v4166, %v4265
    %v4267 = vpop.f32.mrf.mxu0
    %4268 = vmatprep.mubr.f32.mxu0 0.0
    %4269 = vmatmul.mubr.f32.gmra.mxu0 %v4186
    %v4270 = vpop.f32.mrf.mxu0
    %v4271 = vadd.f32 %v4171, %v4270
    %v4272 = vpop.f32.mrf.mxu0
    %4273 = vmatprep.mubr.f32.mxu0 0.0
    %4274 = vmatmul.mubr.f32.gmra.mxu0 %v4189
    %v4275 = vpop.f32.mrf.mxu0
    %v4276 = vadd.f32 %v4176, %v4275
    %v4277 = vpop.f32.mrf.mxu0
    %4278 = vdwg.mxu0
    %v4279 = vmax.f32 %v4261, 0.0
    %v4280 = vmax.f32 %v4266, 0.0
    %v4281 = vmax.f32 %v4271, 0.0
    %v4282 = vmax.f32 %v4276, 0.0
    %v4283 = vld [vmem:[#allocation2 + $0x378] sm:$0xff]
    %v4284 = vld [vmem:[#allocation2 + $0x380] sm:$0xff]
    %v4285 = vld [vmem:[#allocation2 + $0x388] sm:$0xff]
    %v4286 = vld [vmem:[#allocation2 + $0x390] sm:$0xff]
    %v4287 = vld [vmem:[#allocation4 + $0x378] sm:$0xff]
    %v4288 = vld [vmem:[#allocation4 + $0x380] sm:$0xff]
    %v4289 = vld [vmem:[#allocation4 + $0x388] sm:$0xff]
    %v4290 = vld [vmem:[#allocation4 + $0x390] sm:$0xff]
    %4292 = vset.pattern.permute.xlu0 0
    %4293 = vperm.xlu0 %4292, %v4287
    %v4294 = vpop.permute.xlu0 %4293
    %4297 = vset.pattern.permute.xlu0 0
    %4298 = vperm.xlu0 %4297, %v4288
    %v4299 = vpop.permute.xlu0 %4298
    %4302 = vset.pattern.permute.xlu0 0
    %4303 = vperm.xlu0 %4302, %v4289
    %v4304 = vpop.permute.xlu0 %4303
    %4307 = vset.pattern.permute.xlu0 0
    %4308 = vperm.xlu0 %4307, %v4290
    %v4309 = vpop.permute.xlu0 %4308
    %v4312 = vsel %vm207, %v4283, 0
    %v4315 = vsel %vm207, %v4284, 0
    %v4318 = vsel %vm207, %v4285, 0
    %v4321 = vsel %vm207, %v4286, 0
    %4323 = vmatprep.subr.mxu0 0.0
    %4324 = vmatpush1.msra.mxu0 0.0
    %4325 = vmatprep.subr.mxu0 0.0
    %4326 = vmatpush1.msra.mxu0 0.0
    %4327 = vmatprep.subr.mxu0 0.0
    %4328 = vmatpush1.msra.mxu0 0.0
    %4329 = vmatprep.subr.mxu0 0.0
    %4330 = vmatpush1.msra.mxu0 0.0
    %4331 = vmatprep.subr.mxu0 0.0
    %4332 = vmatpush1.msra.mxu0 0.0
    %4333 = vmatprep.subr.mxu0 0.0
    %4334 = vmatpush1.msra.mxu0 0.0
    %4335 = vmatprep.subr.mxu0 0.0
    %4336 = vmatpush1.msra.mxu0 0.0
    %4337 = vmatprep.subr.mxu0 0.0
    %4338 = vmatpush1.msra.mxu0 0.0
    %4339 = vmatprep.subr.mxu0 0.0
    %4340 = vmatpush1.msra.mxu0 0.0
    %4341 = vmatprep.subr.mxu0 0.0
    %4342 = vmatpush1.msra.mxu0 0.0
    %4343 = vmatprep.subr.mxu0 0.0
    %4344 = vmatpush1.msra.mxu0 0.0
    %4345 = vmatprep.subr.mxu0 0.0
    %4346 = vmatpush1.msra.mxu0 0.0
    %4347 = vmatprep.subr.mxu0 0.0
    %4348 = vmatpush1.msra.mxu0 %v4282
    %4349 = vmatprep.subr.mxu0 0.0
    %4350 = vmatpush1.msra.mxu0 %v4281
    %4351 = vmatprep.subr.mxu0 0.0
    %4352 = vmatpush1.msra.mxu0 %v4280
    %4353 = vmatprep.subr.mxu0 0.0
    %4354 = vmatpush1.msra.mxu0 %v4279
    %4355 = vmatprep.subr.mxu0 0.0
    %4356 = vmatpush2.msra.mxu0 0.0
    %4357 = vmatprep.subr.mxu0 0.0
    %4358 = vmatpush2.msra.mxu0 0.0
    %4359 = vmatprep.subr.mxu0 0.0
    %4360 = vmatpush2.msra.mxu0 0.0
    %4361 = vmatprep.subr.mxu0 0.0
    %4362 = vmatpush2.msra.mxu0 0.0
    %4363 = vmatprep.subr.mxu0 0.0
    %4364 = vmatpush2.msra.mxu0 0.0
    %4365 = vmatprep.subr.mxu0 0.0
    %4366 = vmatpush2.msra.mxu0 0.0
    %4367 = vmatprep.subr.mxu0 0.0
    %4368 = vmatpush2.msra.mxu0 0.0
    %4369 = vmatprep.subr.mxu0 0.0
    %4370 = vmatpush2.msra.mxu0 0.0
    %4371 = vmatprep.subr.mxu0 0.0
    %4372 = vmatpush2.msra.mxu0 0.0
    %4373 = vmatprep.subr.mxu0 0.0
    %4374 = vmatpush2.msra.mxu0 0.0
    %4375 = vmatprep.subr.mxu0 0.0
    %4376 = vmatpush2.msra.mxu0 0.0
    %4377 = vmatprep.subr.mxu0 0.0
    %4378 = vmatpush2.msra.mxu0 0.0
    %4379 = vmatprep.subr.mxu0 0.0
    %4380 = vmatpush2.msra.mxu0 0.0
    %4381 = vmatprep.subr.mxu0 0.0
    %4382 = vmatpush2.msra.mxu0 0.0
    %4383 = vmatprep.subr.mxu0 0.0
    %4384 = vmatpush2.msra.mxu0 0.0
    %4385 = vmatprep.subr.mxu0 0.0
    %4386 = vmatpush2.msra.mxu0 0.0
    %4387 = vmatprep.mubr.f32.mxu0 0.0
    %4388 = vmatmul.mubr.f32.gmra.mxu0 %v4312
    %v4389 = vpop.f32.mrf.mxu0
    %v4390 = vadd.f32 %v4294, %v4389
    %v4391 = vpop.f32.mrf.mxu0
    %4392 = vmatprep.mubr.f32.mxu0 0.0
    %4393 = vmatmul.mubr.f32.gmra.mxu0 %v4315
    %v4394 = vpop.f32.mrf.mxu0
    %v4395 = vadd.f32 %v4299, %v4394
    %v4396 = vpop.f32.mrf.mxu0
    %4397 = vmatprep.mubr.f32.mxu0 0.0
    %4398 = vmatmul.mubr.f32.gmra.mxu0 %v4318
    %v4399 = vpop.f32.mrf.mxu0
    %v4400 = vadd.f32 %v4304, %v4399
    %v4401 = vpop.f32.mrf.mxu0
    %4402 = vmatprep.mubr.f32.mxu0 0.0
    %4403 = vmatmul.mubr.f32.gmra.mxu0 %v4321
    %v4404 = vpop.f32.mrf.mxu0
    %v4405 = vadd.f32 %v4309, %v4404
    %v4406 = vpop.f32.mrf.mxu0
    %4407 = vdwg.mxu0
    %v4408 = vmax.f32 %v4390, 0.0
    %v4409 = vmax.f32 %v4395, 0.0
    %v4410 = vmax.f32 %v4400, 0.0
    %v4411 = vmax.f32 %v4405, 0.0
    %v4412 = vld [vmem:[#allocation2 + $0x398] sm:$0xff]
    %v4413 = vld [vmem:[#allocation4 + $0x398] sm:$0xff]
    %4415 = vset.pattern.permute.xlu0 0
    %4416 = vperm.xlu0 %4415, %v4413
    %v4417 = vpop.permute.xlu0 %4416
    %v4420 = vsel %vm207, %v4412, 0
    %4422 = vmatprep.subr.mxu0 0.0
    %4423 = vmatpush1.msra.mxu0 0.0
    %4424 = vmatprep.subr.mxu0 0.0
    %4425 = vmatpush1.msra.mxu0 0.0
    %4426 = vmatprep.subr.mxu0 0.0
    %4427 = vmatpush1.msra.mxu0 0.0
    %4428 = vmatprep.subr.mxu0 0.0
    %4429 = vmatpush1.msra.mxu0 0.0
    %4430 = vmatprep.subr.mxu0 0.0
    %4431 = vmatpush1.msra.mxu0 0.0
    %4432 = vmatprep.subr.mxu0 0.0
    %4433 = vmatpush1.msra.mxu0 0.0
    %4434 = vmatprep.subr.mxu0 0.0
    %4435 = vmatpush1.msra.mxu0 0.0
    %4436 = vmatprep.subr.mxu0 0.0
    %4437 = vmatpush1.msra.mxu0 0.0
    %4438 = vmatprep.subr.mxu0 0.0
    %4439 = vmatpush1.msra.mxu0 0.0
    %4440 = vmatprep.subr.mxu0 0.0
    %4441 = vmatpush1.msra.mxu0 0.0
    %4442 = vmatprep.subr.mxu0 0.0
    %4443 = vmatpush1.msra.mxu0 0.0
    %4444 = vmatprep.subr.mxu0 0.0
    %4445 = vmatpush1.msra.mxu0 0.0
    %4446 = vmatprep.subr.mxu0 0.0
    %4447 = vmatpush1.msra.mxu0 %v4411
    %4448 = vmatprep.subr.mxu0 0.0
    %4449 = vmatpush1.msra.mxu0 %v4410
    %4450 = vmatprep.subr.mxu0 0.0
    %4451 = vmatpush1.msra.mxu0 %v4409
    %4452 = vmatprep.subr.mxu0 0.0
    %4453 = vmatpush1.msra.mxu0 %v4408
    %4454 = vmatprep.subr.mxu0 0.0
    %4455 = vmatpush2.msra.mxu0 0.0
    %4456 = vmatprep.subr.mxu0 0.0
    %4457 = vmatpush2.msra.mxu0 0.0
    %4458 = vmatprep.subr.mxu0 0.0
    %4459 = vmatpush2.msra.mxu0 0.0
    %4460 = vmatprep.subr.mxu0 0.0
    %4461 = vmatpush2.msra.mxu0 0.0
    %4462 = vmatprep.subr.mxu0 0.0
    %4463 = vmatpush2.msra.mxu0 0.0
    %4464 = vmatprep.subr.mxu0 0.0
    %4465 = vmatpush2.msra.mxu0 0.0
    %4466 = vmatprep.subr.mxu0 0.0
    %4467 = vmatpush2.msra.mxu0 0.0
    %4468 = vmatprep.subr.mxu0 0.0
    %4469 = vmatpush2.msra.mxu0 0.0
    %4470 = vmatprep.subr.mxu0 0.0
    %4471 = vmatpush2.msra.mxu0 0.0
    %4472 = vmatprep.subr.mxu0 0.0
    %4473 = vmatpush2.msra.mxu0 0.0
    %4474 = vmatprep.subr.mxu0 0.0
    %4475 = vmatpush2.msra.mxu0 0.0
    %4476 = vmatprep.subr.mxu0 0.0
    %4477 = vmatpush2.msra.mxu0 0.0
    %4478 = vmatprep.subr.mxu0 0.0
    %4479 = vmatpush2.msra.mxu0 0.0
    %4480 = vmatprep.subr.mxu0 0.0
    %4481 = vmatpush2.msra.mxu0 0.0
    %4482 = vmatprep.subr.mxu0 0.0
    %4483 = vmatpush2.msra.mxu0 0.0
    %4484 = vmatprep.subr.mxu0 0.0
    %4485 = vmatpush2.msra.mxu0 0.0
    %4486 = vmatprep.mubr.f32.mxu0 0.0
    %4487 = vmatmul.mubr.f32.gmra.mxu0 %v4420
    %v4488 = vpop.f32.mrf.mxu0
    %v4489 = vadd.f32 %v4417, %v4488
    %v4490 = vpop.f32.mrf.mxu0
    %4491 = vdwg.mxu0
    %vm4492 = vcmp.lt.f32.partialorder %v4489, 0.0
    %v4493 = vsel %vm4492, -1.0, 1.0
    %v4494 = vand.u32 2147483647, %v4489
    %vm4495 = vcmp.gt.f32.partialorder %v4494, 2.4142137
    %vm4496 = vcmp.gt.f32.partialorder %v4494, 0.41421357
    %vm4497 = vmxor %vm4495, 1
    %vm4498 = vmand %vm4496, %vm4497
    %v4499 = vsub.f32 %v4494, 1.0
    %v4500 = vsel %vm4498, %v4499, %v4494
    %v4501 = vsel %vm4495, -1.0, %v4500
    %v4502 = vadd.f32 %v4494, 1e-30
    %v4503 = vadd.f32 %v4494, 1.0
    %v4504 = vsel %vm4498, %v4503, 1.0
    %v4505 = vsel %vm4495, %v4502, %v4504
    %v4506 = vrcp.pop %v4505
    %v4507 = vmul.f32 %v4501, %v4506
    %v4508 = vsel %vm4498, 0.7853982, 0.0
    %v4509 = vsel %vm4495, 1.5707964, %v4508
    %v4510 = vmul.f32 %v4507, %v4507
    %v4511 = vmul.f32 %v4510, 0.080537446
    %v4512 = vsub.f32 %v4511, 0.13877685
    %v4513 = vmul.f32 %v4512, %v4510
    %v4514 = vadd.f32 %v4513, 0.19977711
    %v4515 = vmul.f32 %v4514, %v4510
    %v4516 = vsub.f32 %v4515, 0.3333295
    %v4517 = vmul.f32 %v4516, %v4510
    %v4518 = vmul.f32 %v4517, %v4507
    %v4519 = vadd.f32 %v4509, %v4518
    %v4520 = vadd.f32 %v4519, %v4507
    %v4521 = vmul.f32 %v4493, %v4520
    %v4522 = vmul.f32 %v4521, 1.272
    %v4523 = vmul.f32 %v4522, 1.442695
    %v4524 = vpow.pop %v4523
    %v4526 = vmul.f32 %v4524, %v3691
    %v4528 = vrot.slane %v4489, 4
    %v4530 = vadd.f32 %v4526, %v4528
    %v4531 = vsel %vm535, %v4522, 0.0
    %v4532 = vrot.slane %v4531, 4
    %v4533 = vadd.f32 %v4531, %v4532
    %v4534 = vrot.slane %v4533, 2
    %v4535 = vadd.f32 %v4533, %v4534
    %v4536 = vrot.slane %v4535, 1
    %v4537 = vadd.f32 %v4535, %v4536
    %v4538 = vadd.f32 %v4049, %v4537
    %v4540 = vrot.slane %v4530, 4
    %v4542 = vsel %vm535, %v4041, %v4540
    %v4543 = vld [vmem:[#allocation2 + $0x3a0] sm:$0xff]
    %v4545 = vsel %vm422, %v4543, 0
    %4547 = vmatprep.subr.mxu0 0.0
    %4548 = vmatpush1.msra.mxu0 0.0
    %4549 = vmatprep.subr.mxu0 0.0
    %4550 = vmatpush1.msra.mxu0 0.0
    %4551 = vmatprep.subr.mxu0 0.0
    %4552 = vmatpush1.msra.mxu0 0.0
    %4553 = vmatprep.subr.mxu0 0.0
    %4554 = vmatpush1.msra.mxu0 0.0
    %4555 = vmatprep.subr.mxu0 0.0
    %4556 = vmatpush1.msra.mxu0 0.0
    %4557 = vmatprep.subr.mxu0 0.0
    %4558 = vmatpush1.msra.mxu0 0.0
    %4559 = vmatprep.subr.mxu0 0.0
    %4560 = vmatpush1.msra.mxu0 0.0
    %4561 = vmatprep.subr.mxu0 0.0
    %4562 = vmatpush1.msra.mxu0 0.0
    %4563 = vmatprep.subr.mxu0 0.0
    %4564 = vmatpush1.msra.mxu0 0.0
    %4565 = vmatprep.subr.mxu0 0.0
    %4566 = vmatpush1.msra.mxu0 0.0
    %4567 = vmatprep.subr.mxu0 0.0
    %4568 = vmatpush1.msra.mxu0 0.0
    %4569 = vmatprep.subr.mxu0 0.0
    %4570 = vmatpush1.msra.mxu0 0.0
    %4571 = vmatprep.subr.mxu0 0.0
    %4572 = vmatpush1.msra.mxu0 0.0
    %4573 = vmatprep.subr.mxu0 0.0
    %4574 = vmatpush1.msra.mxu0 0.0
    %4575 = vmatprep.subr.mxu0 0.0
    %4576 = vmatpush1.msra.mxu0 0.0
    %4577 = vmatprep.subr.mxu0 0.0
    %4578 = vmatpush1.msra.mxu0 %v4542
    %4579 = vmatprep.subr.mxu0 0.0
    %4580 = vmatpush2.msra.mxu0 0.0
    %4581 = vmatprep.subr.mxu0 0.0
    %4582 = vmatpush2.msra.mxu0 0.0
    %4583 = vmatprep.subr.mxu0 0.0
    %4584 = vmatpush2.msra.mxu0 0.0
    %4585 = vmatprep.subr.mxu0 0.0
    %4586 = vmatpush2.msra.mxu0 0.0
    %4587 = vmatprep.subr.mxu0 0.0
    %4588 = vmatpush2.msra.mxu0 0.0
    %4589 = vmatprep.subr.mxu0 0.0
    %4590 = vmatpush2.msra.mxu0 0.0
    %4591 = vmatprep.subr.mxu0 0.0
    %4592 = vmatpush2.msra.mxu0 0.0
    %4593 = vmatprep.subr.mxu0 0.0
    %4594 = vmatpush2.msra.mxu0 0.0
    %4595 = vmatprep.subr.mxu0 0.0
    %4596 = vmatpush2.msra.mxu0 0.0
    %4597 = vmatprep.subr.mxu0 0.0
    %4598 = vmatpush2.msra.mxu0 0.0
    %4599 = vmatprep.subr.mxu0 0.0
    %4600 = vmatpush2.msra.mxu0 0.0
    %4601 = vmatprep.subr.mxu0 0.0
    %4602 = vmatpush2.msra.mxu0 0.0
    %4603 = vmatprep.subr.mxu0 0.0
    %4604 = vmatpush2.msra.mxu0 0.0
    %4605 = vmatprep.subr.mxu0 0.0
    %4606 = vmatpush2.msra.mxu0 0.0
    %4607 = vmatprep.subr.mxu0 0.0
    %4608 = vmatpush2.msra.mxu0 0.0
    %4609 = vmatprep.subr.mxu0 0.0
    %4610 = vmatpush2.msra.mxu0 0.0
    %4611 = vmatprep.mubr.f32.mxu0 0.0
    %4612 = vmatmul.mubr.f32.gmra.mxu0 %v4545
    %v4613 = vpop.f32.mrf.mxu0
    %v4614 = vadd.f32 0.0, %v4613
    %v4615 = vpop.f32.mrf.mxu0
    %4616 = vdwg.mxu0
    %4617 = vst [vmem:[%s4] sm:$0xff] %v4614
    %4618 = vst [vmem:[%s5] sm:$0x1] %v4538
    // Predicated region
    $region26: #{forward.1} parent=1 // pred_check
      _
    $region27: #{forward.1} parent=1 // pred_check_branch
      %4620 = sbr.rel (0) target = $region29
    $region28: #{forward.1} parent=1 // pred_region
      _
    $region29: #{forward.1} parent=1 // pred_fallthru
      _
    // Predicated region
    $region30: #{forward.1} parent=1 // pred_check
      _
    $region31: #{forward.1} parent=1 // pred_check_branch
      %4622 = sbr.rel (0) target = $region33
    $region32: #{forward.1} parent=1 // pred_region
      _
    $region33: #{forward.1} parent=1 // pred_fallthru
      _
    // Predicated region
    $region34: #{forward.1} parent=1 // pred_check
      _
    $region35: #{forward.1} parent=1 // pred_check_branch
      %4624 = sbr.rel (0) target = $region37
    $region36: #{forward.1} parent=1 // pred_region
      _
    $region37: #{forward.1} parent=1 // pred_fallthru
      _
    // Predicated region
    $region38: #{forward.1} parent=1 // pred_check
      _
    $region39: #{forward.1} parent=1 // pred_check_branch
      %4626 = sbr.rel (0) target = $region41
    $region40: #{forward.1} parent=1 // pred_region
      _
    $region41: #{forward.1} parent=1 // pred_fallthru
      _
    %4627 = vsyncpa [#allocation3], 1
    %4628 = vsyncpa [#allocation5], 1

</llo_original>
